<compile_context>
chip_gen: v6e
topology: v6e:2x2x1
jax: 0.10.0
libtpu: 0.0.40
codegen_flags: <defaults>
</compile_context>

<pallas_src>
import functools
import numpy as np
import jax
import jax.numpy as jnp
from jax.experimental import pallas as pl
from jax.experimental.pallas import tpu as pltpu

MEAN = (0.485, 0.456, 0.406)
STD = (0.229, 0.224, 0.225)
LN_EPS = 1e-6
NEG_INF = -1e30

# Small ViT config consistent with the module (patch conv -> 16 patches + CLS = 17 tokens).
CFG = dict(img=32, patch=8, in_ch=3, hidden=64, heads=4, layers=4, mlp=256)


def _round_up(x, m):
    return ((x + m - 1) // m) * m


# ------------------------------ fused ViT kernel -----------------------------

def _vit_encoder_kernel(
    patches_ref, pw_ref, base_ref, sel_ref, mask_ref, clssel_ref,
    lnfg_ref, lnfb_ref,
    ln1g_ref, ln1b_ref, wq_ref, wk_ref, wv_ref, bq_ref, bk_ref, bv_ref,
    wo_ref, bo_ref, ln2g_ref, ln2b_ref, w1_ref, b1_ref, w2_ref, b2_ref,
    out_ref, x_scr,
    *, heads, scale, mp, d,
):
    """Grid = (L,).  Step l runs encoder block l; step 0 also builds the token
    matrix (patch-embed + CLS + pos) and step L-1 also does final LN + CLS out.
    Token activations stay resident in VMEM scratch `x_scr` across the grid."""
    l = pl.program_id(0)

    # --- step-0 prologue: patch embed (normalize/bias folded) + CLS + pos -----
    @pl.when(l == 0)
    def _embed():
        tok = jnp.dot(patches_ref[...], pw_ref[...],
                      preferred_element_type=jnp.float32)          # [NPAT, D]
        # sel scatters patch tokens into the padded [B*Sp, D] grid; base already
        # holds cls_token+pos[0], pos[1:]+conv_bias and zero padding rows.
        x_scr[...] = base_ref[...] + jnp.dot(sel_ref[...], tok,
                                             preferred_element_type=jnp.float32)

    def ln(v, g, b):
        mu = jnp.mean(v, axis=-1, keepdims=True)
        vc = v - mu
        var = jnp.mean(vc * vc, axis=-1, keepdims=True)
        return vc * jax.lax.rsqrt(var + LN_EPS) * g + b

    x = x_scr[...]                                                  # [MP, D]

    # --- self-attention sub-block (LN1, QKV, softmax, out-proj, residual) -----
    y = ln(x, ln1g_ref[...], ln1b_ref[...])
    mask = mask_ref[...]                                            # [MP, MP] additive
    attn = jnp.zeros((mp, d), jnp.float32)
    for h in range(heads):                                          # static unroll
        q = jnp.dot(y, wq_ref[h], preferred_element_type=jnp.float32) + bq_ref[h]
        k = jnp.dot(y, wk_ref[h], preferred_element_type=jnp.float32) + bk_ref[h]
        v = jnp.dot(y, wv_ref[h], preferred_element_type=jnp.float32) + bv_ref[h]
        s = jax.lax.dot_general(q, k, (((1,), (1,)), ((), ())),
                                preferred_element_type=jnp.float32) * scale + mask
        s = s - jnp.max(s, axis=-1, keepdims=True)
        p = jnp.exp(s)
        p = p / jnp.sum(p, axis=-1, keepdims=True)
        o = jnp.dot(p, v, preferred_element_type=jnp.float32)       # [MP, dh]
        # head-merge + out-projection fused: sum_h o_h @ Wout[h]
        attn = attn + jnp.dot(o, wo_ref[h], preferred_element_type=jnp.float32)
    x = x + attn + bo_ref[...]

    # --- MLP sub-block (LN2, fc1+GELU, fc2, residual) --------------------------
    z = ln(x, ln2g_ref[...], ln2b_ref[...])
    h1 = jnp.dot(z, w1_ref[...], preferred_element_type=jnp.float32) + b1_ref[...]
    # TODO(synk): torch nn.GELU defaults to exact erf; tanh-approx GELU used here
    # (erf lowering in Mosaic is not guaranteed).
    h1 = jax.nn.gelu(h1, approximate=True)
    x = x + jnp.dot(h1, w2_ref[...], preferred_element_type=jnp.float32) + b2_ref[...]
    x_scr[...] = x

    # --- last-step epilogue: final LN on the CLS rows only, write output ------
    @pl.when(l == pl.num_programs(0) - 1)
    def _final():
        cls = jnp.dot(clssel_ref[...], x, preferred_element_type=jnp.float32)  # [B, D]
        out_ref[...] = ln(cls, lnfg_ref[...], lnfb_ref[...]).astype(out_ref.dtype)


@functools.lru_cache(maxsize=None)
def _vit_call(B, MP, D, PK, NPAT, L, H, DH, MLP, scale):
    kernel = functools.partial(_vit_encoder_kernel,
                               heads=H, scale=scale, mp=MP, d=D)
    const2 = lambda l: (0, 0)
    per_l3 = lambda l: (l, 0, 0)
    per_l4 = lambda l: (l, 0, 0, 0)
    in_specs = [
        pl.BlockSpec((NPAT, PK), const2),              # patches
        pl.BlockSpec((PK, D), const2),                 # patch_w (normalize folded)
        pl.BlockSpec((MP, D), const2),                 # base (cls+pos+conv_bias)
        pl.BlockSpec((MP, NPAT), const2),              # patch scatter matrix
        pl.BlockSpec((MP, MP), const2),                # additive attention mask
        pl.BlockSpec((B, MP), const2),                 # CLS row selector
        pl.BlockSpec((1, D), const2),                  # final LN gamma
        pl.BlockSpec((1, D), const2),                  # final LN beta
        pl.BlockSpec((None, 1, D), per_l3),            # ln1_g [L,1,D]
        pl.BlockSpec((None, 1, D), per_l3),            # ln1_b
        pl.BlockSpec((None, H, D, DH), per_l4),        # wq [L,H,D,dh]
        pl.BlockSpec((None, H, D, DH), per_l4),        # wk
        pl.BlockSpec((None, H, D, DH), per_l4),        # wv
        pl.BlockSpec((None, H, 1, DH), per_l4),        # bq [L,H,1,dh]
        pl.BlockSpec((None, H, 1, DH), per_l4),        # bk
        pl.BlockSpec((None, H, 1, DH), per_l4),        # bv
        pl.BlockSpec((None, H, DH, D), per_l4),        # wo [L,H,dh,D]
        pl.BlockSpec((None, 1, D), per_l3),            # bo
        pl.BlockSpec((None, 1, D), per_l3),            # ln2_g
        pl.BlockSpec((None, 1, D), per_l3),            # ln2_b
        pl.BlockSpec((None, D, MLP), per_l3),          # fc1_w [L,D,mlp]
        pl.BlockSpec((None, 1, MLP), per_l3),          # fc1_b
        pl.BlockSpec((None, MLP, D), per_l3),          # fc2_w [L,mlp,D]
        pl.BlockSpec((None, 1, D), per_l3),            # fc2_b
    ]
    return pl.pallas_call(
        kernel,
        out_shape=jax.ShapeDtypeStruct((B, D), jnp.float32),
        grid=(L,),
        in_specs=in_specs,
        out_specs=pl.BlockSpec((B, D), const2),
        scratch_shapes=[pltpu.VMEM((MP, D), jnp.float32)],
        compiler_params=pltpu.CompilerParams(
            dimension_semantics=("arbitrary",),        # layer axis carries state
            vmem_limit_bytes=32 * 1024 * 1024,         # safe on v7x (64 MiB VMEM)
        ),
    )


# --------------------------- parameters (synthetic) ---------------------------
# TODO(synk): checkpoint / torchvision-pretrained ViT weight loading has no Pallas
# equivalent; parameters are synthetic and deterministic.

def make_params(key, cfg=CFG):
    img, patch, cin = cfg['img'], cfg['patch'], cfg['in_ch']
    D, L, mlp = cfg['hidden'], cfg['layers'], cfg['mlp']
    S = (img // patch) ** 2 + 1
    keys = iter(jax.random.split(key, 8 * L + 16))
    nk = lambda: next(keys)

    def lin(fan_in, shape):
        return jax.random.normal(nk(), shape, jnp.float32) / np.sqrt(fan_in)

    # conv_proj (kernel=stride=patch) as a matmul over (ph, pw, c)-flattened patches,
    # with the ImageNormalizer ((x - mean) / std) folded in exactly.
    pk = patch * patch * cin
    w = lin(pk, (pk, D))
    b = jax.random.normal(nk(), (D,), jnp.float32) * 0.01
    mean_flat = jnp.tile(jnp.array(MEAN, jnp.float32), patch * patch)
    inv_std_flat = jnp.tile(1.0 / jnp.array(STD, jnp.float32), patch * patch)
    w_folded = w * inv_std_flat[:, None]
    b_folded = b - mean_flat @ w_folded

    p = {
        'patch_w': w_folded, 'patch_b': b_folded,
        'cls_token': jax.random.normal(nk(), (1, 1, D), jnp.float32) * 0.02,
        'pos_emb': jax.random.normal(nk(), (1, S, D), jnp.float32) * 0.02,
        'ln_g': jnp.ones((D,), jnp.float32), 'ln_b': jnp.zeros((D,), jnp.float32),
    }
    blocks = []
    for _ in range(L):
        blocks.append({
            'ln1_g': jnp.ones((D,), jnp.float32), 'ln1_b': jnp.zeros((D,), jnp.float32),
            'qkv_w': lin(D, (D, 3 * D)), 'qkv_b': jnp.zeros((3 * D,), jnp.float32),
            'out_w': lin(D, (D, D)), 'out_b': jnp.zeros((D,), jnp.float32),
            'ln2_g': jnp.ones((D,), jnp.float32), 'ln2_b': jnp.zeros((D,), jnp.float32),
            'fc1_w': lin(D, (D, mlp)), 'fc1_b': jnp.zeros((mlp,), jnp.float32),
            'fc2_w': lin(mlp, (mlp, D)), 'fc2_b': jnp.zeros((D,), jnp.float32),
        })
    p['blocks'] = blocks
    return p


def prepare_inputs(params, batch, cfg=CFG):
    """One-time packing of all weights into the kernel-ready stacked layout
    (per-head splits, pos/CLS/conv-bias folded into constants).  No per-call
    pad / cast / transpose copies remain in the forward."""
    img, patch, cin = cfg['img'], cfg['patch'], cfg['in_ch']
    D, H, L, mlp = cfg['hidden'], cfg['heads'], cfg['layers'], cfg['mlp']
    dh = D // H
    npp = (img // patch) ** 2                       # patches per image
    S = npp + 1                                     # +CLS
    SP = _round_up(S, 8)                            # padded per-batch seq
    MP = batch * SP
    NPAT = batch * npp

    pos = np.asarray(params['pos_emb'][0], np.float32)       # [S, D]
    cls = np.asarray(params['cls_token'][0, 0], np.float32)  # [D]
    pb = np.asarray(params['patch_b'], np.float32)           # [D]

    base = np.zeros((MP, D), np.float32)
    sel = np.zeros((MP, NPAT), np.float32)
    cls_sel = np.zeros((batch, MP), np.float32)
    mask = np.full((MP, MP), NEG_INF, np.float32)
    for b in range(batch):
        r0 = b * SP
        base[r0] = cls + pos[0]                       # CLS row (+pos[0])
        cls_sel[b, r0] = 1.0
        base[r0 + 1:r0 + 1 + npp] = pos[1:] + pb      # pos + conv bias for patch rows
        for i in range(npp):
            sel[r0 + 1 + i, b * npp + i] = 1.0
        mask[r0:r0 + SP, r0:r0 + S] = 0.0             # same-batch, real keys only

    def stack(name):
        return np.stack([np.asarray(blk[name], np.float32)
                         for blk in params['blocks']])

    qkv_w, qkv_b = stack('qkv_w'), stack('qkv_b')     # [L,D,3D], [L,3D]
    out_w, out_b = stack('out_w'), stack('out_b')     # [L,D,D],  [L,D]
    wq = qkv_w[:, :, 0 * D:1 * D].reshape(L, D, H, dh).transpose(0, 2, 1, 3)
    wk = qkv_w[:, :, 1 * D:2 * D].reshape(L, D, H, dh).transpose(0, 2, 1, 3)
    wv = qkv_w[:, :, 2 * D:3 * D].reshape(L, D, H, dh).transpose(0, 2, 1, 3)
    bq = qkv_b[:, 0 * D:1 * D].reshape(L, H, 1, dh)
    bk = qkv_b[:, 1 * D:2 * D].reshape(L, H, 1, dh)
    bv = qkv_b[:, 2 * D:3 * D].reshape(L, H, 1, dh)
    wo = out_w.reshape(L, H, dh, D)
    bo = out_b.reshape(L, 1, D)

    packed = (
        np.asarray(params['patch_w'], np.float32),    # pw [PK, D]
        base, sel, mask, cls_sel,
        np.asarray(params['ln_g'], np.float32).reshape(1, D),
        np.asarray(params['ln_b'], np.float32).reshape(1, D),
        stack('ln1_g').reshape(L, 1, D), stack('ln1_b').reshape(L, 1, D),
        wq, wk, wv, bq, bk, bv, wo, bo,
        stack('ln2_g').reshape(L, 1, D), stack('ln2_b').reshape(L, 1, D),
        stack('fc1_w'), stack('fc1_b').reshape(L, 1, mlp),
        stack('fc2_w'), stack('fc2_b').reshape(L, 1, D),
    )
    return tuple(jnp.asarray(a, jnp.float32) for a in packed)


# ---------------------------------- forward -----------------------------------

def vit_forward(x_nchw, packed, cfg=CFG):
    """TransformerWrapper.forward: normalize -> patchify -> +CLS -> encoder -> x[:, 0]."""
    patch, cin = cfg['patch'], cfg['in_ch']
    D, H, L, mlp = cfg['hidden'], cfg['heads'], cfg['layers'], cfg['mlp']
    dh = D // H
    B, _, img, _ = x_nchw.shape
    nh = nw = img // patch
    npp = nh * nw
    SP = _round_up(npp + 1, 8)
    MP, NPAT, PK = B * SP, B * npp, patch * patch * cin

    # Patch extraction (pure relayout of a ~12 KB input; normalization and conv
    # bias are folded into the kernel-side weights/constants).
    x = jnp.transpose(x_nchw, (0, 2, 3, 1)).astype(jnp.float32)           # NHWC
    patches = x.reshape(B, nh, patch, nw, patch, cin)
    patches = jnp.transpose(patches, (0, 1, 3, 2, 4, 5)).reshape(NPAT, PK)

    scale = 1.0 / float(np.sqrt(dh))
    call = _vit_call(B, MP, D, PK, NPAT, L, H, dh, mlp, scale)
    return call(patches, *packed)                                         # [B, D]


if __name__ == "__main__":
    key = jax.random.PRNGKey(0)
    pkey, xkey = jax.random.split(key)
    params = make_params(pkey)
    packed = prepare_inputs(params, batch=2)
    x = jax.random.uniform(xkey, (2, CFG['in_ch'], CFG['img'], CFG['img']), jnp.float32)
    feats = jax.jit(vit_forward)(x, packed)
    feats = jax.block_until_ready(feats)
    assert feats.shape == (2, CFG['hidden']), feats.shape
    assert bool(jnp.all(jnp.isfinite(feats)))
    print("KERNEL_OK")
</pallas_src>

<mosaic_0001>
module attributes {stable_mosaic.version = 11 : i64} {
  func.func @_vit_encoder_kernel(%arg0: i32, %arg1: memref<32x192xf32, #tpu.memory_space<vmem>>, %arg2: memref<192x64xf32, #tpu.memory_space<vmem>>, %arg3: memref<48x64xf32, #tpu.memory_space<vmem>>, %arg4: memref<48x32xf32, #tpu.memory_space<vmem>>, %arg5: memref<48x48xf32, #tpu.memory_space<vmem>>, %arg6: memref<2x48xf32, #tpu.memory_space<vmem>>, %arg7: memref<1x64xf32, #tpu.memory_space<vmem>>, %arg8: memref<1x64xf32, #tpu.memory_space<vmem>>, %arg9: memref<1x1x64xf32, #tpu.memory_space<vmem>>, %arg10: memref<1x1x64xf32, #tpu.memory_space<vmem>>, %arg11: memref<1x4x64x16xf32, #tpu.memory_space<vmem>>, %arg12: memref<1x4x64x16xf32, #tpu.memory_space<vmem>>, %arg13: memref<1x4x64x16xf32, #tpu.memory_space<vmem>>, %arg14: memref<1x4x1x16xf32, #tpu.memory_space<vmem>>, %arg15: memref<1x4x1x16xf32, #tpu.memory_space<vmem>>, %arg16: memref<1x4x1x16xf32, #tpu.memory_space<vmem>>, %arg17: memref<1x4x16x64xf32, #tpu.memory_space<vmem>>, %arg18: memref<1x1x64xf32, #tpu.memory_space<vmem>>, %arg19: memref<1x1x64xf32, #tpu.memory_space<vmem>>, %arg20: memref<1x1x64xf32, #tpu.memory_space<vmem>>, %arg21: memref<1x64x256xf32, #tpu.memory_space<vmem>>, %arg22: memref<1x1x256xf32, #tpu.memory_space<vmem>>, %arg23: memref<1x256x64xf32, #tpu.memory_space<vmem>>, %arg24: memref<1x1x64xf32, #tpu.memory_space<vmem>>, %arg25: memref<2x64xf32, #tpu.memory_space<vmem>>, %arg26: memref<48x64xf32, #tpu.memory_space<vmem>>) attributes {dimension_semantics = [#tpu.dimension_semantics<arbitrary>], iteration_bounds = array<i64: 4>, scalar_prefetch = 0 : i64, scratch_operands = 1 : i64, tpu.core_type = #tpu.core_type<tc>, window_params = [{pipeline_mode = #tpu.pipeline_mode<synchronous>, transform_indices = @transform_0, window_bounds = array<i64: 32, 192>}, {pipeline_mode = #tpu.pipeline_mode<synchronous>, transform_indices = @transform_1, window_bounds = array<i64: 192, 64>}, {pipeline_mode = #tpu.pipeline_mode<synchronous>, transform_indices = @transform_2, window_bounds = array<i64: 48, 64>}, {pipeline_mode = #tpu.pipeline_mode<synchronous>, transform_indices = @transform_3, window_bounds = array<i64: 48, 32>}, {pipeline_mode = #tpu.pipeline_mode<synchronous>, transform_indices = @transform_4, window_bounds = array<i64: 48, 48>}, {pipeline_mode = #tpu.pipeline_mode<synchronous>, transform_indices = @transform_5, window_bounds = array<i64: 2, 48>}, {pipeline_mode = #tpu.pipeline_mode<synchronous>, transform_indices = @transform_6, window_bounds = array<i64: 1, 64>}, {pipeline_mode = #tpu.pipeline_mode<synchronous>, transform_indices = @transform_7, window_bounds = array<i64: 1, 64>}, {transform_indices = @transform_8, window_bounds = array<i64: 1, 1, 64>}, {transform_indices = @transform_9, window_bounds = array<i64: 1, 1, 64>}, {transform_indices = @transform_10, window_bounds = array<i64: 1, 4, 64, 16>}, {transform_indices = @transform_11, window_bounds = array<i64: 1, 4, 64, 16>}, {transform_indices = @transform_12, window_bounds = array<i64: 1, 4, 64, 16>}, {transform_indices = @transform_13, window_bounds = array<i64: 1, 4, 1, 16>}, {transform_indices = @transform_14, window_bounds = array<i64: 1, 4, 1, 16>}, {transform_indices = @transform_15, window_bounds = array<i64: 1, 4, 1, 16>}, {transform_indices = @transform_16, window_bounds = array<i64: 1, 4, 16, 64>}, {transform_indices = @transform_17, window_bounds = array<i64: 1, 1, 64>}, {transform_indices = @transform_18, window_bounds = array<i64: 1, 1, 64>}, {transform_indices = @transform_19, window_bounds = array<i64: 1, 1, 64>}, {transform_indices = @transform_20, window_bounds = array<i64: 1, 64, 256>}, {transform_indices = @transform_21, window_bounds = array<i64: 1, 1, 256>}, {transform_indices = @transform_22, window_bounds = array<i64: 1, 256, 64>}, {transform_indices = @transform_23, window_bounds = array<i64: 1, 1, 64>}, {pipeline_mode = #tpu.pipeline_mode<synchronous>, transform_indices = @transform_24, window_bounds = array<i64: 2, 64>}]} {
    %c0_i32 = arith.constant 0 : i32
    %0 = arith.cmpi eq, %arg0, %c0_i32 : i32
    %1 = arith.extui %0 : i1 to i32
    %c0_i32_0 = arith.constant 0 : i32
    %2 = arith.cmpi ne, %1, %c0_i32_0 : i32
    scf.if %2 {
      %c0_195 = arith.constant 0 : index
      %c0_196 = arith.constant 0 : index
      %247 = vector.load %arg1[%c0_195, %c0_196] : memref<32x192xf32, #tpu.memory_space<vmem>>, vector<32x192xf32>
      %c0_197 = arith.constant 0 : index
      %c0_198 = arith.constant 0 : index
      %248 = vector.load %arg2[%c0_197, %c0_198] : memref<192x64xf32, #tpu.memory_space<vmem>>, vector<192x64xf32>
      %cst_199 = arith.constant dense<0.000000e+00> : vector<32x64xf32>
      %249 = tpu.matmul %247, %248, %cst_199 {dimension_numbers = #tpu.dot_dimension_numbers<[1], [0], [0], [1], [0, 0, 1, 1], [], []>} : vector<32x192xf32>, vector<192x64xf32>, vector<32x64xf32> -> vector<32x64xf32>
      %c0_200 = arith.constant 0 : index
      %c0_201 = arith.constant 0 : index
      %250 = vector.load %arg3[%c0_200, %c0_201] : memref<48x64xf32, #tpu.memory_space<vmem>>, vector<48x64xf32>
      %c0_202 = arith.constant 0 : index
      %c0_203 = arith.constant 0 : index
      %251 = vector.load %arg4[%c0_202, %c0_203] : memref<48x32xf32, #tpu.memory_space<vmem>>, vector<48x32xf32>
      %cst_204 = arith.constant dense<0.000000e+00> : vector<48x64xf32>
      %252 = tpu.matmul %251, %249, %cst_204 {dimension_numbers = #tpu.dot_dimension_numbers<[1], [0], [0], [1], [0, 0, 1, 1], [], []>} : vector<48x32xf32>, vector<32x64xf32>, vector<48x64xf32> -> vector<48x64xf32>
      %253 = arith.addf %250, %252 : vector<48x64xf32>
      %c0_205 = arith.constant 0 : index
      %c0_206 = arith.constant 0 : index
      %254 = vector.load %arg26[%c0_205, %c0_206] : memref<48x64xf32, #tpu.memory_space<vmem>>, vector<48x64xf32>
      tpu.vector_store %arg26[%c0_205, %c0_206], %253 {strides = array<i32>} : memref<48x64xf32, #tpu.memory_space<vmem>>, vector<48x64xf32>,
    } else {
    }
    %c0 = arith.constant 0 : index
    %c0_1 = arith.constant 0 : index
    %3 = vector.load %arg26[%c0, %c0_1] : memref<48x64xf32, #tpu.memory_space<vmem>>, vector<48x64xf32>
    %c0_2 = arith.constant 0 : index
    %c0_3 = arith.constant 0 : index
    %c0_4 = arith.constant 0 : index
    %4 = vector.load %arg9[%c0_2, %c0_3, %c0_4] : memref<1x1x64xf32, #tpu.memory_space<vmem>>, vector<1x1x64xf32>
    %5 = vector.shape_cast %4 : vector<1x1x64xf32> to vector<1x64xf32>
    %c0_5 = arith.constant 0 : index
    %c0_6 = arith.constant 0 : index
    %c0_7 = arith.constant 0 : index
    %6 = vector.load %arg10[%c0_5, %c0_6, %c0_7] : memref<1x1x64xf32, #tpu.memory_space<vmem>>, vector<1x1x64xf32>
    %7 = vector.shape_cast %6 : vector<1x1x64xf32> to vector<1x64xf32>
    %cst = arith.constant dense<0.000000e+00> : vector<48xf32>
    %8 = vector.multi_reduction <add>, %3, %cst [1] : vector<48x64xf32> to vector<48xf32>
    %9 = vector.shape_cast %8 : vector<48xf32> to vector<48x1xf32>
    %cst_8 = arith.constant 6.400000e+01 : f32
    %10 = vector.broadcast %cst_8 : f32 to vector<48x1xf32>
    %11 = arith.divf %9, %10 : vector<48x1xf32>
    %12 = vector.broadcast %11 : vector<48x1xf32> to vector<48x64xf32>
    %13 = arith.subf %3, %12 : vector<48x64xf32>
    %14 = arith.mulf %13, %13 : vector<48x64xf32>
    %cst_9 = arith.constant dense<0.000000e+00> : vector<48xf32>
    %15 = vector.multi_reduction <add>, %14, %cst_9 [1] : vector<48x64xf32> to vector<48xf32>
    %16 = vector.shape_cast %15 : vector<48xf32> to vector<48x1xf32>
    %cst_10 = arith.constant 6.400000e+01 : f32
    %17 = vector.broadcast %cst_10 : f32 to vector<48x1xf32>
    %18 = arith.divf %16, %17 : vector<48x1xf32>
    %cst_11 = arith.constant 9.99999997E-7 : f32
    %19 = vector.broadcast %cst_11 : f32 to vector<48x1xf32>
    %20 = arith.addf %18, %19 : vector<48x1xf32>
    %21 = math.rsqrt %20 : vector<48x1xf32>
    %22 = vector.broadcast %21 : vector<48x1xf32> to vector<48x64xf32>
    %23 = arith.mulf %13, %22 : vector<48x64xf32>
    %24 = vector.broadcast %5 : vector<1x64xf32> to vector<48x64xf32>
    %25 = arith.mulf %23, %24 : vector<48x64xf32>
    %26 = vector.broadcast %7 : vector<1x64xf32> to vector<48x64xf32>
    %27 = arith.addf %25, %26 : vector<48x64xf32>
    %c0_12 = arith.constant 0 : index
    %c0_13 = arith.constant 0 : index
    %28 = vector.load %arg5[%c0_12, %c0_13] : memref<48x48xf32, #tpu.memory_space<vmem>>, vector<48x48xf32>
    %cst_14 = arith.constant 0.000000e+00 : f32
    %29 = vector.broadcast %cst_14 : f32 to vector<48x64xf32>
    %c0_15 = arith.constant 0 : index
    %c0_16 = arith.constant 0 : index
    %c0_17 = arith.constant 0 : index
    %c0_18 = arith.constant 0 : index
    %30 = vector.load %arg11[%c0_15, %c0_16, %c0_17, %c0_18] : memref<1x4x64x16xf32, #tpu.memory_space<vmem>>, vector<1x1x64x16xf32>
    %31 = vector.shape_cast %30 : vector<1x1x64x16xf32> to vector<64x16xf32>
    %cst_19 = arith.constant dense<0.000000e+00> : vector<48x16xf32>
    %32 = tpu.matmul %27, %31, %cst_19 {dimension_numbers = #tpu.dot_dimension_numbers<[1], [0], [0], [1], [0, 0, 1, 1], [], []>} : vector<48x64xf32>, vector<64x16xf32>, vector<48x16xf32> -> vector<48x16xf32>
    %c0_20 = arith.constant 0 : index
    %c0_21 = arith.constant 0 : index
    %c0_22 = arith.constant 0 : index
    %c0_23 = arith.constant 0 : index
    %33 = vector.load %arg14[%c0_20, %c0_21, %c0_22, %c0_23] : memref<1x4x1x16xf32, #tpu.memory_space<vmem>>, vector<1x1x1x16xf32>
    %34 = vector.shape_cast %33 : vector<1x1x1x16xf32> to vector<1x16xf32>
    %35 = vector.broadcast %34 : vector<1x16xf32> to vector<48x16xf32>
    %36 = arith.addf %32, %35 : vector<48x16xf32>
    %c0_24 = arith.constant 0 : index
    %c0_25 = arith.constant 0 : index
    %c0_26 = arith.constant 0 : index
    %c0_27 = arith.constant 0 : index
    %37 = vector.load %arg12[%c0_24, %c0_25, %c0_26, %c0_27] : memref<1x4x64x16xf32, #tpu.memory_space<vmem>>, vector<1x1x64x16xf32>
    %38 = vector.shape_cast %37 : vector<1x1x64x16xf32> to vector<64x16xf32>
    %cst_28 = arith.constant dense<0.000000e+00> : vector<48x16xf32>
    %39 = tpu.matmul %27, %38, %cst_28 {dimension_numbers = #tpu.dot_dimension_numbers<[1], [0], [0], [1], [0, 0, 1, 1], [], []>} : vector<48x64xf32>, vector<64x16xf32>, vector<48x16xf32> -> vector<48x16xf32>
    %c0_29 = arith.constant 0 : index
    %c0_30 = arith.constant 0 : index
    %c0_31 = arith.constant 0 : index
    %c0_32 = arith.constant 0 : index
    %40 = vector.load %arg15[%c0_29, %c0_30, %c0_31, %c0_32] : memref<1x4x1x16xf32, #tpu.memory_space<vmem>>, vector<1x1x1x16xf32>
    %41 = vector.shape_cast %40 : vector<1x1x1x16xf32> to vector<1x16xf32>
    %42 = vector.broadcast %41 : vector<1x16xf32> to vector<48x16xf32>
    %43 = arith.addf %39, %42 : vector<48x16xf32>
    %c0_33 = arith.constant 0 : index
    %c0_34 = arith.constant 0 : index
    %c0_35 = arith.constant 0 : index
    %c0_36 = arith.constant 0 : index
    %44 = vector.load %arg13[%c0_33, %c0_34, %c0_35, %c0_36] : memref<1x4x64x16xf32, #tpu.memory_space<vmem>>, vector<1x1x64x16xf32>
    %45 = vector.shape_cast %44 : vector<1x1x64x16xf32> to vector<64x16xf32>
    %cst_37 = arith.constant dense<0.000000e+00> : vector<48x16xf32>
    %46 = tpu.matmul %27, %45, %cst_37 {dimension_numbers = #tpu.dot_dimension_numbers<[1], [0], [0], [1], [0, 0, 1, 1], [], []>} : vector<48x64xf32>, vector<64x16xf32>, vector<48x16xf32> -> vector<48x16xf32>
    %c0_38 = arith.constant 0 : index
    %c0_39 = arith.constant 0 : index
    %c0_40 = arith.constant 0 : index
    %c0_41 = arith.constant 0 : index
    %47 = vector.load %arg16[%c0_38, %c0_39, %c0_40, %c0_41] : memref<1x4x1x16xf32, #tpu.memory_space<vmem>>, vector<1x1x1x16xf32>
    %48 = vector.shape_cast %47 : vector<1x1x1x16xf32> to vector<1x16xf32>
    %49 = vector.broadcast %48 : vector<1x16xf32> to vector<48x16xf32>
    %50 = arith.addf %46, %49 : vector<48x16xf32>
    %cst_42 = arith.constant dense<0.000000e+00> : vector<48x48xf32>
    %51 = tpu.matmul %36, %43, %cst_42 {dimension_numbers = #tpu.dot_dimension_numbers<[1], [1], [0], [0], [0, 0, 1, 0], [], []>} : vector<48x16xf32>, vector<48x16xf32>, vector<48x48xf32> -> vector<48x48xf32>
    %cst_43 = arith.constant 2.500000e-01 : f32
    %52 = vector.broadcast %cst_43 : f32 to vector<48x48xf32>
    %53 = arith.mulf %51, %52 : vector<48x48xf32>
    %54 = arith.addf %53, %28 : vector<48x48xf32>
    %cst_44 = arith.constant dense<0xFF800000> : vector<48xf32>
    %55 = vector.multi_reduction <maximumf>, %54, %cst_44 [1] : vector<48x48xf32> to vector<48xf32>
    %56 = vector.shape_cast %55 : vector<48xf32> to vector<48x1xf32>
    %57 = vector.broadcast %56 : vector<48x1xf32> to vector<48x48xf32>
    %58 = arith.subf %54, %57 : vector<48x48xf32>
    %59 = math.exp %58 : vector<48x48xf32>
    %cst_45 = arith.constant dense<0.000000e+00> : vector<48xf32>
    %60 = vector.multi_reduction <add>, %59, %cst_45 [1] : vector<48x48xf32> to vector<48xf32>
    %61 = vector.shape_cast %60 : vector<48xf32> to vector<48x1xf32>
    %62 = vector.broadcast %61 : vector<48x1xf32> to vector<48x48xf32>
    %63 = arith.divf %59, %62 : vector<48x48xf32>
    %cst_46 = arith.constant dense<0.000000e+00> : vector<48x16xf32>
    %64 = tpu.matmul %63, %50, %cst_46 {dimension_numbers = #tpu.dot_dimension_numbers<[1], [0], [0], [1], [0, 0, 1, 1], [], []>} : vector<48x48xf32>, vector<48x16xf32>, vector<48x16xf32> -> vector<48x16xf32>
    %c0_47 = arith.constant 0 : index
    %c0_48 = arith.constant 0 : index
    %c0_49 = arith.constant 0 : index
    %c0_50 = arith.constant 0 : index
    %65 = vector.load %arg17[%c0_47, %c0_48, %c0_49, %c0_50] : memref<1x4x16x64xf32, #tpu.memory_space<vmem>>, vector<1x1x16x64xf32>
    %66 = vector.shape_cast %65 : vector<1x1x16x64xf32> to vector<16x64xf32>
    %cst_51 = arith.constant dense<0.000000e+00> : vector<48x64xf32>
    %67 = tpu.matmul %64, %66, %cst_51 {dimension_numbers = #tpu.dot_dimension_numbers<[1], [0], [0], [1], [0, 0, 1, 1], [], []>} : vector<48x16xf32>, vector<16x64xf32>, vector<48x64xf32> -> vector<48x64xf32>
    %68 = arith.addf %29, %67 : vector<48x64xf32>
    %c0_52 = arith.constant 0 : index
    %c1 = arith.constant 1 : index
    %c0_53 = arith.constant 0 : index
    %c0_54 = arith.constant 0 : index
    %69 = vector.load %arg11[%c0_52, %c1, %c0_53, %c0_54] : memref<1x4x64x16xf32, #tpu.memory_space<vmem>>, vector<1x1x64x16xf32>
    %70 = vector.shape_cast %69 : vector<1x1x64x16xf32> to vector<64x16xf32>
    %cst_55 = arith.constant dense<0.000000e+00> : vector<48x16xf32>
    %71 = tpu.matmul %27, %70, %cst_55 {dimension_numbers = #tpu.dot_dimension_numbers<[1], [0], [0], [1], [0, 0, 1, 1], [], []>} : vector<48x64xf32>, vector<64x16xf32>, vector<48x16xf32> -> vector<48x16xf32>
    %c0_56 = arith.constant 0 : index
    %c1_57 = arith.constant 1 : index
    %c0_58 = arith.constant 0 : index
    %c0_59 = arith.constant 0 : index
    %72 = vector.load %arg14[%c0_56, %c1_57, %c0_58, %c0_59] : memref<1x4x1x16xf32, #tpu.memory_space<vmem>>, vector<1x1x1x16xf32>
    %73 = vector.shape_cast %72 : vector<1x1x1x16xf32> to vector<1x16xf32>
    %74 = vector.broadcast %73 : vector<1x16xf32> to vector<48x16xf32>
    %75 = arith.addf %71, %74 : vector<48x16xf32>
    %c0_60 = arith.constant 0 : index
    %c1_61 = arith.constant 1 : index
    %c0_62 = arith.constant 0 : index
    %c0_63 = arith.constant 0 : index
    %76 = vector.load %arg12[%c0_60, %c1_61, %c0_62, %c0_63] : memref<1x4x64x16xf32, #tpu.memory_space<vmem>>, vector<1x1x64x16xf32>
    %77 = vector.shape_cast %76 : vector<1x1x64x16xf32> to vector<64x16xf32>
    %cst_64 = arith.constant dense<0.000000e+00> : vector<48x16xf32>
    %78 = tpu.matmul %27, %77, %cst_64 {dimension_numbers = #tpu.dot_dimension_numbers<[1], [0], [0], [1], [0, 0, 1, 1], [], []>} : vector<48x64xf32>, vector<64x16xf32>, vector<48x16xf32> -> vector<48x16xf32>
    %c0_65 = arith.constant 0 : index
    %c1_66 = arith.constant 1 : index
    %c0_67 = arith.constant 0 : index
    %c0_68 = arith.constant 0 : index
    %79 = vector.load %arg15[%c0_65, %c1_66, %c0_67, %c0_68] : memref<1x4x1x16xf32, #tpu.memory_space<vmem>>, vector<1x1x1x16xf32>
    %80 = vector.shape_cast %79 : vector<1x1x1x16xf32> to vector<1x16xf32>
    %81 = vector.broadcast %80 : vector<1x16xf32> to vector<48x16xf32>
    %82 = arith.addf %78, %81 : vector<48x16xf32>
    %c0_69 = arith.constant 0 : index
    %c1_70 = arith.constant 1 : index
    %c0_71 = arith.constant 0 : index
    %c0_72 = arith.constant 0 : index
    %83 = vector.load %arg13[%c0_69, %c1_70, %c0_71, %c0_72] : memref<1x4x64x16xf32, #tpu.memory_space<vmem>>, vector<1x1x64x16xf32>
    %84 = vector.shape_cast %83 : vector<1x1x64x16xf32> to vector<64x16xf32>
    %cst_73 = arith.constant dense<0.000000e+00> : vector<48x16xf32>
    %85 = tpu.matmul %27, %84, %cst_73 {dimension_numbers = #tpu.dot_dimension_numbers<[1], [0], [0], [1], [0, 0, 1, 1], [], []>} : vector<48x64xf32>, vector<64x16xf32>, vector<48x16xf32> -> vector<48x16xf32>
    %c0_74 = arith.constant 0 : index
    %c1_75 = arith.constant 1 : index
    %c0_76 = arith.constant 0 : index
    %c0_77 = arith.constant 0 : index
    %86 = vector.load %arg16[%c0_74, %c1_75, %c0_76, %c0_77] : memref<1x4x1x16xf32, #tpu.memory_space<vmem>>, vector<1x1x1x16xf32>
    %87 = vector.shape_cast %86 : vector<1x1x1x16xf32> to vector<1x16xf32>
    %88 = vector.broadcast %87 : vector<1x16xf32> to vector<48x16xf32>
    %89 = arith.addf %85, %88 : vector<48x16xf32>
    %cst_78 = arith.constant dense<0.000000e+00> : vector<48x48xf32>
    %90 = tpu.matmul %75, %82, %cst_78 {dimension_numbers = #tpu.dot_dimension_numbers<[1], [1], [0], [0], [0, 0, 1, 0], [], []>} : vector<48x16xf32>, vector<48x16xf32>, vector<48x48xf32> -> vector<48x48xf32>
    %cst_79 = arith.constant 2.500000e-01 : f32
    %91 = vector.broadcast %cst_79 : f32 to vector<48x48xf32>
    %92 = arith.mulf %90, %91 : vector<48x48xf32>
    %93 = arith.addf %92, %28 : vector<48x48xf32>
    %cst_80 = arith.constant dense<0xFF800000> : vector<48xf32>
    %94 = vector.multi_reduction <maximumf>, %93, %cst_80 [1] : vector<48x48xf32> to vector<48xf32>
    %95 = vector.shape_cast %94 : vector<48xf32> to vector<48x1xf32>
    %96 = vector.broadcast %95 : vector<48x1xf32> to vector<48x48xf32>
    %97 = arith.subf %93, %96 : vector<48x48xf32>
    %98 = math.exp %97 : vector<48x48xf32>
    %cst_81 = arith.constant dense<0.000000e+00> : vector<48xf32>
    %99 = vector.multi_reduction <add>, %98, %cst_81 [1] : vector<48x48xf32> to vector<48xf32>
    %100 = vector.shape_cast %99 : vector<48xf32> to vector<48x1xf32>
    %101 = vector.broadcast %100 : vector<48x1xf32> to vector<48x48xf32>
    %102 = arith.divf %98, %101 : vector<48x48xf32>
    %cst_82 = arith.constant dense<0.000000e+00> : vector<48x16xf32>
    %103 = tpu.matmul %102, %89, %cst_82 {dimension_numbers = #tpu.dot_dimension_numbers<[1], [0], [0], [1], [0, 0, 1, 1], [], []>} : vector<48x48xf32>, vector<48x16xf32>, vector<48x16xf32> -> vector<48x16xf32>
    %c0_83 = arith.constant 0 : index
    %c1_84 = arith.constant 1 : index
    %c0_85 = arith.constant 0 : index
    %c0_86 = arith.constant 0 : index
    %104 = vector.load %arg17[%c0_83, %c1_84, %c0_85, %c0_86] : memref<1x4x16x64xf32, #tpu.memory_space<vmem>>, vector<1x1x16x64xf32>
    %105 = vector.shape_cast %104 : vector<1x1x16x64xf32> to vector<16x64xf32>
    %cst_87 = arith.constant dense<0.000000e+00> : vector<48x64xf32>
    %106 = tpu.matmul %103, %105, %cst_87 {dimension_numbers = #tpu.dot_dimension_numbers<[1], [0], [0], [1], [0, 0, 1, 1], [], []>} : vector<48x16xf32>, vector<16x64xf32>, vector<48x64xf32> -> vector<48x64xf32>
    %107 = arith.addf %68, %106 : vector<48x64xf32>
    %c0_88 = arith.constant 0 : index
    %c2 = arith.constant 2 : index
    %c0_89 = arith.constant 0 : index
    %c0_90 = arith.constant 0 : index
    %108 = vector.load %arg11[%c0_88, %c2, %c0_89, %c0_90] : memref<1x4x64x16xf32, #tpu.memory_space<vmem>>, vector<1x1x64x16xf32>
    %109 = vector.shape_cast %108 : vector<1x1x64x16xf32> to vector<64x16xf32>
    %cst_91 = arith.constant dense<0.000000e+00> : vector<48x16xf32>
    %110 = tpu.matmul %27, %109, %cst_91 {dimension_numbers = #tpu.dot_dimension_numbers<[1], [0], [0], [1], [0, 0, 1, 1], [], []>} : vector<48x64xf32>, vector<64x16xf32>, vector<48x16xf32> -> vector<48x16xf32>
    %c0_92 = arith.constant 0 : index
    %c2_93 = arith.constant 2 : index
    %c0_94 = arith.constant 0 : index
    %c0_95 = arith.constant 0 : index
    %111 = vector.load %arg14[%c0_92, %c2_93, %c0_94, %c0_95] : memref<1x4x1x16xf32, #tpu.memory_space<vmem>>, vector<1x1x1x16xf32>
    %112 = vector.shape_cast %111 : vector<1x1x1x16xf32> to vector<1x16xf32>
    %113 = vector.broadcast %112 : vector<1x16xf32> to vector<48x16xf32>
    %114 = arith.addf %110, %113 : vector<48x16xf32>
    %c0_96 = arith.constant 0 : index
    %c2_97 = arith.constant 2 : index
    %c0_98 = arith.constant 0 : index
    %c0_99 = arith.constant 0 : index
    %115 = vector.load %arg12[%c0_96, %c2_97, %c0_98, %c0_99] : memref<1x4x64x16xf32, #tpu.memory_space<vmem>>, vector<1x1x64x16xf32>
    %116 = vector.shape_cast %115 : vector<1x1x64x16xf32> to vector<64x16xf32>
    %cst_100 = arith.constant dense<0.000000e+00> : vector<48x16xf32>
    %117 = tpu.matmul %27, %116, %cst_100 {dimension_numbers = #tpu.dot_dimension_numbers<[1], [0], [0], [1], [0, 0, 1, 1], [], []>} : vector<48x64xf32>, vector<64x16xf32>, vector<48x16xf32> -> vector<48x16xf32>
    %c0_101 = arith.constant 0 : index
    %c2_102 = arith.constant 2 : index
    %c0_103 = arith.constant 0 : index
    %c0_104 = arith.constant 0 : index
    %118 = vector.load %arg15[%c0_101, %c2_102, %c0_103, %c0_104] : memref<1x4x1x16xf32, #tpu.memory_space<vmem>>, vector<1x1x1x16xf32>
    %119 = vector.shape_cast %118 : vector<1x1x1x16xf32> to vector<1x16xf32>
    %120 = vector.broadcast %119 : vector<1x16xf32> to vector<48x16xf32>
    %121 = arith.addf %117, %120 : vector<48x16xf32>
    %c0_105 = arith.constant 0 : index
    %c2_106 = arith.constant 2 : index
    %c0_107 = arith.constant 0 : index
    %c0_108 = arith.constant 0 : index
    %122 = vector.load %arg13[%c0_105, %c2_106, %c0_107, %c0_108] : memref<1x4x64x16xf32, #tpu.memory_space<vmem>>, vector<1x1x64x16xf32>
    %123 = vector.shape_cast %122 : vector<1x1x64x16xf32> to vector<64x16xf32>
    %cst_109 = arith.constant dense<0.000000e+00> : vector<48x16xf32>
    %124 = tpu.matmul %27, %123, %cst_109 {dimension_numbers = #tpu.dot_dimension_numbers<[1], [0], [0], [1], [0, 0, 1, 1], [], []>} : vector<48x64xf32>, vector<64x16xf32>, vector<48x16xf32> -> vector<48x16xf32>
    %c0_110 = arith.constant 0 : index
    %c2_111 = arith.constant 2 : index
    %c0_112 = arith.constant 0 : index
    %c0_113 = arith.constant 0 : index
    %125 = vector.load %arg16[%c0_110, %c2_111, %c0_112, %c0_113] : memref<1x4x1x16xf32, #tpu.memory_space<vmem>>, vector<1x1x1x16xf32>
    %126 = vector.shape_cast %125 : vector<1x1x1x16xf32> to vector<1x16xf32>
    %127 = vector.broadcast %126 : vector<1x16xf32> to vector<48x16xf32>
    %128 = arith.addf %124, %127 : vector<48x16xf32>
    %cst_114 = arith.constant dense<0.000000e+00> : vector<48x48xf32>
    %129 = tpu.matmul %114, %121, %cst_114 {dimension_numbers = #tpu.dot_dimension_numbers<[1], [1], [0], [0], [0, 0, 1, 0], [], []>} : vector<48x16xf32>, vector<48x16xf32>, vector<48x48xf32> -> vector<48x48xf32>
    %cst_115 = arith.constant 2.500000e-01 : f32
    %130 = vector.broadcast %cst_115 : f32 to vector<48x48xf32>
    %131 = arith.mulf %129, %130 : vector<48x48xf32>
    %132 = arith.addf %131, %28 : vector<48x48xf32>
    %cst_116 = arith.constant dense<0xFF800000> : vector<48xf32>
    %133 = vector.multi_reduction <maximumf>, %132, %cst_116 [1] : vector<48x48xf32> to vector<48xf32>
    %134 = vector.shape_cast %133 : vector<48xf32> to vector<48x1xf32>
    %135 = vector.broadcast %134 : vector<48x1xf32> to vector<48x48xf32>
    %136 = arith.subf %132, %135 : vector<48x48xf32>
    %137 = math.exp %136 : vector<48x48xf32>
    %cst_117 = arith.constant dense<0.000000e+00> : vector<48xf32>
    %138 = vector.multi_reduction <add>, %137, %cst_117 [1] : vector<48x48xf32> to vector<48xf32>
    %139 = vector.shape_cast %138 : vector<48xf32> to vector<48x1xf32>
    %140 = vector.broadcast %139 : vector<48x1xf32> to vector<48x48xf32>
    %141 = arith.divf %137, %140 : vector<48x48xf32>
    %cst_118 = arith.constant dense<0.000000e+00> : vector<48x16xf32>
    %142 = tpu.matmul %141, %128, %cst_118 {dimension_numbers = #tpu.dot_dimension_numbers<[1], [0], [0], [1], [0, 0, 1, 1], [], []>} : vector<48x48xf32>, vector<48x16xf32>, vector<48x16xf32> -> vector<48x16xf32>
    %c0_119 = arith.constant 0 : index
    %c2_120 = arith.constant 2 : index
    %c0_121 = arith.constant 0 : index
    %c0_122 = arith.constant 0 : index
    %143 = vector.load %arg17[%c0_119, %c2_120, %c0_121, %c0_122] : memref<1x4x16x64xf32, #tpu.memory_space<vmem>>, vector<1x1x16x64xf32>
    %144 = vector.shape_cast %143 : vector<1x1x16x64xf32> to vector<16x64xf32>
    %cst_123 = arith.constant dense<0.000000e+00> : vector<48x64xf32>
    %145 = tpu.matmul %142, %144, %cst_123 {dimension_numbers = #tpu.dot_dimension_numbers<[1], [0], [0], [1], [0, 0, 1, 1], [], []>} : vector<48x16xf32>, vector<16x64xf32>, vector<48x64xf32> -> vector<48x64xf32>
    %146 = arith.addf %107, %145 : vector<48x64xf32>
    %c0_124 = arith.constant 0 : index
    %c3 = arith.constant 3 : index
    %c0_125 = arith.constant 0 : index
    %c0_126 = arith.constant 0 : index
    %147 = vector.load %arg11[%c0_124, %c3, %c0_125, %c0_126] : memref<1x4x64x16xf32, #tpu.memory_space<vmem>>, vector<1x1x64x16xf32>
    %148 = vector.shape_cast %147 : vector<1x1x64x16xf32> to vector<64x16xf32>
    %cst_127 = arith.constant dense<0.000000e+00> : vector<48x16xf32>
    %149 = tpu.matmul %27, %148, %cst_127 {dimension_numbers = #tpu.dot_dimension_numbers<[1], [0], [0], [1], [0, 0, 1, 1], [], []>} : vector<48x64xf32>, vector<64x16xf32>, vector<48x16xf32> -> vector<48x16xf32>
    %c0_128 = arith.constant 0 : index
    %c3_129 = arith.constant 3 : index
    %c0_130 = arith.constant 0 : index
    %c0_131 = arith.constant 0 : index
    %150 = vector.load %arg14[%c0_128, %c3_129, %c0_130, %c0_131] : memref<1x4x1x16xf32, #tpu.memory_space<vmem>>, vector<1x1x1x16xf32>
    %151 = vector.shape_cast %150 : vector<1x1x1x16xf32> to vector<1x16xf32>
    %152 = vector.broadcast %151 : vector<1x16xf32> to vector<48x16xf32>
    %153 = arith.addf %149, %152 : vector<48x16xf32>
    %c0_132 = arith.constant 0 : index
    %c3_133 = arith.constant 3 : index
    %c0_134 = arith.constant 0 : index
    %c0_135 = arith.constant 0 : index
    %154 = vector.load %arg12[%c0_132, %c3_133, %c0_134, %c0_135] : memref<1x4x64x16xf32, #tpu.memory_space<vmem>>, vector<1x1x64x16xf32>
    %155 = vector.shape_cast %154 : vector<1x1x64x16xf32> to vector<64x16xf32>
    %cst_136 = arith.constant dense<0.000000e+00> : vector<48x16xf32>
    %156 = tpu.matmul %27, %155, %cst_136 {dimension_numbers = #tpu.dot_dimension_numbers<[1], [0], [0], [1], [0, 0, 1, 1], [], []>} : vector<48x64xf32>, vector<64x16xf32>, vector<48x16xf32> -> vector<48x16xf32>
    %c0_137 = arith.constant 0 : index
    %c3_138 = arith.constant 3 : index
    %c0_139 = arith.constant 0 : index
    %c0_140 = arith.constant 0 : index
    %157 = vector.load %arg15[%c0_137, %c3_138, %c0_139, %c0_140] : memref<1x4x1x16xf32, #tpu.memory_space<vmem>>, vector<1x1x1x16xf32>
    %158 = vector.shape_cast %157 : vector<1x1x1x16xf32> to vector<1x16xf32>
    %159 = vector.broadcast %158 : vector<1x16xf32> to vector<48x16xf32>
    %160 = arith.addf %156, %159 : vector<48x16xf32>
    %c0_141 = arith.constant 0 : index
    %c3_142 = arith.constant 3 : index
    %c0_143 = arith.constant 0 : index
    %c0_144 = arith.constant 0 : index
    %161 = vector.load %arg13[%c0_141, %c3_142, %c0_143, %c0_144] : memref<1x4x64x16xf32, #tpu.memory_space<vmem>>, vector<1x1x64x16xf32>
    %162 = vector.shape_cast %161 : vector<1x1x64x16xf32> to vector<64x16xf32>
    %cst_145 = arith.constant dense<0.000000e+00> : vector<48x16xf32>
    %163 = tpu.matmul %27, %162, %cst_145 {dimension_numbers = #tpu.dot_dimension_numbers<[1], [0], [0], [1], [0, 0, 1, 1], [], []>} : vector<48x64xf32>, vector<64x16xf32>, vector<48x16xf32> -> vector<48x16xf32>
    %c0_146 = arith.constant 0 : index
    %c3_147 = arith.constant 3 : index
    %c0_148 = arith.constant 0 : index
    %c0_149 = arith.constant 0 : index
    %164 = vector.load %arg16[%c0_146, %c3_147, %c0_148, %c0_149] : memref<1x4x1x16xf32, #tpu.memory_space<vmem>>, vector<1x1x1x16xf32>
    %165 = vector.shape_cast %164 : vector<1x1x1x16xf32> to vector<1x16xf32>
    %166 = vector.broadcast %165 : vector<1x16xf32> to vector<48x16xf32>
    %167 = arith.addf %163, %166 : vector<48x16xf32>
    %cst_150 = arith.constant dense<0.000000e+00> : vector<48x48xf32>
    %168 = tpu.matmul %153, %160, %cst_150 {dimension_numbers = #tpu.dot_dimension_numbers<[1], [1], [0], [0], [0, 0, 1, 0], [], []>} : vector<48x16xf32>, vector<48x16xf32>, vector<48x48xf32> -> vector<48x48xf32>
    %cst_151 = arith.constant 2.500000e-01 : f32
    %169 = vector.broadcast %cst_151 : f32 to vector<48x48xf32>
    %170 = arith.mulf %168, %169 : vector<48x48xf32>
    %171 = arith.addf %170, %28 : vector<48x48xf32>
    %cst_152 = arith.constant dense<0xFF800000> : vector<48xf32>
    %172 = vector.multi_reduction <maximumf>, %171, %cst_152 [1] : vector<48x48xf32> to vector<48xf32>
    %173 = vector.shape_cast %172 : vector<48xf32> to vector<48x1xf32>
    %174 = vector.broadcast %173 : vector<48x1xf32> to vector<48x48xf32>
    %175 = arith.subf %171, %174 : vector<48x48xf32>
    %176 = math.exp %175 : vector<48x48xf32>
    %cst_153 = arith.constant dense<0.000000e+00> : vector<48xf32>
    %177 = vector.multi_reduction <add>, %176, %cst_153 [1] : vector<48x48xf32> to vector<48xf32>
    %178 = vector.shape_cast %177 : vector<48xf32> to vector<48x1xf32>
    %179 = vector.broadcast %178 : vector<48x1xf32> to vector<48x48xf32>
    %180 = arith.divf %176, %179 : vector<48x48xf32>
    %cst_154 = arith.constant dense<0.000000e+00> : vector<48x16xf32>
    %181 = tpu.matmul %180, %167, %cst_154 {dimension_numbers = #tpu.dot_dimension_numbers<[1], [0], [0], [1], [0, 0, 1, 1], [], []>} : vector<48x48xf32>, vector<48x16xf32>, vector<48x16xf32> -> vector<48x16xf32>
    %c0_155 = arith.constant 0 : index
    %c3_156 = arith.constant 3 : index
    %c0_157 = arith.constant 0 : index
    %c0_158 = arith.constant 0 : index
    %182 = vector.load %arg17[%c0_155, %c3_156, %c0_157, %c0_158] : memref<1x4x16x64xf32, #tpu.memory_space<vmem>>, vector<1x1x16x64xf32>
    %183 = vector.shape_cast %182 : vector<1x1x16x64xf32> to vector<16x64xf32>
    %cst_159 = arith.constant dense<0.000000e+00> : vector<48x64xf32>
    %184 = tpu.matmul %181, %183, %cst_159 {dimension_numbers = #tpu.dot_dimension_numbers<[1], [0], [0], [1], [0, 0, 1, 1], [], []>} : vector<48x16xf32>, vector<16x64xf32>, vector<48x64xf32> -> vector<48x64xf32>
    %185 = arith.addf %146, %184 : vector<48x64xf32>
    %186 = arith.addf %3, %185 : vector<48x64xf32>
    %c0_160 = arith.constant 0 : index
    %c0_161 = arith.constant 0 : index
    %c0_162 = arith.constant 0 : index
    %187 = vector.load %arg18[%c0_160, %c0_161, %c0_162] : memref<1x1x64xf32, #tpu.memory_space<vmem>>, vector<1x1x64xf32>
    %188 = vector.shape_cast %187 : vector<1x1x64xf32> to vector<1x64xf32>
    %189 = vector.broadcast %188 : vector<1x64xf32> to vector<48x64xf32>
    %190 = arith.addf %186, %189 : vector<48x64xf32>
    %c0_163 = arith.constant 0 : index
    %c0_164 = arith.constant 0 : index
    %c0_165 = arith.constant 0 : index
    %191 = vector.load %arg19[%c0_163, %c0_164, %c0_165] : memref<1x1x64xf32, #tpu.memory_space<vmem>>, vector<1x1x64xf32>
    %192 = vector.shape_cast %191 : vector<1x1x64xf32> to vector<1x64xf32>
    %c0_166 = arith.constant 0 : index
    %c0_167 = arith.constant 0 : index
    %c0_168 = arith.constant 0 : index
    %193 = vector.load %arg20[%c0_166, %c0_167, %c0_168] : memref<1x1x64xf32, #tpu.memory_space<vmem>>, vector<1x1x64xf32>
    %194 = vector.shape_cast %193 : vector<1x1x64xf32> to vector<1x64xf32>
    %cst_169 = arith.constant dense<0.000000e+00> : vector<48xf32>
    %195 = vector.multi_reduction <add>, %190, %cst_169 [1] : vector<48x64xf32> to vector<48xf32>
    %196 = vector.shape_cast %195 : vector<48xf32> to vector<48x1xf32>
    %cst_170 = arith.constant 6.400000e+01 : f32
    %197 = vector.broadcast %cst_170 : f32 to vector<48x1xf32>
    %198 = arith.divf %196, %197 : vector<48x1xf32>
    %199 = vector.broadcast %198 : vector<48x1xf32> to vector<48x64xf32>
    %200 = arith.subf %190, %199 : vector<48x64xf32>
    %201 = arith.mulf %200, %200 : vector<48x64xf32>
    %cst_171 = arith.constant dense<0.000000e+00> : vector<48xf32>
    %202 = vector.multi_reduction <add>, %201, %cst_171 [1] : vector<48x64xf32> to vector<48xf32>
    %203 = vector.shape_cast %202 : vector<48xf32> to vector<48x1xf32>
    %cst_172 = arith.constant 6.400000e+01 : f32
    %204 = vector.broadcast %cst_172 : f32 to vector<48x1xf32>
    %205 = arith.divf %203, %204 : vector<48x1xf32>
    %cst_173 = arith.constant 9.99999997E-7 : f32
    %206 = vector.broadcast %cst_173 : f32 to vector<48x1xf32>
    %207 = arith.addf %205, %206 : vector<48x1xf32>
    %208 = math.rsqrt %207 : vector<48x1xf32>
    %209 = vector.broadcast %208 : vector<48x1xf32> to vector<48x64xf32>
    %210 = arith.mulf %200, %209 : vector<48x64xf32>
    %211 = vector.broadcast %192 : vector<1x64xf32> to vector<48x64xf32>
    %212 = arith.mulf %210, %211 : vector<48x64xf32>
    %213 = vector.broadcast %194 : vector<1x64xf32> to vector<48x64xf32>
    %214 = arith.addf %212, %213 : vector<48x64xf32>
    %c0_174 = arith.constant 0 : index
    %c0_175 = arith.constant 0 : index
    %c0_176 = arith.constant 0 : index
    %215 = vector.load %arg21[%c0_174, %c0_175, %c0_176] : memref<1x64x256xf32, #tpu.memory_space<vmem>>, vector<1x64x256xf32>
    %216 = vector.shape_cast %215 : vector<1x64x256xf32> to vector<64x256xf32>
    %cst_177 = arith.constant dense<0.000000e+00> : vector<48x256xf32>
    %217 = tpu.matmul %214, %216, %cst_177 {dimension_numbers = #tpu.dot_dimension_numbers<[1], [0], [0], [1], [0, 0, 1, 1], [], []>} : vector<48x64xf32>, vector<64x256xf32>, vector<48x256xf32> -> vector<48x256xf32>
    %c0_178 = arith.constant 0 : index
    %c0_179 = arith.constant 0 : index
    %c0_180 = arith.constant 0 : index
    %218 = vector.load %arg22[%c0_178, %c0_179, %c0_180] : memref<1x1x256xf32, #tpu.memory_space<vmem>>, vector<1x1x256xf32>
    %219 = vector.shape_cast %218 : vector<1x1x256xf32> to vector<1x256xf32>
    %220 = vector.broadcast %219 : vector<1x256xf32> to vector<48x256xf32>
    %221 = arith.addf %217, %220 : vector<48x256xf32>
    %222 = arith.mulf %221, %221 : vector<48x256xf32>
    %223 = arith.mulf %221, %222 : vector<48x256xf32>
    %cst_181 = arith.constant 4.471500e-02 : f32
    %224 = vector.broadcast %cst_181 : f32 to vector<48x256xf32>
    %225 = arith.mulf %224, %223 : vector<48x256xf32>
    %226 = arith.addf %221, %225 : vector<48x256xf32>
    %cst_182 = arith.constant 0.797884583 : f32
    %227 = vector.broadcast %cst_182 : f32 to vector<48x256xf32>
    %228 = arith.mulf %227, %226 : vector<48x256xf32>
    %229 = math.tanh %228 : vector<48x256xf32>
    %cst_183 = arith.constant 1.000000e+00 : f32
    %230 = vector.broadcast %cst_183 : f32 to vector<48x256xf32>
    %231 = arith.addf %230, %229 : vector<48x256xf32>
    %cst_184 = arith.constant 5.000000e-01 : f32
    %232 = vector.broadcast %cst_184 : f32 to vector<48x256xf32>
    %233 = arith.mulf %232, %231 : vector<48x256xf32>
    %234 = arith.mulf %221, %233 : vector<48x256xf32>
    %c0_185 = arith.constant 0 : index
    %c0_186 = arith.constant 0 : index
    %c0_187 = arith.constant 0 : index
    %235 = vector.load %arg23[%c0_185, %c0_186, %c0_187] : memref<1x256x64xf32, #tpu.memory_space<vmem>>, vector<1x256x64xf32>
    %236 = vector.shape_cast %235 : vector<1x256x64xf32> to vector<256x64xf32>
    %cst_188 = arith.constant dense<0.000000e+00> : vector<48x64xf32>
    %237 = tpu.matmul %234, %236, %cst_188 {dimension_numbers = #tpu.dot_dimension_numbers<[1], [0], [0], [1], [0, 0, 1, 1], [], []>} : vector<48x256xf32>, vector<256x64xf32>, vector<48x64xf32> -> vector<48x64xf32>
    %238 = arith.addf %190, %237 : vector<48x64xf32>
    %c0_189 = arith.constant 0 : index
    %c0_190 = arith.constant 0 : index
    %c0_191 = arith.constant 0 : index
    %239 = vector.load %arg24[%c0_189, %c0_190, %c0_191] : memref<1x1x64xf32, #tpu.memory_space<vmem>>, vector<1x1x64xf32>
    %240 = vector.shape_cast %239 : vector<1x1x64xf32> to vector<1x64xf32>
    %241 = vector.broadcast %240 : vector<1x64xf32> to vector<48x64xf32>
    %242 = arith.addf %238, %241 : vector<48x64xf32>
    %c0_192 = arith.constant 0 : index
    %c0_193 = arith.constant 0 : index
    %243 = vector.load %arg26[%c0_192, %c0_193] : memref<48x64xf32, #tpu.memory_space<vmem>>, vector<48x64xf32>
    tpu.vector_store %arg26[%c0_192, %c0_193], %242 {strides = array<i32>} : memref<48x64xf32, #tpu.memory_space<vmem>>, vector<48x64xf32>,
    %c3_i32 = arith.constant 3 : i32
    %244 = arith.cmpi eq, %arg0, %c3_i32 : i32
    %245 = arith.extui %244 : i1 to i32
    %c0_i32_194 = arith.constant 0 : i32
    %246 = arith.cmpi ne, %245, %c0_i32_194 : i32
    scf.if %246 {
      %c0_195 = arith.constant 0 : index
      %c0_196 = arith.constant 0 : index
      %247 = vector.load %arg6[%c0_195, %c0_196] : memref<2x48xf32, #tpu.memory_space<vmem>>, vector<2x48xf32>
      %cst_197 = arith.constant dense<0.000000e+00> : vector<2x64xf32>
      %248 = tpu.matmul %247, %242, %cst_197 {dimension_numbers = #tpu.dot_dimension_numbers<[1], [0], [0], [1], [0, 0, 1, 1], [], []>} : vector<2x48xf32>, vector<48x64xf32>, vector<2x64xf32> -> vector<2x64xf32>
      %c0_198 = arith.constant 0 : index
      %c0_199 = arith.constant 0 : index
      %249 = vector.load %arg7[%c0_198, %c0_199] : memref<1x64xf32, #tpu.memory_space<vmem>>, vector<1x64xf32>
      %c0_200 = arith.constant 0 : index
      %c0_201 = arith.constant 0 : index
      %250 = vector.load %arg8[%c0_200, %c0_201] : memref<1x64xf32, #tpu.memory_space<vmem>>, vector<1x64xf32>
      %cst_202 = arith.constant dense<0.000000e+00> : vector<2xf32>
      %251 = vector.multi_reduction <add>, %248, %cst_202 [1] : vector<2x64xf32> to vector<2xf32>
      %252 = vector.shape_cast %251 : vector<2xf32> to vector<2x1xf32>
      %cst_203 = arith.constant 6.400000e+01 : f32
      %253 = vector.broadcast %cst_203 : f32 to vector<2x1xf32>
      %254 = arith.divf %252, %253 : vector<2x1xf32>
      %255 = vector.broadcast %254 : vector<2x1xf32> to vector<2x64xf32>
      %256 = arith.subf %248, %255 : vector<2x64xf32>
      %257 = arith.mulf %256, %256 : vector<2x64xf32>
      %cst_204 = arith.constant dense<0.000000e+00> : vector<2xf32>
      %258 = vector.multi_reduction <add>, %257, %cst_204 [1] : vector<2x64xf32> to vector<2xf32>
      %259 = vector.shape_cast %258 : vector<2xf32> to vector<2x1xf32>
      %cst_205 = arith.constant 6.400000e+01 : f32
      %260 = vector.broadcast %cst_205 : f32 to vector<2x1xf32>
      %261 = arith.divf %259, %260 : vector<2x1xf32>
      %cst_206 = arith.constant 9.99999997E-7 : f32
      %262 = vector.broadcast %cst_206 : f32 to vector<2x1xf32>
      %263 = arith.addf %261, %262 : vector<2x1xf32>
      %264 = math.rsqrt %263 : vector<2x1xf32>
      %265 = vector.broadcast %264 : vector<2x1xf32> to vector<2x64xf32>
      %266 = arith.mulf %256, %265 : vector<2x64xf32>
      %267 = vector.broadcast %249 : vector<1x64xf32> to vector<2x64xf32>
      %268 = arith.mulf %266, %267 : vector<2x64xf32>
      %269 = vector.broadcast %250 : vector<1x64xf32> to vector<2x64xf32>
      %270 = arith.addf %268, %269 : vector<2x64xf32>
      %c0_207 = arith.constant 0 : index
      %c0_208 = arith.constant 0 : index
      %271 = vector.load %arg25[%c0_207, %c0_208] : memref<2x64xf32, #tpu.memory_space<vmem>>, vector<2x64xf32>
      tpu.vector_store %arg25[%c0_207, %c0_208], %270 {strides = array<i32>} : memref<2x64xf32, #tpu.memory_space<vmem>>, vector<2x64xf32>,
    } else {
    }
    return
  }
  func.func @transform_0(%arg0: i32) -> (i32, i32) {
    %c0_i32 = arith.constant 0 : i32
    %c0_i32_0 = arith.constant 0 : i32
    %c0_i32_1 = arith.constant 0 : i32
    return %c0_i32, %c0_i32_0 : i32, i32
  }
  func.func @transform_1(%arg0: i32) -> (i32, i32) {
    %c0_i32 = arith.constant 0 : i32
    %c0_i32_0 = arith.constant 0 : i32
    %c0_i32_1 = arith.constant 0 : i32
    return %c0_i32, %c0_i32_0 : i32, i32
  }
  func.func @transform_2(%arg0: i32) -> (i32, i32) {
    %c0_i32 = arith.constant 0 : i32
    %c0_i32_0 = arith.constant 0 : i32
    %c0_i32_1 = arith.constant 0 : i32
    return %c0_i32, %c0_i32_0 : i32, i32
  }
  func.func @transform_3(%arg0: i32) -> (i32, i32) {
    %c0_i32 = arith.constant 0 : i32
    %c0_i32_0 = arith.constant 0 : i32
    %c0_i32_1 = arith.constant 0 : i32
    return %c0_i32, %c0_i32_0 : i32, i32
  }
  func.func @transform_4(%arg0: i32) -> (i32, i32) {
    %c0_i32 = arith.constant 0 : i32
    %c0_i32_0 = arith.constant 0 : i32
    %c0_i32_1 = arith.constant 0 : i32
    return %c0_i32, %c0_i32_0 : i32, i32
  }
  func.func @transform_5(%arg0: i32) -> (i32, i32) {
    %c0_i32 = arith.constant 0 : i32
    %c0_i32_0 = arith.constant 0 : i32
    %c0_i32_1 = arith.constant 0 : i32
    return %c0_i32, %c0_i32_0 : i32, i32
  }
  func.func @transform_6(%arg0: i32) -> (i32, i32) {
    %c0_i32 = arith.constant 0 : i32
    %c0_i32_0 = arith.constant 0 : i32
    %c0_i32_1 = arith.constant 0 : i32
    return %c0_i32, %c0_i32_0 : i32, i32
  }
  func.func @transform_7(%arg0: i32) -> (i32, i32) {
    %c0_i32 = arith.constant 0 : i32
    %c0_i32_0 = arith.constant 0 : i32
    %c0_i32_1 = arith.constant 0 : i32
    return %c0_i32, %c0_i32_0 : i32, i32
  }
  func.func @transform_8(%arg0: i32) -> (i32, i32, i32) {
    %c0_i32 = arith.constant 0 : i32
    %c0_i32_0 = arith.constant 0 : i32
    %c0_i32_1 = arith.constant 0 : i32
    return %arg0, %c0_i32, %c0_i32_0 : i32, i32, i32
  }
  func.func @transform_9(%arg0: i32) -> (i32, i32, i32) {
    %c0_i32 = arith.constant 0 : i32
    %c0_i32_0 = arith.constant 0 : i32
    %c0_i32_1 = arith.constant 0 : i32
    return %arg0, %c0_i32, %c0_i32_0 : i32, i32, i32
  }
  func.func @transform_10(%arg0: i32) -> (i32, i32, i32, i32) {
    %c0_i32 = arith.constant 0 : i32
    %c0_i32_0 = arith.constant 0 : i32
    %c0_i32_1 = arith.constant 0 : i32
    %c0_i32_2 = arith.constant 0 : i32
    return %arg0, %c0_i32, %c0_i32_0, %c0_i32_1 : i32, i32, i32, i32
  }
  func.func @transform_11(%arg0: i32) -> (i32, i32, i32, i32) {
    %c0_i32 = arith.constant 0 : i32
    %c0_i32_0 = arith.constant 0 : i32
    %c0_i32_1 = arith.constant 0 : i32
    %c0_i32_2 = arith.constant 0 : i32
    return %arg0, %c0_i32, %c0_i32_0, %c0_i32_1 : i32, i32, i32, i32
  }
  func.func @transform_12(%arg0: i32) -> (i32, i32, i32, i32) {
    %c0_i32 = arith.constant 0 : i32
    %c0_i32_0 = arith.constant 0 : i32
    %c0_i32_1 = arith.constant 0 : i32
    %c0_i32_2 = arith.constant 0 : i32
    return %arg0, %c0_i32, %c0_i32_0, %c0_i32_1 : i32, i32, i32, i32
  }
  func.func @transform_13(%arg0: i32) -> (i32, i32, i32, i32) {
    %c0_i32 = arith.constant 0 : i32
    %c0_i32_0 = arith.constant 0 : i32
    %c0_i32_1 = arith.constant 0 : i32
    %c0_i32_2 = arith.constant 0 : i32
    return %arg0, %c0_i32, %c0_i32_0, %c0_i32_1 : i32, i32, i32, i32
  }
  func.func @transform_14(%arg0: i32) -> (i32, i32, i32, i32) {
    %c0_i32 = arith.constant 0 : i32
    %c0_i32_0 = arith.constant 0 : i32
    %c0_i32_1 = arith.constant 0 : i32
    %c0_i32_2 = arith.constant 0 : i32
    return %arg0, %c0_i32, %c0_i32_0, %c0_i32_1 : i32, i32, i32, i32
  }
  func.func @transform_15(%arg0: i32) -> (i32, i32, i32, i32) {
    %c0_i32 = arith.constant 0 : i32
    %c0_i32_0 = arith.constant 0 : i32
    %c0_i32_1 = arith.constant 0 : i32
    %c0_i32_2 = arith.constant 0 : i32
    return %arg0, %c0_i32, %c0_i32_0, %c0_i32_1 : i32, i32, i32, i32
  }
  func.func @transform_16(%arg0: i32) -> (i32, i32, i32, i32) {
    %c0_i32 = arith.constant 0 : i32
    %c0_i32_0 = arith.constant 0 : i32
    %c0_i32_1 = arith.constant 0 : i32
    %c0_i32_2 = arith.constant 0 : i32
    return %arg0, %c0_i32, %c0_i32_0, %c0_i32_1 : i32, i32, i32, i32
  }
  func.func @transform_17(%arg0: i32) -> (i32, i32, i32) {
    %c0_i32 = arith.constant 0 : i32
    %c0_i32_0 = arith.constant 0 : i32
    %c0_i32_1 = arith.constant 0 : i32
    return %arg0, %c0_i32, %c0_i32_0 : i32, i32, i32
  }
  func.func @transform_18(%arg0: i32) -> (i32, i32, i32) {
    %c0_i32 = arith.constant 0 : i32
    %c0_i32_0 = arith.constant 0 : i32
    %c0_i32_1 = arith.constant 0 : i32
    return %arg0, %c0_i32, %c0_i32_0 : i32, i32, i32
  }
  func.func @transform_19(%arg0: i32) -> (i32, i32, i32) {
    %c0_i32 = arith.constant 0 : i32
    %c0_i32_0 = arith.constant 0 : i32
    %c0_i32_1 = arith.constant 0 : i32
    return %arg0, %c0_i32, %c0_i32_0 : i32, i32, i32
  }
  func.func @transform_20(%arg0: i32) -> (i32, i32, i32) {
    %c0_i32 = arith.constant 0 : i32
    %c0_i32_0 = arith.constant 0 : i32
    %c0_i32_1 = arith.constant 0 : i32
    return %arg0, %c0_i32, %c0_i32_0 : i32, i32, i32
  }
  func.func @transform_21(%arg0: i32) -> (i32, i32, i32) {
    %c0_i32 = arith.constant 0 : i32
    %c0_i32_0 = arith.constant 0 : i32
    %c0_i32_1 = arith.constant 0 : i32
    return %arg0, %c0_i32, %c0_i32_0 : i32, i32, i32
  }
  func.func @transform_22(%arg0: i32) -> (i32, i32, i32) {
    %c0_i32 = arith.constant 0 : i32
    %c0_i32_0 = arith.constant 0 : i32
    %c0_i32_1 = arith.constant 0 : i32
    return %arg0, %c0_i32, %c0_i32_0 : i32, i32, i32
  }
  func.func @transform_23(%arg0: i32) -> (i32, i32, i32) {
    %c0_i32 = arith.constant 0 : i32
    %c0_i32_0 = arith.constant 0 : i32
    %c0_i32_1 = arith.constant 0 : i32
    return %arg0, %c0_i32, %c0_i32_0 : i32, i32, i32
  }
  func.func @transform_24(%arg0: i32) -> (i32, i32) {
    %c0_i32 = arith.constant 0 : i32
    %c0_i32_0 = arith.constant 0 : i32
    %c0_i32_1 = arith.constant 0 : i32
    return %c0_i32, %c0_i32_0 : i32, i32
  }
}

</mosaic_0001>

<llo_original>
// kernel: vit_forward.1
$region0: #{vit_forward.1}
  #allocation0 [shape = 'u32[]', space=smem, size = 0x4, offset = 0x4, fixed_abs, tag = 'smem constant byte address 0x4 - core index']
  #allocation1 [shape = 'u32[144,128]{1,0:T(1,128)}', space=vmem, size = 0x12000, scoped, tag = 'internal scratch']
  #allocation2 [shape = 'f32[48,64]{1,0:T(8,128)}', space=vmem, size = 0x6000, scoped, tag = 'scratch operand']
  %s0 = inlined_call_operand.vmem [shape: f32[32,192], index: 0, kind: input, shape index: {}]
  %s1 = inlined_call_operand.vmem [shape: f32[192,64], index: 1, kind: input, shape index: {}]
  %s2 = inlined_call_operand.vmem [shape: f32[48,64], index: 2, kind: input, shape index: {}]
  %s3 = inlined_call_operand.vmem [shape: f32[48,32], index: 3, kind: input, shape index: {}]
  %s4 = inlined_call_operand.vmem [shape: f32[48,48], index: 4, kind: input, shape index: {}]
  %s5 = inlined_call_operand.vmem [shape: f32[2,48], index: 5, kind: input, shape index: {}]
  %s6 = inlined_call_operand.vmem [shape: f32[1,64], index: 6, kind: input, shape index: {}]
  %s7 = inlined_call_operand.vmem [shape: f32[1,64], index: 7, kind: input, shape index: {}]
  %s8 = inlined_call_operand.vmem [shape: f32[4,1,64], index: 8, kind: input, shape index: {}]
  %s9 = inlined_call_operand.vmem [shape: f32[4,1,64], index: 9, kind: input, shape index: {}]
  %s10 = inlined_call_operand.vmem [shape: f32[4,4,64,16], index: 10, kind: input, shape index: {}]
  %s11 = inlined_call_operand.vmem [shape: f32[4,4,64,16], index: 11, kind: input, shape index: {}]
  %s12 = inlined_call_operand.vmem [shape: f32[4,4,64,16], index: 12, kind: input, shape index: {}]
  %s13 = inlined_call_operand.vmem [shape: f32[4,4,1,16], index: 13, kind: input, shape index: {}]
  %s14 = inlined_call_operand.vmem [shape: f32[4,4,1,16], index: 14, kind: input, shape index: {}]
  %s15 = inlined_call_operand.vmem [shape: f32[4,4,1,16], index: 15, kind: input, shape index: {}]
  %s16 = inlined_call_operand.vmem [shape: f32[4,4,16,64], index: 16, kind: input, shape index: {}]
  %s17 = inlined_call_operand.vmem [shape: f32[4,1,64], index: 17, kind: input, shape index: {}]
  %s18 = inlined_call_operand.vmem [shape: f32[4,1,64], index: 18, kind: input, shape index: {}]
  %s19 = inlined_call_operand.vmem [shape: f32[4,1,64], index: 19, kind: input, shape index: {}]
  %s20 = inlined_call_operand.vmem [shape: f32[4,64,256], index: 20, kind: input, shape index: {}]
  %s21 = inlined_call_operand.vmem [shape: f32[4,1,256], index: 21, kind: input, shape index: {}]
  %s22 = inlined_call_operand.vmem [shape: f32[4,256,64], index: 22, kind: input, shape index: {}]
  %s23 = inlined_call_operand.vmem [shape: f32[4,1,64], index: 23, kind: input, shape index: {}]
  %s24 = inlined_call_operand.hbm [shape: f32[2,64], index: 24, kind: output, shape index: {}]
  %s25 = sld [smem:[#allocation0]]
  $region137: #{vit_forward.1} parent=0
    _
  %s27 = ssub.s32 1, %s25
  %s28 = scalar_select 0, %s27, %s25
  $region1: #{vit_forward.1} parent=0
    #allocation3 [shape = 'u8[1024]{0}', space=vmem, size = 0x400, scoped, tag = 'output window, operand 0, single buffered']
    #allocation4 [shape = 's32[2]{0}', space=sflag, size = 0x8, scoped, tag = 'scoped memory for vit_forward.1']
    %29 = vsyncpa [#allocation4], 0
    loop: start=0, step=1, limit=6
    $region2: #{vit_forward.1} parent=1 // loop_pre_header
      _
    $region3: #{vit_forward.1} parent=1 // loop_header
      %s31 = sphi 0, %s35
      %p32 = scmp.ge.s32.totalorder %s31, 6
      %s39 = sphi 0, %s39
      %s41 = sphi 0, %s39
      %s42 = sphi 0, %s41
      %s56 = sphi 0, %s42
      %s60 = sphi 0, %s60
      %s62 = sphi 0, %s60
      %s63 = sphi 0, %s62
      %s77 = sphi 0, %s63
      %s81 = sphi 0, %s81
      %s83 = sphi 0, %s81
      %s84 = sphi 0, %s83
      %s98 = sphi 0, %s84
      %s102 = sphi 0, %s102
      %s104 = sphi 0, %s102
      %s105 = sphi 0, %s104
      %s119 = sphi 0, %s105
      %s123 = sphi 0, %s123
      %s125 = sphi 0, %s123
      %s126 = sphi 0, %s125
      %s140 = sphi 0, %s126
      %s144 = sphi 0, %s144
      %s146 = sphi 0, %s144
      %s147 = sphi 0, %s146
      %s161 = sphi 0, %s147
      %s165 = sphi 0, %s165
      %s167 = sphi 0, %s165
      %s168 = sphi 0, %s167
      %s182 = sphi 0, %s168
      %s186 = sphi 0, %s186
      %s188 = sphi 0, %s186
      %s189 = sphi 0, %s188
      %s203 = sphi 0, %s189
      %s209 = sphi 0, %s211
      %s212 = sphi 0, %s209
      %s213 = sphi 0, %s212
      %s229 = sphi 0, %s213
      %s235 = sphi 0, %s237
      %s238 = sphi 0, %s235
      %s239 = sphi 0, %s238
      %s255 = sphi 0, %s239
      %s261 = sphi 0, %s263
      %s264 = sphi 0, %s261
      %s265 = sphi 0, %s264
      %s281 = sphi 0, %s265
      %s287 = sphi 0, %s289
      %s290 = sphi 0, %s287
      %s291 = sphi 0, %s290
      %s307 = sphi 0, %s291
      %s313 = sphi 0, %s315
      %s316 = sphi 0, %s313
      %s317 = sphi 0, %s316
      %s333 = sphi 0, %s317
      %s339 = sphi 0, %s341
      %s342 = sphi 0, %s339
      %s343 = sphi 0, %s342
      %s359 = sphi 0, %s343
      %s365 = sphi 0, %s367
      %s368 = sphi 0, %s365
      %s369 = sphi 0, %s368
      %s385 = sphi 0, %s369
      %s391 = sphi 0, %s393
      %s394 = sphi 0, %s391
      %s395 = sphi 0, %s394
      %s411 = sphi 0, %s395
      %s417 = sphi 0, %s419
      %s420 = sphi 0, %s417
      %s421 = sphi 0, %s420
      %s437 = sphi 0, %s421
      %s443 = sphi 0, %s445
      %s446 = sphi 0, %s443
      %s447 = sphi 0, %s446
      %s463 = sphi 0, %s447
      %s469 = sphi 0, %s471
      %s472 = sphi 0, %s469
      %s473 = sphi 0, %s472
      %s489 = sphi 0, %s473
      %s495 = sphi 0, %s497
      %s498 = sphi 0, %s495
      %s499 = sphi 0, %s498
      %s515 = sphi 0, %s499
      %s521 = sphi 0, %s523
      %s524 = sphi 0, %s521
      %s525 = sphi 0, %s524
      %s541 = sphi 0, %s525
      %s547 = sphi 0, %s549
      %s550 = sphi 0, %s547
      %s551 = sphi 0, %s550
      %s567 = sphi 0, %s551
      %s573 = sphi 0, %s575
      %s576 = sphi 0, %s573
      %s577 = sphi 0, %s576
      %s593 = sphi 0, %s577
      %s599 = sphi 0, %s601
      %s602 = sphi 0, %s599
      %s603 = sphi 0, %s602
      %s619 = sphi 0, %s603
      %s623 = sphi 0, %s623
      %s625 = sphi 0, %s623
      %s626 = sphi 0, %s625
      %s640 = sphi 0, %s626
    $region4: #{vit_forward.1} parent=1 // loop_header_branch
      %34 = sbr.rel (%p32) target = $region8
    $region5: #{vit_forward.1} parent=1 // loop_body
      %s36 = ssub.s32 %s31, 1
      %s37 = ssub.s32 %s31, 2
      %s38 = sadd.s32 %s31, 1
      %s40 = sadd.s32 %s39, 1
      %p43 = scmp.eq.s32.totalorder %s31, 3
      %p44 = scmp.ne.s32.totalorder %s39, %s41
      %p45 = scmp.eq.s32.totalorder %s31, 0
      %p46 = por %p44, %p45
      %p47 = scmp.ne.s32.totalorder %s39, %s41
      %p48 = scmp.eq.s32.totalorder %s36, 3
      %p49 = por %p47, %p48
      %p50 = scmp.ne.s32.totalorder %s41, %s42
      %p51 = scmp.eq.s32.totalorder %s36, 0
      %p52 = por %p50, %p51
      %p53 = scmp.ne.s32.totalorder %s41, %s42
      %p54 = scmp.eq.s32.totalorder %s37, 3
      %p55 = por %p53, %p54
      %p57 = scmp.ne.s32.totalorder %s42, %s56
      %p58 = scmp.eq.s32.totalorder %s37, 0
      %p59 = por %p57, %p58
      %s61 = sadd.s32 %s60, 1
      %p64 = scmp.eq.s32.totalorder %s31, 3
      %p65 = scmp.ne.s32.totalorder %s60, %s62
      %p66 = scmp.eq.s32.totalorder %s31, 0
      %p67 = por %p65, %p66
      %p68 = scmp.ne.s32.totalorder %s60, %s62
      %p69 = scmp.eq.s32.totalorder %s36, 3
      %p70 = por %p68, %p69
      %p71 = scmp.ne.s32.totalorder %s62, %s63
      %p72 = scmp.eq.s32.totalorder %s36, 0
      %p73 = por %p71, %p72
      %p74 = scmp.ne.s32.totalorder %s62, %s63
      %p75 = scmp.eq.s32.totalorder %s37, 3
      %p76 = por %p74, %p75
      %p78 = scmp.ne.s32.totalorder %s63, %s77
      %p79 = scmp.eq.s32.totalorder %s37, 0
      %p80 = por %p78, %p79
      %s82 = sadd.s32 %s81, 1
      %p85 = scmp.eq.s32.totalorder %s31, 3
      %p86 = scmp.ne.s32.totalorder %s81, %s83
      %p87 = scmp.eq.s32.totalorder %s31, 0
      %p88 = por %p86, %p87
      %p89 = scmp.ne.s32.totalorder %s81, %s83
      %p90 = scmp.eq.s32.totalorder %s36, 3
      %p91 = por %p89, %p90
      %p92 = scmp.ne.s32.totalorder %s83, %s84
      %p93 = scmp.eq.s32.totalorder %s36, 0
      %p94 = por %p92, %p93
      %p95 = scmp.ne.s32.totalorder %s83, %s84
      %p96 = scmp.eq.s32.totalorder %s37, 3
      %p97 = por %p95, %p96
      %p99 = scmp.ne.s32.totalorder %s84, %s98
      %p100 = scmp.eq.s32.totalorder %s37, 0
      %p101 = por %p99, %p100
      %s103 = sadd.s32 %s102, 1
      %p106 = scmp.eq.s32.totalorder %s31, 3
      %p107 = scmp.ne.s32.totalorder %s102, %s104
      %p108 = scmp.eq.s32.totalorder %s31, 0
      %p109 = por %p107, %p108
      %p110 = scmp.ne.s32.totalorder %s102, %s104
      %p111 = scmp.eq.s32.totalorder %s36, 3
      %p112 = por %p110, %p111
      %p113 = scmp.ne.s32.totalorder %s104, %s105
      %p114 = scmp.eq.s32.totalorder %s36, 0
      %p115 = por %p113, %p114
      %p116 = scmp.ne.s32.totalorder %s104, %s105
      %p117 = scmp.eq.s32.totalorder %s37, 3
      %p118 = por %p116, %p117
      %p120 = scmp.ne.s32.totalorder %s105, %s119
      %p121 = scmp.eq.s32.totalorder %s37, 0
      %p122 = por %p120, %p121
      %s124 = sadd.s32 %s123, 1
      %p127 = scmp.eq.s32.totalorder %s31, 3
      %p128 = scmp.ne.s32.totalorder %s123, %s125
      %p129 = scmp.eq.s32.totalorder %s31, 0
      %p130 = por %p128, %p129
      %p131 = scmp.ne.s32.totalorder %s123, %s125
      %p132 = scmp.eq.s32.totalorder %s36, 3
      %p133 = por %p131, %p132
      %p134 = scmp.ne.s32.totalorder %s125, %s126
      %p135 = scmp.eq.s32.totalorder %s36, 0
      %p136 = por %p134, %p135
      %p137 = scmp.ne.s32.totalorder %s125, %s126
      %p138 = scmp.eq.s32.totalorder %s37, 3
      %p139 = por %p137, %p138
      %p141 = scmp.ne.s32.totalorder %s126, %s140
      %p142 = scmp.eq.s32.totalorder %s37, 0
      %p143 = por %p141, %p142
      %s145 = sadd.s32 %s144, 1
      %p148 = scmp.eq.s32.totalorder %s31, 3
      %p149 = scmp.ne.s32.totalorder %s144, %s146
      %p150 = scmp.eq.s32.totalorder %s31, 0
      %p151 = por %p149, %p150
      %p152 = scmp.ne.s32.totalorder %s144, %s146
      %p153 = scmp.eq.s32.totalorder %s36, 3
      %p154 = por %p152, %p153
      %p155 = scmp.ne.s32.totalorder %s146, %s147
      %p156 = scmp.eq.s32.totalorder %s36, 0
      %p157 = por %p155, %p156
      %p158 = scmp.ne.s32.totalorder %s146, %s147
      %p159 = scmp.eq.s32.totalorder %s37, 3
      %p160 = por %p158, %p159
      %p162 = scmp.ne.s32.totalorder %s147, %s161
      %p163 = scmp.eq.s32.totalorder %s37, 0
      %p164 = por %p162, %p163
      %s166 = sadd.s32 %s165, 1
      %p169 = scmp.eq.s32.totalorder %s31, 3
      %p170 = scmp.ne.s32.totalorder %s165, %s167
      %p171 = scmp.eq.s32.totalorder %s31, 0
      %p172 = por %p170, %p171
      %p173 = scmp.ne.s32.totalorder %s165, %s167
      %p174 = scmp.eq.s32.totalorder %s36, 3
      %p175 = por %p173, %p174
      %p176 = scmp.ne.s32.totalorder %s167, %s168
      %p177 = scmp.eq.s32.totalorder %s36, 0
      %p178 = por %p176, %p177
      %p179 = scmp.ne.s32.totalorder %s167, %s168
      %p180 = scmp.eq.s32.totalorder %s37, 3
      %p181 = por %p179, %p180
      %p183 = scmp.ne.s32.totalorder %s168, %s182
      %p184 = scmp.eq.s32.totalorder %s37, 0
      %p185 = por %p183, %p184
      %s187 = sadd.s32 %s186, 1
      %p190 = scmp.eq.s32.totalorder %s31, 3
      %p191 = scmp.ne.s32.totalorder %s186, %s188
      %p192 = scmp.eq.s32.totalorder %s31, 0
      %p193 = por %p191, %p192
      %p194 = scmp.ne.s32.totalorder %s186, %s188
      %p195 = scmp.eq.s32.totalorder %s36, 3
      %p196 = por %p194, %p195
      %p197 = scmp.ne.s32.totalorder %s188, %s189
      %p198 = scmp.eq.s32.totalorder %s36, 0
      %p199 = por %p197, %p198
      %p200 = scmp.ne.s32.totalorder %s188, %s189
      %p201 = scmp.eq.s32.totalorder %s37, 3
      %p202 = por %p200, %p201
      %p204 = scmp.ne.s32.totalorder %s189, %s203
      %p205 = scmp.eq.s32.totalorder %s37, 0
      %p206 = por %p204, %p205
      %s207 = ssub.s32 %s31, %s38
      %p208 = scmp.eq.s32.totalorder %s207, 0
      %s210 = sadd.s32 %s209, 1
      %s211 = scalar_select %p208, %s209, %s210
      %p214 = pneg %p208
      %p215 = scmp.eq.s32.totalorder %s31, 3
      %p216 = por %p214, %p215
      %p217 = scmp.ne.s32.totalorder %s209, %s212
      %p218 = scmp.eq.s32.totalorder %s31, 0
      %p219 = por %p217, %p218
      %p220 = scmp.ne.s32.totalorder %s209, %s212
      %p221 = scmp.eq.s32.totalorder %s36, 3
      %p222 = por %p220, %p221
      %p223 = scmp.ne.s32.totalorder %s212, %s213
      %p224 = scmp.eq.s32.totalorder %s36, 0
      %p225 = por %p223, %p224
      %p226 = scmp.ne.s32.totalorder %s212, %s213
      %p227 = scmp.eq.s32.totalorder %s37, 3
      %p228 = por %p226, %p227
      %p230 = scmp.ne.s32.totalorder %s213, %s229
      %p231 = scmp.eq.s32.totalorder %s37, 0
      %p232 = por %p230, %p231
      %s233 = ssub.s32 %s31, %s38
      %p234 = scmp.eq.s32.totalorder %s233, 0
      %s236 = sadd.s32 %s235, 1
      %s237 = scalar_select %p234, %s235, %s236
      %p240 = pneg %p234
      %p241 = scmp.eq.s32.totalorder %s31, 3
      %p242 = por %p240, %p241
      %p243 = scmp.ne.s32.totalorder %s235, %s238
      %p244 = scmp.eq.s32.totalorder %s31, 0
      %p245 = por %p243, %p244
      %p246 = scmp.ne.s32.totalorder %s235, %s238
      %p247 = scmp.eq.s32.totalorder %s36, 3
      %p248 = por %p246, %p247
      %p249 = scmp.ne.s32.totalorder %s238, %s239
      %p250 = scmp.eq.s32.totalorder %s36, 0
      %p251 = por %p249, %p250
      %p252 = scmp.ne.s32.totalorder %s238, %s239
      %p253 = scmp.eq.s32.totalorder %s37, 3
      %p254 = por %p252, %p253
      %p256 = scmp.ne.s32.totalorder %s239, %s255
      %p257 = scmp.eq.s32.totalorder %s37, 0
      %p258 = por %p256, %p257
      %s259 = ssub.s32 %s31, %s38
      %p260 = scmp.eq.s32.totalorder %s259, 0
      %s262 = sadd.s32 %s261, 1
      %s263 = scalar_select %p260, %s261, %s262
      %p266 = pneg %p260
      %p267 = scmp.eq.s32.totalorder %s31, 3
      %p268 = por %p266, %p267
      %p269 = scmp.ne.s32.totalorder %s261, %s264
      %p270 = scmp.eq.s32.totalorder %s31, 0
      %p271 = por %p269, %p270
      %p272 = scmp.ne.s32.totalorder %s261, %s264
      %p273 = scmp.eq.s32.totalorder %s36, 3
      %p274 = por %p272, %p273
      %p275 = scmp.ne.s32.totalorder %s264, %s265
      %p276 = scmp.eq.s32.totalorder %s36, 0
      %p277 = por %p275, %p276
      %p278 = scmp.ne.s32.totalorder %s264, %s265
      %p279 = scmp.eq.s32.totalorder %s37, 3
      %p280 = por %p278, %p279
      %p282 = scmp.ne.s32.totalorder %s265, %s281
      %p283 = scmp.eq.s32.totalorder %s37, 0
      %p284 = por %p282, %p283
      %s285 = ssub.s32 %s31, %s38
      %p286 = scmp.eq.s32.totalorder %s285, 0
      %s288 = sadd.s32 %s287, 1
      %s289 = scalar_select %p286, %s287, %s288
      %p292 = pneg %p286
      %p293 = scmp.eq.s32.totalorder %s31, 3
      %p294 = por %p292, %p293
      %p295 = scmp.ne.s32.totalorder %s287, %s290
      %p296 = scmp.eq.s32.totalorder %s31, 0
      %p297 = por %p295, %p296
      %p298 = scmp.ne.s32.totalorder %s287, %s290
      %p299 = scmp.eq.s32.totalorder %s36, 3
      %p300 = por %p298, %p299
      %p301 = scmp.ne.s32.totalorder %s290, %s291
      %p302 = scmp.eq.s32.totalorder %s36, 0
      %p303 = por %p301, %p302
      %p304 = scmp.ne.s32.totalorder %s290, %s291
      %p305 = scmp.eq.s32.totalorder %s37, 3
      %p306 = por %p304, %p305
      %p308 = scmp.ne.s32.totalorder %s291, %s307
      %p309 = scmp.eq.s32.totalorder %s37, 0
      %p310 = por %p308, %p309
      %s311 = ssub.s32 %s31, %s38
      %p312 = scmp.eq.s32.totalorder %s311, 0
      %s314 = sadd.s32 %s313, 1
      %s315 = scalar_select %p312, %s313, %s314
      %p318 = pneg %p312
      %p319 = scmp.eq.s32.totalorder %s31, 3
      %p320 = por %p318, %p319
      %p321 = scmp.ne.s32.totalorder %s313, %s316
      %p322 = scmp.eq.s32.totalorder %s31, 0
      %p323 = por %p321, %p322
      %p324 = scmp.ne.s32.totalorder %s313, %s316
      %p325 = scmp.eq.s32.totalorder %s36, 3
      %p326 = por %p324, %p325
      %p327 = scmp.ne.s32.totalorder %s316, %s317
      %p328 = scmp.eq.s32.totalorder %s36, 0
      %p329 = por %p327, %p328
      %p330 = scmp.ne.s32.totalorder %s316, %s317
      %p331 = scmp.eq.s32.totalorder %s37, 3
      %p332 = por %p330, %p331
      %p334 = scmp.ne.s32.totalorder %s317, %s333
      %p335 = scmp.eq.s32.totalorder %s37, 0
      %p336 = por %p334, %p335
      %s337 = ssub.s32 %s31, %s38
      %p338 = scmp.eq.s32.totalorder %s337, 0
      %s340 = sadd.s32 %s339, 1
      %s341 = scalar_select %p338, %s339, %s340
      %p344 = pneg %p338
      %p345 = scmp.eq.s32.totalorder %s31, 3
      %p346 = por %p344, %p345
      %p347 = scmp.ne.s32.totalorder %s339, %s342
      %p348 = scmp.eq.s32.totalorder %s31, 0
      %p349 = por %p347, %p348
      %p350 = scmp.ne.s32.totalorder %s339, %s342
      %p351 = scmp.eq.s32.totalorder %s36, 3
      %p352 = por %p350, %p351
      %p353 = scmp.ne.s32.totalorder %s342, %s343
      %p354 = scmp.eq.s32.totalorder %s36, 0
      %p355 = por %p353, %p354
      %p356 = scmp.ne.s32.totalorder %s342, %s343
      %p357 = scmp.eq.s32.totalorder %s37, 3
      %p358 = por %p356, %p357
      %p360 = scmp.ne.s32.totalorder %s343, %s359
      %p361 = scmp.eq.s32.totalorder %s37, 0
      %p362 = por %p360, %p361
      %s363 = ssub.s32 %s31, %s38
      %p364 = scmp.eq.s32.totalorder %s363, 0
      %s366 = sadd.s32 %s365, 1
      %s367 = scalar_select %p364, %s365, %s366
      %p370 = pneg %p364
      %p371 = scmp.eq.s32.totalorder %s31, 3
      %p372 = por %p370, %p371
      %p373 = scmp.ne.s32.totalorder %s365, %s368
      %p374 = scmp.eq.s32.totalorder %s31, 0
      %p375 = por %p373, %p374
      %p376 = scmp.ne.s32.totalorder %s365, %s368
      %p377 = scmp.eq.s32.totalorder %s36, 3
      %p378 = por %p376, %p377
      %p379 = scmp.ne.s32.totalorder %s368, %s369
      %p380 = scmp.eq.s32.totalorder %s36, 0
      %p381 = por %p379, %p380
      %p382 = scmp.ne.s32.totalorder %s368, %s369
      %p383 = scmp.eq.s32.totalorder %s37, 3
      %p384 = por %p382, %p383
      %p386 = scmp.ne.s32.totalorder %s369, %s385
      %p387 = scmp.eq.s32.totalorder %s37, 0
      %p388 = por %p386, %p387
      %s389 = ssub.s32 %s31, %s38
      %p390 = scmp.eq.s32.totalorder %s389, 0
      %s392 = sadd.s32 %s391, 1
      %s393 = scalar_select %p390, %s391, %s392
      %p396 = pneg %p390
      %p397 = scmp.eq.s32.totalorder %s31, 3
      %p398 = por %p396, %p397
      %p399 = scmp.ne.s32.totalorder %s391, %s394
      %p400 = scmp.eq.s32.totalorder %s31, 0
      %p401 = por %p399, %p400
      %p402 = scmp.ne.s32.totalorder %s391, %s394
      %p403 = scmp.eq.s32.totalorder %s36, 3
      %p404 = por %p402, %p403
      %p405 = scmp.ne.s32.totalorder %s394, %s395
      %p406 = scmp.eq.s32.totalorder %s36, 0
      %p407 = por %p405, %p406
      %p408 = scmp.ne.s32.totalorder %s394, %s395
      %p409 = scmp.eq.s32.totalorder %s37, 3
      %p410 = por %p408, %p409
      %p412 = scmp.ne.s32.totalorder %s395, %s411
      %p413 = scmp.eq.s32.totalorder %s37, 0
      %p414 = por %p412, %p413
      %s415 = ssub.s32 %s31, %s38
      %p416 = scmp.eq.s32.totalorder %s415, 0
      %s418 = sadd.s32 %s417, 1
      %s419 = scalar_select %p416, %s417, %s418
      %p422 = pneg %p416
      %p423 = scmp.eq.s32.totalorder %s31, 3
      %p424 = por %p422, %p423
      %p425 = scmp.ne.s32.totalorder %s417, %s420
      %p426 = scmp.eq.s32.totalorder %s31, 0
      %p427 = por %p425, %p426
      %p428 = scmp.ne.s32.totalorder %s417, %s420
      %p429 = scmp.eq.s32.totalorder %s36, 3
      %p430 = por %p428, %p429
      %p431 = scmp.ne.s32.totalorder %s420, %s421
      %p432 = scmp.eq.s32.totalorder %s36, 0
      %p433 = por %p431, %p432
      %p434 = scmp.ne.s32.totalorder %s420, %s421
      %p435 = scmp.eq.s32.totalorder %s37, 3
      %p436 = por %p434, %p435
      %p438 = scmp.ne.s32.totalorder %s421, %s437
      %p439 = scmp.eq.s32.totalorder %s37, 0
      %p440 = por %p438, %p439
      %s441 = ssub.s32 %s31, %s38
      %p442 = scmp.eq.s32.totalorder %s441, 0
      %s444 = sadd.s32 %s443, 1
      %s445 = scalar_select %p442, %s443, %s444
      %p448 = pneg %p442
      %p449 = scmp.eq.s32.totalorder %s31, 3
      %p450 = por %p448, %p449
      %p451 = scmp.ne.s32.totalorder %s443, %s446
      %p452 = scmp.eq.s32.totalorder %s31, 0
      %p453 = por %p451, %p452
      %p454 = scmp.ne.s32.totalorder %s443, %s446
      %p455 = scmp.eq.s32.totalorder %s36, 3
      %p456 = por %p454, %p455
      %p457 = scmp.ne.s32.totalorder %s446, %s447
      %p458 = scmp.eq.s32.totalorder %s36, 0
      %p459 = por %p457, %p458
      %p460 = scmp.ne.s32.totalorder %s446, %s447
      %p461 = scmp.eq.s32.totalorder %s37, 3
      %p462 = por %p460, %p461
      %p464 = scmp.ne.s32.totalorder %s447, %s463
      %p465 = scmp.eq.s32.totalorder %s37, 0
      %p466 = por %p464, %p465
      %s467 = ssub.s32 %s31, %s38
      %p468 = scmp.eq.s32.totalorder %s467, 0
      %s470 = sadd.s32 %s469, 1
      %s471 = scalar_select %p468, %s469, %s470
      %p474 = pneg %p468
      %p475 = scmp.eq.s32.totalorder %s31, 3
      %p476 = por %p474, %p475
      %p477 = scmp.ne.s32.totalorder %s469, %s472
      %p478 = scmp.eq.s32.totalorder %s31, 0
      %p479 = por %p477, %p478
      %p480 = scmp.ne.s32.totalorder %s469, %s472
      %p481 = scmp.eq.s32.totalorder %s36, 3
      %p482 = por %p480, %p481
      %p483 = scmp.ne.s32.totalorder %s472, %s473
      %p484 = scmp.eq.s32.totalorder %s36, 0
      %p485 = por %p483, %p484
      %p486 = scmp.ne.s32.totalorder %s472, %s473
      %p487 = scmp.eq.s32.totalorder %s37, 3
      %p488 = por %p486, %p487
      %p490 = scmp.ne.s32.totalorder %s473, %s489
      %p491 = scmp.eq.s32.totalorder %s37, 0
      %p492 = por %p490, %p491
      %s493 = ssub.s32 %s31, %s38
      %p494 = scmp.eq.s32.totalorder %s493, 0
      %s496 = sadd.s32 %s495, 1
      %s497 = scalar_select %p494, %s495, %s496
      %p500 = pneg %p494
      %p501 = scmp.eq.s32.totalorder %s31, 3
      %p502 = por %p500, %p501
      %p503 = scmp.ne.s32.totalorder %s495, %s498
      %p504 = scmp.eq.s32.totalorder %s31, 0
      %p505 = por %p503, %p504
      %p506 = scmp.ne.s32.totalorder %s495, %s498
      %p507 = scmp.eq.s32.totalorder %s36, 3
      %p508 = por %p506, %p507
      %p509 = scmp.ne.s32.totalorder %s498, %s499
      %p510 = scmp.eq.s32.totalorder %s36, 0
      %p511 = por %p509, %p510
      %p512 = scmp.ne.s32.totalorder %s498, %s499
      %p513 = scmp.eq.s32.totalorder %s37, 3
      %p514 = por %p512, %p513
      %p516 = scmp.ne.s32.totalorder %s499, %s515
      %p517 = scmp.eq.s32.totalorder %s37, 0
      %p518 = por %p516, %p517
      %s519 = ssub.s32 %s31, %s38
      %p520 = scmp.eq.s32.totalorder %s519, 0
      %s522 = sadd.s32 %s521, 1
      %s523 = scalar_select %p520, %s521, %s522
      %p526 = pneg %p520
      %p527 = scmp.eq.s32.totalorder %s31, 3
      %p528 = por %p526, %p527
      %p529 = scmp.ne.s32.totalorder %s521, %s524
      %p530 = scmp.eq.s32.totalorder %s31, 0
      %p531 = por %p529, %p530
      %p532 = scmp.ne.s32.totalorder %s521, %s524
      %p533 = scmp.eq.s32.totalorder %s36, 3
      %p534 = por %p532, %p533
      %p535 = scmp.ne.s32.totalorder %s524, %s525
      %p536 = scmp.eq.s32.totalorder %s36, 0
      %p537 = por %p535, %p536
      %p538 = scmp.ne.s32.totalorder %s524, %s525
      %p539 = scmp.eq.s32.totalorder %s37, 3
      %p540 = por %p538, %p539
      %p542 = scmp.ne.s32.totalorder %s525, %s541
      %p543 = scmp.eq.s32.totalorder %s37, 0
      %p544 = por %p542, %p543
      %s545 = ssub.s32 %s31, %s38
      %p546 = scmp.eq.s32.totalorder %s545, 0
      %s548 = sadd.s32 %s547, 1
      %s549 = scalar_select %p546, %s547, %s548
      %p552 = pneg %p546
      %p553 = scmp.eq.s32.totalorder %s31, 3
      %p554 = por %p552, %p553
      %p555 = scmp.ne.s32.totalorder %s547, %s550
      %p556 = scmp.eq.s32.totalorder %s31, 0
      %p557 = por %p555, %p556
      %p558 = scmp.ne.s32.totalorder %s547, %s550
      %p559 = scmp.eq.s32.totalorder %s36, 3
      %p560 = por %p558, %p559
      %p561 = scmp.ne.s32.totalorder %s550, %s551
      %p562 = scmp.eq.s32.totalorder %s36, 0
      %p563 = por %p561, %p562
      %p564 = scmp.ne.s32.totalorder %s550, %s551
      %p565 = scmp.eq.s32.totalorder %s37, 3
      %p566 = por %p564, %p565
      %p568 = scmp.ne.s32.totalorder %s551, %s567
      %p569 = scmp.eq.s32.totalorder %s37, 0
      %p570 = por %p568, %p569
      %s571 = ssub.s32 %s31, %s38
      %p572 = scmp.eq.s32.totalorder %s571, 0
      %s574 = sadd.s32 %s573, 1
      %s575 = scalar_select %p572, %s573, %s574
      %p578 = pneg %p572
      %p579 = scmp.eq.s32.totalorder %s31, 3
      %p580 = por %p578, %p579
      %p581 = scmp.ne.s32.totalorder %s573, %s576
      %p582 = scmp.eq.s32.totalorder %s31, 0
      %p583 = por %p581, %p582
      %p584 = scmp.ne.s32.totalorder %s573, %s576
      %p585 = scmp.eq.s32.totalorder %s36, 3
      %p586 = por %p584, %p585
      %p587 = scmp.ne.s32.totalorder %s576, %s577
      %p588 = scmp.eq.s32.totalorder %s36, 0
      %p589 = por %p587, %p588
      %p590 = scmp.ne.s32.totalorder %s576, %s577
      %p591 = scmp.eq.s32.totalorder %s37, 3
      %p592 = por %p590, %p591
      %p594 = scmp.ne.s32.totalorder %s577, %s593
      %p595 = scmp.eq.s32.totalorder %s37, 0
      %p596 = por %p594, %p595
      %s597 = ssub.s32 %s31, %s38
      %p598 = scmp.eq.s32.totalorder %s597, 0
      %s600 = sadd.s32 %s599, 1
      %s601 = scalar_select %p598, %s599, %s600
      %p604 = pneg %p598
      %p605 = scmp.eq.s32.totalorder %s31, 3
      %p606 = por %p604, %p605
      %p607 = scmp.ne.s32.totalorder %s599, %s602
      %p608 = scmp.eq.s32.totalorder %s31, 0
      %p609 = por %p607, %p608
      %p610 = scmp.ne.s32.totalorder %s599, %s602
      %p611 = scmp.eq.s32.totalorder %s36, 3
      %p612 = por %p610, %p611
      %p613 = scmp.ne.s32.totalorder %s602, %s603
      %p614 = scmp.eq.s32.totalorder %s36, 0
      %p615 = por %p613, %p614
      %p616 = scmp.ne.s32.totalorder %s602, %s603
      %p617 = scmp.eq.s32.totalorder %s37, 3
      %p618 = por %p616, %p617
      %p620 = scmp.ne.s32.totalorder %s603, %s619
      %p621 = scmp.eq.s32.totalorder %s37, 0
      %p622 = por %p620, %p621
      %s624 = sadd.s32 %s623, 1
      %p627 = scmp.eq.s32.totalorder %s31, 3
      %p628 = scmp.ne.s32.totalorder %s623, %s625
      %p629 = scmp.eq.s32.totalorder %s31, 0
      %p630 = por %p628, %p629
      %p631 = scmp.ne.s32.totalorder %s623, %s625
      %p632 = scmp.eq.s32.totalorder %s36, 3
      %p633 = por %p631, %p632
      %p634 = scmp.ne.s32.totalorder %s625, %s626
      %p635 = scmp.eq.s32.totalorder %s36, 0
      %p636 = por %p634, %p635
      %p637 = scmp.ne.s32.totalorder %s625, %s626
      %p638 = scmp.eq.s32.totalorder %s37, 3
      %p639 = por %p637, %p638
      %p641 = scmp.ne.s32.totalorder %s626, %s640
      %p642 = scmp.eq.s32.totalorder %s37, 0
      %p643 = por %p641, %p642
      %p644 = scmp.le.s32.totalorder 1, %s31
      %p645 = scmp.lt.s32.totalorder %s31, 5
      %p646 = pnand %p644, %p645
      %p647 = pneg %p646
      // Predicated region
      $region9: #{vit_forward.1} parent=5 // pred_check
        _
      $region10: #{vit_forward.1} parent=5 // pred_check_branch
        %649 = sbr.rel (%p646) target = $region12
      $region11: #{vit_forward.1} parent=5 // pred_region
        %s650 = ssub.s32 %s31, 1
        // Predicated region
        $region13: #{vit_forward.1} parent=11 // pred_check
          %p651 = pneg %p52
        $region14: #{vit_forward.1} parent=11 // pred_check_branch
          %653 = sbr.rel (%p651) target = $region16
        $region15: #{vit_forward.1} parent=11 // pred_region
          _
        $region16: #{vit_forward.1} parent=11 // pred_fallthru
          _
        // Predicated region
        $region17: #{vit_forward.1} parent=11 // pred_check
          %p654 = pneg %p73
        $region18: #{vit_forward.1} parent=11 // pred_check_branch
          %656 = sbr.rel (%p654) target = $region20
        $region19: #{vit_forward.1} parent=11 // pred_region
          _
        $region20: #{vit_forward.1} parent=11 // pred_fallthru
          _
        // Predicated region
        $region21: #{vit_forward.1} parent=11 // pred_check
          %p657 = pneg %p94
        $region22: #{vit_forward.1} parent=11 // pred_check_branch
          %659 = sbr.rel (%p657) target = $region24
        $region23: #{vit_forward.1} parent=11 // pred_region
          _
        $region24: #{vit_forward.1} parent=11 // pred_fallthru
          _
        // Predicated region
        $region25: #{vit_forward.1} parent=11 // pred_check
          %p660 = pneg %p115
        $region26: #{vit_forward.1} parent=11 // pred_check_branch
          %662 = sbr.rel (%p660) target = $region28
        $region27: #{vit_forward.1} parent=11 // pred_region
          _
        $region28: #{vit_forward.1} parent=11 // pred_fallthru
          _
        // Predicated region
        $region29: #{vit_forward.1} parent=11 // pred_check
          %p663 = pneg %p136
        $region30: #{vit_forward.1} parent=11 // pred_check_branch
          %665 = sbr.rel (%p663) target = $region32
        $region31: #{vit_forward.1} parent=11 // pred_region
          _
        $region32: #{vit_forward.1} parent=11 // pred_fallthru
          _
        // Predicated region
        $region33: #{vit_forward.1} parent=11 // pred_check
          %p666 = pneg %p157
        $region34: #{vit_forward.1} parent=11 // pred_check_branch
          %668 = sbr.rel (%p666) target = $region36
        $region35: #{vit_forward.1} parent=11 // pred_region
          _
        $region36: #{vit_forward.1} parent=11 // pred_fallthru
          _
        // Predicated region
        $region37: #{vit_forward.1} parent=11 // pred_check
          %p669 = pneg %p178
        $region38: #{vit_forward.1} parent=11 // pred_check_branch
          %671 = sbr.rel (%p669) target = $region40
        $region39: #{vit_forward.1} parent=11 // pred_region
          _
        $region40: #{vit_forward.1} parent=11 // pred_fallthru
          _
        // Predicated region
        $region41: #{vit_forward.1} parent=11 // pred_check
          %p672 = pneg %p199
        $region42: #{vit_forward.1} parent=11 // pred_check_branch
          %674 = sbr.rel (%p672) target = $region44
        $region43: #{vit_forward.1} parent=11 // pred_region
          _
        $region44: #{vit_forward.1} parent=11 // pred_fallthru
          _
      $region12: #{vit_forward.1} parent=5 // pred_fallthru
        _
      %p675 = scmp.lt.s32.totalorder %s31, 4
      // Predicated region
      $region45: #{vit_forward.1} parent=5 // pred_check
        %p676 = pneg %p675
      $region46: #{vit_forward.1} parent=5 // pred_check_branch
        %678 = sbr.rel (%p676) target = $region48
      $region47: #{vit_forward.1} parent=5 // pred_region
        // Predicated region
        $region49: #{vit_forward.1} parent=47 // pred_check
          %p679 = pneg %p219
        $region50: #{vit_forward.1} parent=47 // pred_check_branch
          %681 = sbr.rel (%p679) target = $region52
        $region51: #{vit_forward.1} parent=47 // pred_region
          %p682 = scmp.lt.s32.totalorder %s31, 3
          %s683 = scalar_select %p682, %s31, 3
          %s684 = scalar_lea.vmem %s8, %s683
        $region52: #{vit_forward.1} parent=47 // pred_fallthru
          _
        // Predicated region
        $region53: #{vit_forward.1} parent=47 // pred_check
          %p685 = pneg %p245
        $region54: #{vit_forward.1} parent=47 // pred_check_branch
          %687 = sbr.rel (%p685) target = $region56
        $region55: #{vit_forward.1} parent=47 // pred_region
          %p688 = scmp.lt.s32.totalorder %s31, 3
          %s689 = scalar_select %p688, %s31, 3
          %s690 = scalar_lea.vmem %s9, %s689
        $region56: #{vit_forward.1} parent=47 // pred_fallthru
          _
        // Predicated region
        $region57: #{vit_forward.1} parent=47 // pred_check
          %p691 = pneg %p271
        $region58: #{vit_forward.1} parent=47 // pred_check_branch
          %693 = sbr.rel (%p691) target = $region60
        $region59: #{vit_forward.1} parent=47 // pred_region
          %p694 = scmp.lt.s32.totalorder %s31, 3
          %s695 = scalar_select %p694, %s31, 3
          %s696 = smul.addr %s695, 32
          %s697 = smul.addr %s696, 8
          %s698 = scalar_lea.vmem %s10, %s697
        $region60: #{vit_forward.1} parent=47 // pred_fallthru
          _
        // Predicated region
        $region61: #{vit_forward.1} parent=47 // pred_check
          %p699 = pneg %p297
        $region62: #{vit_forward.1} parent=47 // pred_check_branch
          %701 = sbr.rel (%p699) target = $region64
        $region63: #{vit_forward.1} parent=47 // pred_region
          %p702 = scmp.lt.s32.totalorder %s31, 3
          %s703 = scalar_select %p702, %s31, 3
          %s704 = smul.addr %s703, 32
          %s705 = smul.addr %s704, 8
          %s706 = scalar_lea.vmem %s11, %s705
        $region64: #{vit_forward.1} parent=47 // pred_fallthru
          _
        // Predicated region
        $region65: #{vit_forward.1} parent=47 // pred_check
          %p707 = pneg %p323
        $region66: #{vit_forward.1} parent=47 // pred_check_branch
          %709 = sbr.rel (%p707) target = $region68
        $region67: #{vit_forward.1} parent=47 // pred_region
          %p710 = scmp.lt.s32.totalorder %s31, 3
          %s711 = scalar_select %p710, %s31, 3
          %s712 = smul.addr %s711, 32
          %s713 = smul.addr %s712, 8
          %s714 = scalar_lea.vmem %s12, %s713
        $region68: #{vit_forward.1} parent=47 // pred_fallthru
          _
        // Predicated region
        $region69: #{vit_forward.1} parent=47 // pred_check
          %p715 = pneg %p349
        $region70: #{vit_forward.1} parent=47 // pred_check_branch
          %717 = sbr.rel (%p715) target = $region72
        $region71: #{vit_forward.1} parent=47 // pred_region
          %p718 = scmp.lt.s32.totalorder %s31, 3
          %s719 = scalar_select %p718, %s31, 3
          %s720 = smul.addr %s719, 4
          %s721 = scalar_lea.vmem %s13, %s720
        $region72: #{vit_forward.1} parent=47 // pred_fallthru
          _
        // Predicated region
        $region73: #{vit_forward.1} parent=47 // pred_check
          %p722 = pneg %p375
        $region74: #{vit_forward.1} parent=47 // pred_check_branch
          %724 = sbr.rel (%p722) target = $region76
        $region75: #{vit_forward.1} parent=47 // pred_region
          %p725 = scmp.lt.s32.totalorder %s31, 3
          %s726 = scalar_select %p725, %s31, 3
          %s727 = smul.addr %s726, 4
          %s728 = scalar_lea.vmem %s14, %s727
        $region76: #{vit_forward.1} parent=47 // pred_fallthru
          _
        // Predicated region
        $region77: #{vit_forward.1} parent=47 // pred_check
          %p729 = pneg %p401
        $region78: #{vit_forward.1} parent=47 // pred_check_branch
          %731 = sbr.rel (%p729) target = $region80
        $region79: #{vit_forward.1} parent=47 // pred_region
          %p732 = scmp.lt.s32.totalorder %s31, 3
          %s733 = scalar_select %p732, %s31, 3
          %s734 = smul.addr %s733, 4
          %s735 = scalar_lea.vmem %s15, %s734
        $region80: #{vit_forward.1} parent=47 // pred_fallthru
          _
        // Predicated region
        $region81: #{vit_forward.1} parent=47 // pred_check
          %p736 = pneg %p427
        $region82: #{vit_forward.1} parent=47 // pred_check_branch
          %738 = sbr.rel (%p736) target = $region84
        $region83: #{vit_forward.1} parent=47 // pred_region
          %p739 = scmp.lt.s32.totalorder %s31, 3
          %s740 = scalar_select %p739, %s31, 3
          %s741 = smul.addr %s740, 8
          %s742 = smul.addr %s741, 8
          %s743 = scalar_lea.vmem %s16, %s742
        $region84: #{vit_forward.1} parent=47 // pred_fallthru
          _
        // Predicated region
        $region85: #{vit_forward.1} parent=47 // pred_check
          %p744 = pneg %p453
        $region86: #{vit_forward.1} parent=47 // pred_check_branch
          %746 = sbr.rel (%p744) target = $region88
        $region87: #{vit_forward.1} parent=47 // pred_region
          %p747 = scmp.lt.s32.totalorder %s31, 3
          %s748 = scalar_select %p747, %s31, 3
          %s749 = scalar_lea.vmem %s17, %s748
        $region88: #{vit_forward.1} parent=47 // pred_fallthru
          _
        // Predicated region
        $region89: #{vit_forward.1} parent=47 // pred_check
          %p750 = pneg %p479
        $region90: #{vit_forward.1} parent=47 // pred_check_branch
          %752 = sbr.rel (%p750) target = $region92
        $region91: #{vit_forward.1} parent=47 // pred_region
          %p753 = scmp.lt.s32.totalorder %s31, 3
          %s754 = scalar_select %p753, %s31, 3
          %s755 = scalar_lea.vmem %s18, %s754
        $region92: #{vit_forward.1} parent=47 // pred_fallthru
          _
        // Predicated region
        $region93: #{vit_forward.1} parent=47 // pred_check
          %p756 = pneg %p505
        $region94: #{vit_forward.1} parent=47 // pred_check_branch
          %758 = sbr.rel (%p756) target = $region96
        $region95: #{vit_forward.1} parent=47 // pred_region
          %p759 = scmp.lt.s32.totalorder %s31, 3
          %s760 = scalar_select %p759, %s31, 3
          %s761 = scalar_lea.vmem %s19, %s760
        $region96: #{vit_forward.1} parent=47 // pred_fallthru
          _
        // Predicated region
        $region97: #{vit_forward.1} parent=47 // pred_check
          %p762 = pneg %p531
        $region98: #{vit_forward.1} parent=47 // pred_check_branch
          %764 = sbr.rel (%p762) target = $region100
        $region99: #{vit_forward.1} parent=47 // pred_region
          %p765 = scmp.lt.s32.totalorder %s31, 3
          %s766 = scalar_select %p765, %s31, 3
          %s767 = smul.addr %s766, 16
          %s768 = smul.addr %s767, 8
          %s769 = scalar_lea.vmem %s20, %s768
        $region100: #{vit_forward.1} parent=47 // pred_fallthru
          _
        // Predicated region
        $region101: #{vit_forward.1} parent=47 // pred_check
          %p770 = pneg %p557
        $region102: #{vit_forward.1} parent=47 // pred_check_branch
          %772 = sbr.rel (%p770) target = $region104
        $region103: #{vit_forward.1} parent=47 // pred_region
          %p773 = scmp.lt.s32.totalorder %s31, 3
          %s774 = scalar_select %p773, %s31, 3
          %s775 = smul.addr %s774, 2
          %s776 = scalar_lea.vmem %s21, %s775
        $region104: #{vit_forward.1} parent=47 // pred_fallthru
          _
        // Predicated region
        $region105: #{vit_forward.1} parent=47 // pred_check
          %p777 = pneg %p583
        $region106: #{vit_forward.1} parent=47 // pred_check_branch
          %779 = sbr.rel (%p777) target = $region108
        $region107: #{vit_forward.1} parent=47 // pred_region
          %p780 = scmp.lt.s32.totalorder %s31, 3
          %s781 = scalar_select %p780, %s31, 3
          %s782 = smul.addr %s781, 32
          %s783 = smul.addr %s782, 8
          %s784 = scalar_lea.vmem %s22, %s783
        $region108: #{vit_forward.1} parent=47 // pred_fallthru
          _
        // Predicated region
        $region109: #{vit_forward.1} parent=47 // pred_check
          %p785 = pneg %p609
        $region110: #{vit_forward.1} parent=47 // pred_check_branch
          %787 = sbr.rel (%p785) target = $region112
        $region111: #{vit_forward.1} parent=47 // pred_region
          %p788 = scmp.lt.s32.totalorder %s31, 3
          %s789 = scalar_select %p788, %s31, 3
          %s790 = scalar_lea.vmem %s23, %s789
        $region112: #{vit_forward.1} parent=47 // pred_fallthru
          _
      $region48: #{vit_forward.1} parent=5 // pred_fallthru
        _
      %p791 = scmp.le.s32.totalorder 1, %s31
      %p792 = scmp.lt.s32.totalorder %s31, 5
      %p793 = pnand %p791, %p792
      %p794 = pneg %p793
      // Predicated region
      $region113: #{vit_forward.1} parent=5 // pred_check
        _
      $region114: #{vit_forward.1} parent=5 // pred_check_branch
        %796 = sbr.rel (%p793) target = $region116
      $region115: #{vit_forward.1} parent=5 // pred_region
        %s797 = ssub.s32 %s31, 1
        %p798 = pneg %p52
        %p799 = pneg %p49
        %p800 = pneg %p73
        %p801 = pneg %p70
        %p802 = pneg %p94
        %p803 = pneg %p91
        %p804 = pneg %p115
        %p805 = pneg %p112
        %p806 = pneg %p136
        %p807 = pneg %p133
        %p808 = pneg %p157
        %p809 = pneg %p154
        %p810 = pneg %p178
        %p811 = pneg %p175
        %p812 = pneg %p199
        %p813 = pneg %p196
        %p814 = scmp.lt.s32.totalorder %s36, 3
        %s815 = scalar_select %p814, %s36, 3
        %s816 = scalar_lea.vmem %s8, %s815
        %p817 = pneg %p225
        %p818 = pneg %p222
        %p819 = scmp.lt.s32.totalorder %s36, 3
        %s820 = scalar_select %p819, %s36, 3
        %s821 = scalar_lea.vmem %s9, %s820
        %p822 = pneg %p251
        %p823 = pneg %p248
        %p824 = scmp.lt.s32.totalorder %s36, 3
        %s825 = scalar_select %p824, %s36, 3
        %s826 = smul.addr %s825, 32
        %s827 = smul.addr %s826, 8
        %s828 = scalar_lea.vmem %s10, %s827
        %p829 = pneg %p277
        %p830 = pneg %p274
        %p831 = scmp.lt.s32.totalorder %s36, 3
        %s832 = scalar_select %p831, %s36, 3
        %s833 = smul.addr %s832, 32
        %s834 = smul.addr %s833, 8
        %s835 = scalar_lea.vmem %s11, %s834
        %p836 = pneg %p303
        %p837 = pneg %p300
        %p838 = scmp.lt.s32.totalorder %s36, 3
        %s839 = scalar_select %p838, %s36, 3
        %s840 = smul.addr %s839, 32
        %s841 = smul.addr %s840, 8
        %s842 = scalar_lea.vmem %s12, %s841
        %p843 = pneg %p329
        %p844 = pneg %p326
        %p845 = scmp.lt.s32.totalorder %s36, 3
        %s846 = scalar_select %p845, %s36, 3
        %s847 = smul.addr %s846, 4
        %s848 = scalar_lea.vmem %s13, %s847
        %p849 = pneg %p355
        %p850 = pneg %p352
        %p851 = scmp.lt.s32.totalorder %s36, 3
        %s852 = scalar_select %p851, %s36, 3
        %s853 = smul.addr %s852, 4
        %s854 = scalar_lea.vmem %s14, %s853
        %p855 = pneg %p381
        %p856 = pneg %p378
        %p857 = scmp.lt.s32.totalorder %s36, 3
        %s858 = scalar_select %p857, %s36, 3
        %s859 = smul.addr %s858, 4
        %s860 = scalar_lea.vmem %s15, %s859
        %p861 = pneg %p407
        %p862 = pneg %p404
        %p863 = scmp.lt.s32.totalorder %s36, 3
        %s864 = scalar_select %p863, %s36, 3
        %s865 = smul.addr %s864, 8
        %s866 = smul.addr %s865, 8
        %s867 = scalar_lea.vmem %s16, %s866
        %p868 = pneg %p433
        %p869 = pneg %p430
        %p870 = scmp.lt.s32.totalorder %s36, 3
        %s871 = scalar_select %p870, %s36, 3
        %s872 = scalar_lea.vmem %s17, %s871
        %p873 = pneg %p459
        %p874 = pneg %p456
        %p875 = scmp.lt.s32.totalorder %s36, 3
        %s876 = scalar_select %p875, %s36, 3
        %s877 = scalar_lea.vmem %s18, %s876
        %p878 = pneg %p485
        %p879 = pneg %p482
        %p880 = scmp.lt.s32.totalorder %s36, 3
        %s881 = scalar_select %p880, %s36, 3
        %s882 = scalar_lea.vmem %s19, %s881
        %p883 = pneg %p511
        %p884 = pneg %p508
        %p885 = scmp.lt.s32.totalorder %s36, 3
        %s886 = scalar_select %p885, %s36, 3
        %s887 = smul.addr %s886, 16
        %s888 = smul.addr %s887, 8
        %s889 = scalar_lea.vmem %s20, %s888
        %p890 = pneg %p537
        %p891 = pneg %p534
        %p892 = scmp.lt.s32.totalorder %s36, 3
        %s893 = scalar_select %p892, %s36, 3
        %s894 = smul.addr %s893, 2
        %s895 = scalar_lea.vmem %s21, %s894
        %p896 = pneg %p563
        %p897 = pneg %p560
        %p898 = scmp.lt.s32.totalorder %s36, 3
        %s899 = scalar_select %p898, %s36, 3
        %s900 = smul.addr %s899, 32
        %s901 = smul.addr %s900, 8
        %s902 = scalar_lea.vmem %s22, %s901
        %p903 = pneg %p589
        %p904 = pneg %p586
        %p905 = scmp.lt.s32.totalorder %s36, 3
        %s906 = scalar_select %p905, %s36, 3
        %s907 = scalar_lea.vmem %s23, %s906
        %p908 = pneg %p615
        %p909 = pneg %p612
        %p910 = pneg %p636
        %p911 = pneg %p633
        %p912 = scmp.lt.s32.totalorder %s36, 3
        %s913 = scalar_select %p912, %s36, 3
        %s914 = scalar_lea.vmem %s8, %s913
        %p915 = scmp.lt.s32.totalorder %s36, 3
        %s916 = scalar_select %p915, %s36, 3
        %s917 = scalar_lea.vmem %s9, %s916
        %p918 = scmp.lt.s32.totalorder %s36, 3
        %s919 = scalar_select %p918, %s36, 3
        %s920 = smul.addr %s919, 32
        %s921 = smul.addr %s920, 8
        %s922 = scalar_lea.vmem %s10, %s921
        %p923 = scmp.lt.s32.totalorder %s36, 3
        %s924 = scalar_select %p923, %s36, 3
        %s925 = smul.addr %s924, 32
        %s926 = smul.addr %s925, 8
        %s927 = scalar_lea.vmem %s11, %s926
        %p928 = scmp.lt.s32.totalorder %s36, 3
        %s929 = scalar_select %p928, %s36, 3
        %s930 = smul.addr %s929, 32
        %s931 = smul.addr %s930, 8
        %s932 = scalar_lea.vmem %s12, %s931
        %p933 = scmp.lt.s32.totalorder %s36, 3
        %s934 = scalar_select %p933, %s36, 3
        %s935 = smul.addr %s934, 4
        %s936 = scalar_lea.vmem %s13, %s935
        %p937 = scmp.lt.s32.totalorder %s36, 3
        %s938 = scalar_select %p937, %s36, 3
        %s939 = smul.addr %s938, 4
        %s940 = scalar_lea.vmem %s14, %s939
        %p941 = scmp.lt.s32.totalorder %s36, 3
        %s942 = scalar_select %p941, %s36, 3
        %s943 = smul.addr %s942, 4
        %s944 = scalar_lea.vmem %s15, %s943
        %p945 = scmp.lt.s32.totalorder %s36, 3
        %s946 = scalar_select %p945, %s36, 3
        %s947 = smul.addr %s946, 8
        %s948 = smul.addr %s947, 8
        %s949 = scalar_lea.vmem %s16, %s948
        %p950 = scmp.lt.s32.totalorder %s36, 3
        %s951 = scalar_select %p950, %s36, 3
        %s952 = scalar_lea.vmem %s17, %s951
        %p953 = scmp.lt.s32.totalorder %s36, 3
        %s954 = scalar_select %p953, %s36, 3
        %s955 = scalar_lea.vmem %s18, %s954
        %p956 = scmp.lt.s32.totalorder %s36, 3
        %s957 = scalar_select %p956, %s36, 3
        %s958 = scalar_lea.vmem %s19, %s957
        %p959 = scmp.lt.s32.totalorder %s36, 3
        %s960 = scalar_select %p959, %s36, 3
        %s961 = smul.addr %s960, 16
        %s962 = smul.addr %s961, 8
        %s963 = scalar_lea.vmem %s20, %s962
        %p964 = scmp.lt.s32.totalorder %s36, 3
        %s965 = scalar_select %p964, %s36, 3
        %s966 = smul.addr %s965, 2
        %s967 = scalar_lea.vmem %s21, %s966
        %p968 = scmp.lt.s32.totalorder %s36, 3
        %s969 = scalar_select %p968, %s36, 3
        %s970 = smul.addr %s969, 32
        %s971 = smul.addr %s970, 8
        %s972 = scalar_lea.vmem %s22, %s971
        %p973 = scmp.lt.s32.totalorder %s36, 3
        %s974 = scalar_select %p973, %s36, 3
        %s975 = scalar_lea.vmem %s23, %s974
        %p976 = scmp.eq.s32.totalorder %s36, 0
        // Predicated region
        $region117: #{vit_forward.1} parent=115 // pred_check
          %p977 = pneg %p976
        $region118: #{vit_forward.1} parent=115 // pred_check_branch
          %979 = sbr.rel (%p977) target = $region120
        $region119: #{vit_forward.1} parent=115 // pred_region
          %v980 = vld [vmem:[%s0] sm:$0xff]
          %v981 = vld [vmem:[%s0 + $0x8] sm:$0xff]
          %v982 = vld [vmem:[%s0 + $0x10] sm:$0xff]
          %v983 = vld [vmem:[%s0 + $0x18] sm:$0xff]
          %v984 = vld [vmem:[%s0 + $0x20] sm:$0xff]
          %v985 = vld [vmem:[%s0 + $0x28] sm:$0xff]
          %v986 = vld [vmem:[%s0 + $0x30] sm:$0xff]
          %v987 = vld [vmem:[%s0 + $0x38] sm:$0xff]
          %v988 = vld [vmem:[%s1] sm:$0xff]
          %v989 = vld [vmem:[%s1 + $0x8] sm:$0xff]
          %v990 = vld [vmem:[%s1 + $0x10] sm:$0xff]
          %v991 = vld [vmem:[%s1 + $0x18] sm:$0xff]
          %v992 = vld [vmem:[%s1 + $0x20] sm:$0xff]
          %v993 = vld [vmem:[%s1 + $0x28] sm:$0xff]
          %v994 = vld [vmem:[%s1 + $0x30] sm:$0xff]
          %v995 = vld [vmem:[%s1 + $0x38] sm:$0xff]
          %v996 = vld [vmem:[%s1 + $0x40] sm:$0xff]
          %v997 = vld [vmem:[%s1 + $0x48] sm:$0xff]
          %v998 = vld [vmem:[%s1 + $0x50] sm:$0xff]
          %v999 = vld [vmem:[%s1 + $0x58] sm:$0xff]
          %v1000 = vld [vmem:[%s1 + $0x60] sm:$0xff]
          %v1001 = vld [vmem:[%s1 + $0x68] sm:$0xff]
          %v1002 = vld [vmem:[%s1 + $0x70] sm:$0xff]
          %v1003 = vld [vmem:[%s1 + $0x78] sm:$0xff]
          %v1004 = vld [vmem:[%s1 + $0x80] sm:$0xff]
          %v1005 = vld [vmem:[%s1 + $0x88] sm:$0xff]
          %v1006 = vld [vmem:[%s1 + $0x90] sm:$0xff]
          %v1007 = vld [vmem:[%s1 + $0x98] sm:$0xff]
          %v1008 = vld [vmem:[%s1 + $0xa0] sm:$0xff]
          %v1009 = vld [vmem:[%s1 + $0xa8] sm:$0xff]
          %v1010 = vld [vmem:[%s1 + $0xb0] sm:$0xff]
          %v1011 = vld [vmem:[%s1 + $0xb8] sm:$0xff]
          %vm1012 = vcmask 523264
          %v1014 = vsel %vm1012, %v981, 0
          %v1017 = vsel %vm1012, %v983, 0
          %v1020 = vsel %vm1012, %v985, 0
          %v1023 = vsel %vm1012, %v987, 0
          %1025 = vmatprep.subr.mxu0 0.0
          %1026 = vmatpush1.msra.mxu0 %v1003
          %1027 = vmatprep.subr.mxu0 0.0
          %1028 = vmatpush1.msra.mxu0 %v1002
          %1029 = vmatprep.subr.mxu0 0.0
          %1030 = vmatpush1.msra.mxu0 %v1001
          %1031 = vmatprep.subr.mxu0 0.0
          %1032 = vmatpush1.msra.mxu0 %v1000
          %1033 = vmatprep.subr.mxu0 0.0
          %1034 = vmatpush1.msra.mxu0 %v999
          %1035 = vmatprep.subr.mxu0 0.0
          %1036 = vmatpush1.msra.mxu0 %v998
          %1037 = vmatprep.subr.mxu0 0.0
          %1038 = vmatpush1.msra.mxu0 %v997
          %1039 = vmatprep.subr.mxu0 0.0
          %1040 = vmatpush1.msra.mxu0 %v996
          %1041 = vmatprep.subr.mxu0 0.0
          %1042 = vmatpush1.msra.mxu0 %v995
          %1043 = vmatprep.subr.mxu0 0.0
          %1044 = vmatpush1.msra.mxu0 %v994
          %1045 = vmatprep.subr.mxu0 0.0
          %1046 = vmatpush1.msra.mxu0 %v993
          %1047 = vmatprep.subr.mxu0 0.0
          %1048 = vmatpush1.msra.mxu0 %v992
          %1049 = vmatprep.subr.mxu0 0.0
          %1050 = vmatpush1.msra.mxu0 %v991
          %1051 = vmatprep.subr.mxu0 0.0
          %1052 = vmatpush1.msra.mxu0 %v990
          %1053 = vmatprep.subr.mxu0 0.0
          %1054 = vmatpush1.msra.mxu0 %v989
          %1055 = vmatprep.subr.mxu0 0.0
          %1056 = vmatpush1.msra.mxu0 %v988
          %1057 = vmatprep.subr.mxu0 0.0
          %1058 = vmatpush2.msra.mxu0 0.0
          %1059 = vmatprep.subr.mxu0 0.0
          %1060 = vmatpush2.msra.mxu0 0.0
          %1061 = vmatprep.subr.mxu0 0.0
          %1062 = vmatpush2.msra.mxu0 0.0
          %1063 = vmatprep.subr.mxu0 0.0
          %1064 = vmatpush2.msra.mxu0 0.0
          %1065 = vmatprep.subr.mxu0 0.0
          %1066 = vmatpush2.msra.mxu0 0.0
          %1067 = vmatprep.subr.mxu0 0.0
          %1068 = vmatpush2.msra.mxu0 0.0
          %1069 = vmatprep.subr.mxu0 0.0
          %1070 = vmatpush2.msra.mxu0 0.0
          %1071 = vmatprep.subr.mxu0 0.0
          %1072 = vmatpush2.msra.mxu0 0.0
          %1073 = vmatprep.subr.mxu0 0.0
          %1074 = vmatpush2.msra.mxu0 %v1011
          %1075 = vmatprep.subr.mxu0 0.0
          %1076 = vmatpush2.msra.mxu0 %v1010
          %1077 = vmatprep.subr.mxu0 0.0
          %1078 = vmatpush2.msra.mxu0 %v1009
          %1079 = vmatprep.subr.mxu0 0.0
          %1080 = vmatpush2.msra.mxu0 %v1008
          %1081 = vmatprep.subr.mxu0 0.0
          %1082 = vmatpush2.msra.mxu0 %v1007
          %1083 = vmatprep.subr.mxu0 0.0
          %1084 = vmatpush2.msra.mxu0 %v1006
          %1085 = vmatprep.subr.mxu0 0.0
          %1086 = vmatpush2.msra.mxu0 %v1005
          %1087 = vmatprep.subr.mxu0 0.0
          %1088 = vmatpush2.msra.mxu0 %v1004
          %1089 = vmatprep.mubr.f32.mxu0 %v1014
          %1090 = vmatmul.mubr.f32.gmra.mxu0 %v980
          %v1091 = vpop.f32.mrf.mxu0
          %v1092 = vadd.f32 0.0, %v1091
          %v1093 = vpop.f32.mrf.mxu0
          %1094 = vmatprep.mubr.f32.mxu0 %v1017
          %1095 = vmatmul.mubr.f32.gmra.mxu0 %v982
          %v1096 = vpop.f32.mrf.mxu0
          %v1097 = vadd.f32 0.0, %v1096
          %v1098 = vpop.f32.mrf.mxu0
          %1099 = vmatprep.mubr.f32.mxu0 %v1020
          %1100 = vmatmul.mubr.f32.gmra.mxu0 %v984
          %v1101 = vpop.f32.mrf.mxu0
          %v1102 = vadd.f32 0.0, %v1101
          %v1103 = vpop.f32.mrf.mxu0
          %1104 = vmatprep.mubr.f32.mxu0 %v1023
          %1105 = vmatmul.mubr.f32.gmra.mxu0 %v986
          %v1106 = vpop.f32.mrf.mxu0
          %v1107 = vadd.f32 0.0, %v1106
          %v1108 = vpop.f32.mrf.mxu0
          %1109 = vdwg.mxu0
          %v1110 = vld [vmem:[%s2] sm:$0xff]
          %v1111 = vld [vmem:[%s2 + $0x8] sm:$0xff]
          %v1112 = vld [vmem:[%s2 + $0x10] sm:$0xff]
          %v1113 = vld [vmem:[%s2 + $0x18] sm:$0xff]
          %v1114 = vld [vmem:[%s2 + $0x20] sm:$0xff]
          %v1115 = vld [vmem:[%s2 + $0x28] sm:$0xff]
          %v1116 = vld [vmem:[%s3] sm:$0xff]
          %v1117 = vld [vmem:[%s3 + $0x8] sm:$0xff]
          %v1118 = vld [vmem:[%s3 + $0x10] sm:$0xff]
          %v1119 = vld [vmem:[%s3 + $0x18] sm:$0xff]
          %v1120 = vld [vmem:[%s3 + $0x20] sm:$0xff]
          %v1121 = vld [vmem:[%s3 + $0x28] sm:$0xff]
          %vm1122 = vcmask 261120
          %v1124 = vsel %vm1122, %v1116, 0
          %v1127 = vsel %vm1122, %v1117, 0
          %v1130 = vsel %vm1122, %v1118, 0
          %v1133 = vsel %vm1122, %v1119, 0
          %v1136 = vsel %vm1122, %v1120, 0
          %v1139 = vsel %vm1122, %v1121, 0
          %1141 = vmatprep.subr.mxu0 0.0
          %1142 = vmatpush1.msra.mxu0 0.0
          %1143 = vmatprep.subr.mxu0 0.0
          %1144 = vmatpush1.msra.mxu0 0.0
          %1145 = vmatprep.subr.mxu0 0.0
          %1146 = vmatpush1.msra.mxu0 0.0
          %1147 = vmatprep.subr.mxu0 0.0
          %1148 = vmatpush1.msra.mxu0 0.0
          %1149 = vmatprep.subr.mxu0 0.0
          %1150 = vmatpush1.msra.mxu0 0.0
          %1151 = vmatprep.subr.mxu0 0.0
          %1152 = vmatpush1.msra.mxu0 0.0
          %1153 = vmatprep.subr.mxu0 0.0
          %1154 = vmatpush1.msra.mxu0 0.0
          %1155 = vmatprep.subr.mxu0 0.0
          %1156 = vmatpush1.msra.mxu0 0.0
          %1157 = vmatprep.subr.mxu0 0.0
          %1158 = vmatpush1.msra.mxu0 0.0
          %1159 = vmatprep.subr.mxu0 0.0
          %1160 = vmatpush1.msra.mxu0 0.0
          %1161 = vmatprep.subr.mxu0 0.0
          %1162 = vmatpush1.msra.mxu0 0.0
          %1163 = vmatprep.subr.mxu0 0.0
          %1164 = vmatpush1.msra.mxu0 0.0
          %1165 = vmatprep.subr.mxu0 0.0
          %1166 = vmatpush1.msra.mxu0 %v1107
          %1167 = vmatprep.subr.mxu0 0.0
          %1168 = vmatpush1.msra.mxu0 %v1102
          %1169 = vmatprep.subr.mxu0 0.0
          %1170 = vmatpush1.msra.mxu0 %v1097
          %1171 = vmatprep.subr.mxu0 0.0
          %1172 = vmatpush1.msra.mxu0 %v1092
          %1173 = vmatprep.subr.mxu0 0.0
          %1174 = vmatpush2.msra.mxu0 0.0
          %1175 = vmatprep.subr.mxu0 0.0
          %1176 = vmatpush2.msra.mxu0 0.0
          %1177 = vmatprep.subr.mxu0 0.0
          %1178 = vmatpush2.msra.mxu0 0.0
          %1179 = vmatprep.subr.mxu0 0.0
          %1180 = vmatpush2.msra.mxu0 0.0
          %1181 = vmatprep.subr.mxu0 0.0
          %1182 = vmatpush2.msra.mxu0 0.0
          %1183 = vmatprep.subr.mxu0 0.0
          %1184 = vmatpush2.msra.mxu0 0.0
          %1185 = vmatprep.subr.mxu0 0.0
          %1186 = vmatpush2.msra.mxu0 0.0
          %1187 = vmatprep.subr.mxu0 0.0
          %1188 = vmatpush2.msra.mxu0 0.0
          %1189 = vmatprep.subr.mxu0 0.0
          %1190 = vmatpush2.msra.mxu0 0.0
          %1191 = vmatprep.subr.mxu0 0.0
          %1192 = vmatpush2.msra.mxu0 0.0
          %1193 = vmatprep.subr.mxu0 0.0
          %1194 = vmatpush2.msra.mxu0 0.0
          %1195 = vmatprep.subr.mxu0 0.0
          %1196 = vmatpush2.msra.mxu0 0.0
          %1197 = vmatprep.subr.mxu0 0.0
          %1198 = vmatpush2.msra.mxu0 0.0
          %1199 = vmatprep.subr.mxu0 0.0
          %1200 = vmatpush2.msra.mxu0 0.0
          %1201 = vmatprep.subr.mxu0 0.0
          %1202 = vmatpush2.msra.mxu0 0.0
          %1203 = vmatprep.subr.mxu0 0.0
          %1204 = vmatpush2.msra.mxu0 0.0
          %1205 = vmatprep.mubr.f32.mxu0 0.0
          %1206 = vmatmul.mubr.f32.gmra.mxu0 %v1124
          %v1207 = vpop.f32.mrf.mxu0
          %v1208 = vadd.f32 0.0, %v1207
          %v1209 = vpop.f32.mrf.mxu0
          %1210 = vmatprep.mubr.f32.mxu0 0.0
          %1211 = vmatmul.mubr.f32.gmra.mxu0 %v1127
          %v1212 = vpop.f32.mrf.mxu0
          %v1213 = vadd.f32 0.0, %v1212
          %v1214 = vpop.f32.mrf.mxu0
          %1215 = vmatprep.mubr.f32.mxu0 0.0
          %1216 = vmatmul.mubr.f32.gmra.mxu0 %v1130
          %v1217 = vpop.f32.mrf.mxu0
          %v1218 = vadd.f32 0.0, %v1217
          %v1219 = vpop.f32.mrf.mxu0
          %1220 = vmatprep.mubr.f32.mxu0 0.0
          %1221 = vmatmul.mubr.f32.gmra.mxu0 %v1133
          %v1222 = vpop.f32.mrf.mxu0
          %v1223 = vadd.f32 0.0, %v1222
          %v1224 = vpop.f32.mrf.mxu0
          %1225 = vmatprep.mubr.f32.mxu0 0.0
          %1226 = vmatmul.mubr.f32.gmra.mxu0 %v1136
          %v1227 = vpop.f32.mrf.mxu0
          %v1228 = vadd.f32 0.0, %v1227
          %v1229 = vpop.f32.mrf.mxu0
          %1230 = vmatprep.mubr.f32.mxu0 0.0
          %1231 = vmatmul.mubr.f32.gmra.mxu0 %v1139
          %v1232 = vpop.f32.mrf.mxu0
          %v1233 = vadd.f32 0.0, %v1232
          %v1234 = vpop.f32.mrf.mxu0
          %1235 = vdwg.mxu0
          %v1236 = vadd.f32 %v1110, %v1208
          %v1237 = vadd.f32 %v1111, %v1213
          %v1238 = vadd.f32 %v1112, %v1218
          %v1239 = vadd.f32 %v1113, %v1223
          %v1240 = vadd.f32 %v1114, %v1228
          %v1241 = vadd.f32 %v1115, %v1233
          %1242 = vst.msk [vmem:[#allocation2] sm:$0xff] %vm1012, %v1236
          %1243 = vst.msk [vmem:[#allocation2 + $0x8] sm:$0xff] %vm1012, %v1237
          %1244 = vst.msk [vmem:[#allocation2 + $0x10] sm:$0xff] %vm1012, %v1238
          %1245 = vst.msk [vmem:[#allocation2 + $0x18] sm:$0xff] %vm1012, %v1239
          %1246 = vst.msk [vmem:[#allocation2 + $0x20] sm:$0xff] %vm1012, %v1240
          %1247 = vst.msk [vmem:[#allocation2 + $0x28] sm:$0xff] %vm1012, %v1241
        $region120: #{vit_forward.1} parent=115 // pred_fallthru
          _
        %v1248 = vld [vmem:[#allocation2] sm:$0xff]
        %v1249 = vld [vmem:[#allocation2 + $0x8] sm:$0xff]
        %v1250 = vld [vmem:[#allocation2 + $0x10] sm:$0xff]
        %v1251 = vld [vmem:[#allocation2 + $0x18] sm:$0xff]
        %v1252 = vld [vmem:[#allocation2 + $0x20] sm:$0xff]
        %v1253 = vld [vmem:[#allocation2 + $0x28] sm:$0xff]
        %v1254 = vld [vmem:[%s914] sm:$0x1]
        %v1255 = vld [vmem:[%s917] sm:$0x1]
        %vm1256 = vcmask 523264
        %v1257 = vsel %vm1256, %v1248, 0.0
        %1258 = vadd.xlane.f32.xlu0 %v1257
        %v1259 = vpop.xlane.xlu0 %1258
        %v1260 = vsel %vm1256, %v1249, 0.0
        %1261 = vadd.xlane.f32.xlu0 %v1260
        %v1262 = vpop.xlane.xlu0 %1261
        %v1263 = vsel %vm1256, %v1250, 0.0
        %1264 = vadd.xlane.f32.xlu0 %v1263
        %v1265 = vpop.xlane.xlu0 %1264
        %v1266 = vsel %vm1256, %v1251, 0.0
        %1267 = vadd.xlane.f32.xlu0 %v1266
        %v1268 = vpop.xlane.xlu0 %1267
        %v1269 = vsel %vm1256, %v1252, 0.0
        %1270 = vadd.xlane.f32.xlu0 %v1269
        %v1271 = vpop.xlane.xlu0 %1270
        %v1272 = vsel %vm1256, %v1253, 0.0
        %1273 = vadd.xlane.f32.xlu0 %v1272
        %v1274 = vpop.xlane.xlu0 %1273
        %v1275 = vrcp.pop 64.0
        %v1276 = vmul.f32 %v1259, %v1275
        %v1277 = vmul.f32 %v1262, %v1275
        %v1278 = vmul.f32 %v1265, %v1275
        %v1279 = vmul.f32 %v1268, %v1275
        %v1280 = vmul.f32 %v1271, %v1275
        %v1281 = vmul.f32 %v1274, %v1275
        %v1282 = vsub.f32 %v1248, %v1276
        %v1283 = vsub.f32 %v1249, %v1277
        %v1284 = vsub.f32 %v1250, %v1278
        %v1285 = vsub.f32 %v1251, %v1279
        %v1286 = vsub.f32 %v1252, %v1280
        %v1287 = vsub.f32 %v1253, %v1281
        %v1288 = vmul.f32 %v1282, %v1282
        %v1289 = vmul.f32 %v1283, %v1283
        %v1290 = vmul.f32 %v1284, %v1284
        %v1291 = vmul.f32 %v1285, %v1285
        %v1292 = vmul.f32 %v1286, %v1286
        %v1293 = vmul.f32 %v1287, %v1287
        %v1294 = vsel %vm1256, %v1288, 0.0
        %1295 = vadd.xlane.f32.xlu0 %v1294
        %v1296 = vpop.xlane.xlu0 %1295
        %v1297 = vsel %vm1256, %v1289, 0.0
        %1298 = vadd.xlane.f32.xlu0 %v1297
        %v1299 = vpop.xlane.xlu0 %1298
        %v1300 = vsel %vm1256, %v1290, 0.0
        %1301 = vadd.xlane.f32.xlu0 %v1300
        %v1302 = vpop.xlane.xlu0 %1301
        %v1303 = vsel %vm1256, %v1291, 0.0
        %1304 = vadd.xlane.f32.xlu0 %v1303
        %v1305 = vpop.xlane.xlu0 %1304
        %v1306 = vsel %vm1256, %v1292, 0.0
        %1307 = vadd.xlane.f32.xlu0 %v1306
        %v1308 = vpop.xlane.xlu0 %1307
        %v1309 = vsel %vm1256, %v1293, 0.0
        %1310 = vadd.xlane.f32.xlu0 %v1309
        %v1311 = vpop.xlane.xlu0 %1310
        %v1312 = vmul.f32 %v1296, %v1275
        %v1313 = vmul.f32 %v1299, %v1275
        %v1314 = vmul.f32 %v1302, %v1275
        %v1315 = vmul.f32 %v1305, %v1275
        %v1316 = vmul.f32 %v1308, %v1275
        %v1317 = vmul.f32 %v1311, %v1275
        %v1318 = vadd.f32 %v1312, 1e-06
        %v1319 = vadd.f32 %v1313, 1e-06
        %v1320 = vadd.f32 %v1314, 1e-06
        %v1321 = vadd.f32 %v1315, 1e-06
        %v1322 = vadd.f32 %v1316, 1e-06
        %v1323 = vadd.f32 %v1317, 1e-06
        %v1324 = vrsqrt.pop %v1318
        %v1325 = vrsqrt.pop %v1319
        %v1326 = vrsqrt.pop %v1320
        %v1327 = vrsqrt.pop %v1321
        %v1328 = vrsqrt.pop %v1322
        %v1329 = vrsqrt.pop %v1323
        %v1330 = vmul.f32 %v1282, %v1324
        %v1331 = vmul.f32 %v1283, %v1325
        %v1332 = vmul.f32 %v1284, %v1326
        %v1333 = vmul.f32 %v1285, %v1327
        %v1334 = vmul.f32 %v1286, %v1328
        %v1335 = vmul.f32 %v1287, %v1329
        %v1337 = vlaneseq
        %v1338 = vshrl.u32 %v1337, 7
        %v1339 = vsub.s32 0, %v1338
        %v1340 = vrot.slane %v1254, %v1339
        %v1342 = vmul.f32 %v1330, %v1340
        %v1343 = vmul.f32 %v1331, %v1340
        %v1344 = vmul.f32 %v1332, %v1340
        %v1345 = vmul.f32 %v1333, %v1340
        %v1346 = vmul.f32 %v1334, %v1340
        %v1347 = vmul.f32 %v1335, %v1340
        %v1349 = vlaneseq
        %v1350 = vshrl.u32 %v1349, 7
        %v1351 = vsub.s32 0, %v1350
        %v1352 = vrot.slane %v1255, %v1351
        %v1354 = vadd.f32 %v1342, %v1352
        %v1355 = vadd.f32 %v1343, %v1352
        %v1356 = vadd.f32 %v1344, %v1352
        %v1357 = vadd.f32 %v1345, %v1352
        %v1358 = vadd.f32 %v1346, %v1352
        %v1359 = vadd.f32 %v1347, %v1352
        %v1360 = vld [vmem:[%s4] sm:$0xff]
        %v1361 = vld [vmem:[%s4 + $0x8] sm:$0xff]
        %v1362 = vld [vmem:[%s4 + $0x10] sm:$0xff]
        %v1363 = vld [vmem:[%s4 + $0x18] sm:$0xff]
        %v1364 = vld [vmem:[%s4 + $0x20] sm:$0xff]
        %v1365 = vld [vmem:[%s4 + $0x28] sm:$0xff]
        %v1366 = vld [vmem:[%s922] sm:$0xff]
        %v1367 = vld [vmem:[%s922 + $0x8] sm:$0xff]
        %v1368 = vld [vmem:[%s922 + $0x10] sm:$0xff]
        %v1369 = vld [vmem:[%s922 + $0x18] sm:$0xff]
        %v1370 = vld [vmem:[%s922 + $0x20] sm:$0xff]
        %v1371 = vld [vmem:[%s922 + $0x28] sm:$0xff]
        %v1372 = vld [vmem:[%s922 + $0x30] sm:$0xff]
        %v1373 = vld [vmem:[%s922 + $0x38] sm:$0xff]
        %v1374 = vld [vmem:[%s936] sm:$0x1]
        %v1376 = vlaneseq
        %v1377 = vshrl.u32 %v1376, 7
        %v1378 = vsub.s32 0, %v1377
        %v1379 = vrot.slane %v1374, %v1378
        %v1382 = vsel %vm1256, %v1354, 0
        %v1385 = vsel %vm1256, %v1355, 0
        %v1388 = vsel %vm1256, %v1356, 0
        %v1391 = vsel %vm1256, %v1357, 0
        %v1394 = vsel %vm1256, %v1358, 0
        %v1397 = vsel %vm1256, %v1359, 0
        %1399 = vmatprep.subr.mxu0 0.0
        %1400 = vmatpush1.msra.mxu0 0.0
        %1401 = vmatprep.subr.mxu0 0.0
        %1402 = vmatpush1.msra.mxu0 0.0
        %1403 = vmatprep.subr.mxu0 0.0
        %1404 = vmatpush1.msra.mxu0 0.0
        %1405 = vmatprep.subr.mxu0 0.0
        %1406 = vmatpush1.msra.mxu0 0.0
        %1407 = vmatprep.subr.mxu0 0.0
        %1408 = vmatpush1.msra.mxu0 0.0
        %1409 = vmatprep.subr.mxu0 0.0
        %1410 = vmatpush1.msra.mxu0 0.0
        %1411 = vmatprep.subr.mxu0 0.0
        %1412 = vmatpush1.msra.mxu0 0.0
        %1413 = vmatprep.subr.mxu0 0.0
        %1414 = vmatpush1.msra.mxu0 0.0
        %1415 = vmatprep.subr.mxu0 0.0
        %1416 = vmatpush1.msra.mxu0 %v1373
        %1417 = vmatprep.subr.mxu0 0.0
        %1418 = vmatpush1.msra.mxu0 %v1372
        %1419 = vmatprep.subr.mxu0 0.0
        %1420 = vmatpush1.msra.mxu0 %v1371
        %1421 = vmatprep.subr.mxu0 0.0
        %1422 = vmatpush1.msra.mxu0 %v1370
        %1423 = vmatprep.subr.mxu0 0.0
        %1424 = vmatpush1.msra.mxu0 %v1369
        %1425 = vmatprep.subr.mxu0 0.0
        %1426 = vmatpush1.msra.mxu0 %v1368
        %1427 = vmatprep.subr.mxu0 0.0
        %1428 = vmatpush1.msra.mxu0 %v1367
        %1429 = vmatprep.subr.mxu0 0.0
        %1430 = vmatpush1.msra.mxu0 %v1366
        %1431 = vmatprep.subr.mxu0 0.0
        %1432 = vmatpush2.msra.mxu0 0.0
        %1433 = vmatprep.subr.mxu0 0.0
        %1434 = vmatpush2.msra.mxu0 0.0
        %1435 = vmatprep.subr.mxu0 0.0
        %1436 = vmatpush2.msra.mxu0 0.0
        %1437 = vmatprep.subr.mxu0 0.0
        %1438 = vmatpush2.msra.mxu0 0.0
        %1439 = vmatprep.subr.mxu0 0.0
        %1440 = vmatpush2.msra.mxu0 0.0
        %1441 = vmatprep.subr.mxu0 0.0
        %1442 = vmatpush2.msra.mxu0 0.0
        %1443 = vmatprep.subr.mxu0 0.0
        %1444 = vmatpush2.msra.mxu0 0.0
        %1445 = vmatprep.subr.mxu0 0.0
        %1446 = vmatpush2.msra.mxu0 0.0
        %1447 = vmatprep.subr.mxu0 0.0
        %1448 = vmatpush2.msra.mxu0 0.0
        %1449 = vmatprep.subr.mxu0 0.0
        %1450 = vmatpush2.msra.mxu0 0.0
        %1451 = vmatprep.subr.mxu0 0.0
        %1452 = vmatpush2.msra.mxu0 0.0
        %1453 = vmatprep.subr.mxu0 0.0
        %1454 = vmatpush2.msra.mxu0 0.0
        %1455 = vmatprep.subr.mxu0 0.0
        %1456 = vmatpush2.msra.mxu0 0.0
        %1457 = vmatprep.subr.mxu0 0.0
        %1458 = vmatpush2.msra.mxu0 0.0
        %1459 = vmatprep.subr.mxu0 0.0
        %1460 = vmatpush2.msra.mxu0 0.0
        %1461 = vmatprep.subr.mxu0 0.0
        %1462 = vmatpush2.msra.mxu0 0.0
        %1463 = vmatprep.mubr.f32.mxu0 0.0
        %1464 = vmatmul.mubr.f32.gmra.mxu0 %v1382
        %v1465 = vpop.f32.mrf.mxu0
        %v1466 = vadd.f32 %v1379, %v1465
        %v1467 = vpop.f32.mrf.mxu0
        %1468 = vmatprep.mubr.f32.mxu0 0.0
        %1469 = vmatmul.mubr.f32.gmra.mxu0 %v1385
        %v1470 = vpop.f32.mrf.mxu0
        %v1471 = vadd.f32 %v1379, %v1470
        %v1472 = vpop.f32.mrf.mxu0
        %1473 = vmatprep.mubr.f32.mxu0 0.0
        %1474 = vmatmul.mubr.f32.gmra.mxu0 %v1388
        %v1475 = vpop.f32.mrf.mxu0
        %v1476 = vadd.f32 %v1379, %v1475
        %v1477 = vpop.f32.mrf.mxu0
        %1478 = vmatprep.mubr.f32.mxu0 0.0
        %1479 = vmatmul.mubr.f32.gmra.mxu0 %v1391
        %v1480 = vpop.f32.mrf.mxu0
        %v1481 = vadd.f32 %v1379, %v1480
        %v1482 = vpop.f32.mrf.mxu0
        %1483 = vmatprep.mubr.f32.mxu0 0.0
        %1484 = vmatmul.mubr.f32.gmra.mxu0 %v1394
        %v1485 = vpop.f32.mrf.mxu0
        %v1486 = vadd.f32 %v1379, %v1485
        %v1487 = vpop.f32.mrf.mxu0
        %1488 = vmatprep.mubr.f32.mxu0 0.0
        %1489 = vmatmul.mubr.f32.gmra.mxu0 %v1397
        %v1490 = vpop.f32.mrf.mxu0
        %v1491 = vadd.f32 %v1379, %v1490
        %v1492 = vpop.f32.mrf.mxu0
        %1493 = vdwg.mxu0
        %v1494 = vld [vmem:[%s927] sm:$0xff]
        %v1495 = vld [vmem:[%s927 + $0x8] sm:$0xff]
        %v1496 = vld [vmem:[%s927 + $0x10] sm:$0xff]
        %v1497 = vld [vmem:[%s927 + $0x18] sm:$0xff]
        %v1498 = vld [vmem:[%s927 + $0x20] sm:$0xff]
        %v1499 = vld [vmem:[%s927 + $0x28] sm:$0xff]
        %v1500 = vld [vmem:[%s927 + $0x30] sm:$0xff]
        %v1501 = vld [vmem:[%s927 + $0x38] sm:$0xff]
        %v1502 = vld [vmem:[%s940] sm:$0x1]
        %v1504 = vlaneseq
        %v1505 = vshrl.u32 %v1504, 7
        %v1506 = vsub.s32 0, %v1505
        %v1507 = vrot.slane %v1502, %v1506
        %1509 = vmatprep.subr.mxu0 0.0
        %1510 = vmatpush1.msra.mxu0 0.0
        %1511 = vmatprep.subr.mxu0 0.0
        %1512 = vmatpush1.msra.mxu0 0.0
        %1513 = vmatprep.subr.mxu0 0.0
        %1514 = vmatpush1.msra.mxu0 0.0
        %1515 = vmatprep.subr.mxu0 0.0
        %1516 = vmatpush1.msra.mxu0 0.0
        %1517 = vmatprep.subr.mxu0 0.0
        %1518 = vmatpush1.msra.mxu0 0.0
        %1519 = vmatprep.subr.mxu0 0.0
        %1520 = vmatpush1.msra.mxu0 0.0
        %1521 = vmatprep.subr.mxu0 0.0
        %1522 = vmatpush1.msra.mxu0 0.0
        %1523 = vmatprep.subr.mxu0 0.0
        %1524 = vmatpush1.msra.mxu0 0.0
        %1525 = vmatprep.subr.mxu0 0.0
        %1526 = vmatpush1.msra.mxu0 %v1501
        %1527 = vmatprep.subr.mxu0 0.0
        %1528 = vmatpush1.msra.mxu0 %v1500
        %1529 = vmatprep.subr.mxu0 0.0
        %1530 = vmatpush1.msra.mxu0 %v1499
        %1531 = vmatprep.subr.mxu0 0.0
        %1532 = vmatpush1.msra.mxu0 %v1498
        %1533 = vmatprep.subr.mxu0 0.0
        %1534 = vmatpush1.msra.mxu0 %v1497
        %1535 = vmatprep.subr.mxu0 0.0
        %1536 = vmatpush1.msra.mxu0 %v1496
        %1537 = vmatprep.subr.mxu0 0.0
        %1538 = vmatpush1.msra.mxu0 %v1495
        %1539 = vmatprep.subr.mxu0 0.0
        %1540 = vmatpush1.msra.mxu0 %v1494
        %1541 = vmatprep.subr.mxu0 0.0
        %1542 = vmatpush2.msra.mxu0 0.0
        %1543 = vmatprep.subr.mxu0 0.0
        %1544 = vmatpush2.msra.mxu0 0.0
        %1545 = vmatprep.subr.mxu0 0.0
        %1546 = vmatpush2.msra.mxu0 0.0
        %1547 = vmatprep.subr.mxu0 0.0
        %1548 = vmatpush2.msra.mxu0 0.0
        %1549 = vmatprep.subr.mxu0 0.0
        %1550 = vmatpush2.msra.mxu0 0.0
        %1551 = vmatprep.subr.mxu0 0.0
        %1552 = vmatpush2.msra.mxu0 0.0
        %1553 = vmatprep.subr.mxu0 0.0
        %1554 = vmatpush2.msra.mxu0 0.0
        %1555 = vmatprep.subr.mxu0 0.0
        %1556 = vmatpush2.msra.mxu0 0.0
        %1557 = vmatprep.subr.mxu0 0.0
        %1558 = vmatpush2.msra.mxu0 0.0
        %1559 = vmatprep.subr.mxu0 0.0
        %1560 = vmatpush2.msra.mxu0 0.0
        %1561 = vmatprep.subr.mxu0 0.0
        %1562 = vmatpush2.msra.mxu0 0.0
        %1563 = vmatprep.subr.mxu0 0.0
        %1564 = vmatpush2.msra.mxu0 0.0
        %1565 = vmatprep.subr.mxu0 0.0
        %1566 = vmatpush2.msra.mxu0 0.0
        %1567 = vmatprep.subr.mxu0 0.0
        %1568 = vmatpush2.msra.mxu0 0.0
        %1569 = vmatprep.subr.mxu0 0.0
        %1570 = vmatpush2.msra.mxu0 0.0
        %1571 = vmatprep.subr.mxu0 0.0
        %1572 = vmatpush2.msra.mxu0 0.0
        %1573 = vmatprep.mubr.f32.mxu0 0.0
        %1574 = vmatmul.mubr.f32.gmra.mxu0 %v1382
        %v1575 = vpop.f32.mrf.mxu0
        %v1576 = vadd.f32 %v1507, %v1575
        %v1577 = vpop.f32.mrf.mxu0
        %1578 = vmatprep.mubr.f32.mxu0 0.0
        %1579 = vmatmul.mubr.f32.gmra.mxu0 %v1385
        %v1580 = vpop.f32.mrf.mxu0
        %v1581 = vadd.f32 %v1507, %v1580
        %v1582 = vpop.f32.mrf.mxu0
        %1583 = vmatprep.mubr.f32.mxu0 0.0
        %1584 = vmatmul.mubr.f32.gmra.mxu0 %v1388
        %v1585 = vpop.f32.mrf.mxu0
        %v1586 = vadd.f32 %v1507, %v1585
        %v1587 = vpop.f32.mrf.mxu0
        %1588 = vmatprep.mubr.f32.mxu0 0.0
        %1589 = vmatmul.mubr.f32.gmra.mxu0 %v1391
        %v1590 = vpop.f32.mrf.mxu0
        %v1591 = vadd.f32 %v1507, %v1590
        %v1592 = vpop.f32.mrf.mxu0
        %1593 = vmatprep.mubr.f32.mxu0 0.0
        %1594 = vmatmul.mubr.f32.gmra.mxu0 %v1394
        %v1595 = vpop.f32.mrf.mxu0
        %v1596 = vadd.f32 %v1507, %v1595
        %v1597 = vpop.f32.mrf.mxu0
        %1598 = vmatprep.mubr.f32.mxu0 0.0
        %1599 = vmatmul.mubr.f32.gmra.mxu0 %v1397
        %v1600 = vpop.f32.mrf.mxu0
        %v1601 = vadd.f32 %v1507, %v1600
        %v1602 = vpop.f32.mrf.mxu0
        %1603 = vdwg.mxu0
        %v1604 = vld [vmem:[%s932] sm:$0xff]
        %v1605 = vld [vmem:[%s932 + $0x8] sm:$0xff]
        %v1606 = vld [vmem:[%s932 + $0x10] sm:$0xff]
        %v1607 = vld [vmem:[%s932 + $0x18] sm:$0xff]
        %v1608 = vld [vmem:[%s932 + $0x20] sm:$0xff]
        %v1609 = vld [vmem:[%s932 + $0x28] sm:$0xff]
        %v1610 = vld [vmem:[%s932 + $0x30] sm:$0xff]
        %v1611 = vld [vmem:[%s932 + $0x38] sm:$0xff]
        %v1612 = vld [vmem:[%s944] sm:$0x1]
        %v1614 = vlaneseq
        %v1615 = vshrl.u32 %v1614, 7
        %v1616 = vsub.s32 0, %v1615
        %v1617 = vrot.slane %v1612, %v1616
        %1619 = vmatprep.subr.mxu0 0.0
        %1620 = vmatpush1.msra.mxu0 0.0
        %1621 = vmatprep.subr.mxu0 0.0
        %1622 = vmatpush1.msra.mxu0 0.0
        %1623 = vmatprep.subr.mxu0 0.0
        %1624 = vmatpush1.msra.mxu0 0.0
        %1625 = vmatprep.subr.mxu0 0.0
        %1626 = vmatpush1.msra.mxu0 0.0
        %1627 = vmatprep.subr.mxu0 0.0
        %1628 = vmatpush1.msra.mxu0 0.0
        %1629 = vmatprep.subr.mxu0 0.0
        %1630 = vmatpush1.msra.mxu0 0.0
        %1631 = vmatprep.subr.mxu0 0.0
        %1632 = vmatpush1.msra.mxu0 0.0
        %1633 = vmatprep.subr.mxu0 0.0
        %1634 = vmatpush1.msra.mxu0 0.0
        %1635 = vmatprep.subr.mxu0 0.0
        %1636 = vmatpush1.msra.mxu0 %v1611
        %1637 = vmatprep.subr.mxu0 0.0
        %1638 = vmatpush1.msra.mxu0 %v1610
        %1639 = vmatprep.subr.mxu0 0.0
        %1640 = vmatpush1.msra.mxu0 %v1609
        %1641 = vmatprep.subr.mxu0 0.0
        %1642 = vmatpush1.msra.mxu0 %v1608
        %1643 = vmatprep.subr.mxu0 0.0
        %1644 = vmatpush1.msra.mxu0 %v1607
        %1645 = vmatprep.subr.mxu0 0.0
        %1646 = vmatpush1.msra.mxu0 %v1606
        %1647 = vmatprep.subr.mxu0 0.0
        %1648 = vmatpush1.msra.mxu0 %v1605
        %1649 = vmatprep.subr.mxu0 0.0
        %1650 = vmatpush1.msra.mxu0 %v1604
        %1651 = vmatprep.subr.mxu0 0.0
        %1652 = vmatpush2.msra.mxu0 0.0
        %1653 = vmatprep.subr.mxu0 0.0
        %1654 = vmatpush2.msra.mxu0 0.0
        %1655 = vmatprep.subr.mxu0 0.0
        %1656 = vmatpush2.msra.mxu0 0.0
        %1657 = vmatprep.subr.mxu0 0.0
        %1658 = vmatpush2.msra.mxu0 0.0
        %1659 = vmatprep.subr.mxu0 0.0
        %1660 = vmatpush2.msra.mxu0 0.0
        %1661 = vmatprep.subr.mxu0 0.0
        %1662 = vmatpush2.msra.mxu0 0.0
        %1663 = vmatprep.subr.mxu0 0.0
        %1664 = vmatpush2.msra.mxu0 0.0
        %1665 = vmatprep.subr.mxu0 0.0
        %1666 = vmatpush2.msra.mxu0 0.0
        %1667 = vmatprep.subr.mxu0 0.0
        %1668 = vmatpush2.msra.mxu0 0.0
        %1669 = vmatprep.subr.mxu0 0.0
        %1670 = vmatpush2.msra.mxu0 0.0
        %1671 = vmatprep.subr.mxu0 0.0
        %1672 = vmatpush2.msra.mxu0 0.0
        %1673 = vmatprep.subr.mxu0 0.0
        %1674 = vmatpush2.msra.mxu0 0.0
        %1675 = vmatprep.subr.mxu0 0.0
        %1676 = vmatpush2.msra.mxu0 0.0
        %1677 = vmatprep.subr.mxu0 0.0
        %1678 = vmatpush2.msra.mxu0 0.0
        %1679 = vmatprep.subr.mxu0 0.0
        %1680 = vmatpush2.msra.mxu0 0.0
        %1681 = vmatprep.subr.mxu0 0.0
        %1682 = vmatpush2.msra.mxu0 0.0
        %1683 = vmatprep.mubr.f32.mxu0 0.0
        %1684 = vmatmul.mubr.f32.gmra.mxu0 %v1382
        %v1685 = vpop.f32.mrf.mxu0
        %v1686 = vadd.f32 %v1617, %v1685
        %v1687 = vpop.f32.mrf.mxu0
        %1688 = vmatprep.mubr.f32.mxu0 0.0
        %1689 = vmatmul.mubr.f32.gmra.mxu0 %v1385
        %v1690 = vpop.f32.mrf.mxu0
        %v1691 = vadd.f32 %v1617, %v1690
        %v1692 = vpop.f32.mrf.mxu0
        %1693 = vmatprep.mubr.f32.mxu0 0.0
        %1694 = vmatmul.mubr.f32.gmra.mxu0 %v1388
        %v1695 = vpop.f32.mrf.mxu0
        %v1696 = vadd.f32 %v1617, %v1695
        %v1697 = vpop.f32.mrf.mxu0
        %1698 = vmatprep.mubr.f32.mxu0 0.0
        %1699 = vmatmul.mubr.f32.gmra.mxu0 %v1391
        %v1700 = vpop.f32.mrf.mxu0
        %v1701 = vadd.f32 %v1617, %v1700
        %v1702 = vpop.f32.mrf.mxu0
        %1703 = vmatprep.mubr.f32.mxu0 0.0
        %1704 = vmatmul.mubr.f32.gmra.mxu0 %v1394
        %v1705 = vpop.f32.mrf.mxu0
        %v1706 = vadd.f32 %v1617, %v1705
        %v1707 = vpop.f32.mrf.mxu0
        %1708 = vmatprep.mubr.f32.mxu0 0.0
        %1709 = vmatmul.mubr.f32.gmra.mxu0 %v1397
        %v1710 = vpop.f32.mrf.mxu0
        %v1711 = vadd.f32 %v1617, %v1710
        %v1712 = vpop.f32.mrf.mxu0
        %1713 = vdwg.mxu0
        %vm1714 = vcmask 130048
        %v1716 = vsel %vm1714, %v1466, 0
        %v1719 = vsel %vm1714, %v1471, 0
        %v1722 = vsel %vm1714, %v1476, 0
        %v1725 = vsel %vm1714, %v1481, 0
        %v1728 = vsel %vm1714, %v1486, 0
        %v1731 = vsel %vm1714, %v1491, 0
        %v1734 = vsel %vm1714, %v1576, 0
        %v1737 = vsel %vm1714, %v1581, 0
        %v1740 = vsel %vm1714, %v1586, 0
        %v1743 = vsel %vm1714, %v1591, 0
        %v1746 = vsel %vm1714, %v1596, 0
        %v1749 = vsel %vm1714, %v1601, 0
        %1751 = vmatprep.subr.mxu0 0.0
        %1752 = vmatpush1.xpose.msra.mxu0 0.0
        %1753 = vmatprep.subr.mxu0 0.0
        %1754 = vmatpush1.xpose.msra.mxu0 0.0
        %1755 = vmatprep.subr.mxu0 0.0
        %1756 = vmatpush1.xpose.msra.mxu0 0.0
        %1757 = vmatprep.subr.mxu0 0.0
        %1758 = vmatpush1.xpose.msra.mxu0 0.0
        %1759 = vmatprep.subr.mxu0 0.0
        %1760 = vmatpush1.xpose.msra.mxu0 0.0
        %1761 = vmatprep.subr.mxu0 0.0
        %1762 = vmatpush1.xpose.msra.mxu0 0.0
        %1763 = vmatprep.subr.mxu0 0.0
        %1764 = vmatpush1.xpose.msra.mxu0 0.0
        %1765 = vmatprep.subr.mxu0 0.0
        %1766 = vmatpush1.xpose.msra.mxu0 0.0
        %1767 = vmatprep.subr.mxu0 0.0
        %1768 = vmatpush1.xpose.msra.mxu0 0.0
        %1769 = vmatprep.subr.mxu0 0.0
        %1770 = vmatpush1.xpose.msra.mxu0 0.0
        %1771 = vmatprep.subr.mxu0 0.0
        %1772 = vmatpush1.xpose.msra.mxu0 %v1749
        %1773 = vmatprep.subr.mxu0 0.0
        %1774 = vmatpush1.xpose.msra.mxu0 %v1746
        %1775 = vmatprep.subr.mxu0 0.0
        %1776 = vmatpush1.xpose.msra.mxu0 %v1743
        %1777 = vmatprep.subr.mxu0 0.0
        %1778 = vmatpush1.xpose.msra.mxu0 %v1740
        %1779 = vmatprep.subr.mxu0 0.0
        %1780 = vmatpush1.xpose.msra.mxu0 %v1737
        %1781 = vmatprep.subr.mxu0 0.0
        %1782 = vmatpush1.xpose.msra.mxu0 %v1734
        %1783 = vmatprep.subr.mxu0 0.0
        %1784 = vmatpush2.xpose.msra.mxu0 0.0
        %1785 = vmatprep.subr.mxu0 0.0
        %1786 = vmatpush2.xpose.msra.mxu0 0.0
        %1787 = vmatprep.subr.mxu0 0.0
        %1788 = vmatpush2.xpose.msra.mxu0 0.0
        %1789 = vmatprep.subr.mxu0 0.0
        %1790 = vmatpush2.xpose.msra.mxu0 0.0
        %1791 = vmatprep.subr.mxu0 0.0
        %1792 = vmatpush2.xpose.msra.mxu0 0.0
        %1793 = vmatprep.subr.mxu0 0.0
        %1794 = vmatpush2.xpose.msra.mxu0 0.0
        %1795 = vmatprep.subr.mxu0 0.0
        %1796 = vmatpush2.xpose.msra.mxu0 0.0
        %1797 = vmatprep.subr.mxu0 0.0
        %1798 = vmatpush2.xpose.msra.mxu0 0.0
        %1799 = vmatprep.subr.mxu0 0.0
        %1800 = vmatpush2.xpose.msra.mxu0 0.0
        %1801 = vmatprep.subr.mxu0 0.0
        %1802 = vmatpush2.xpose.msra.mxu0 0.0
        %1803 = vmatprep.subr.mxu0 0.0
        %1804 = vmatpush2.xpose.msra.mxu0 0.0
        %1805 = vmatprep.subr.mxu0 0.0
        %1806 = vmatpush2.xpose.msra.mxu0 0.0
        %1807 = vmatprep.subr.mxu0 0.0
        %1808 = vmatpush2.xpose.msra.mxu0 0.0
        %1809 = vmatprep.subr.mxu0 0.0
        %1810 = vmatpush2.xpose.msra.mxu0 0.0
        %1811 = vmatprep.subr.mxu0 0.0
        %1812 = vmatpush2.xpose.msra.mxu0 0.0
        %1813 = vmatprep.subr.mxu0 0.0
        %1814 = vmatpush2.xpose.msra.mxu0 0.0
        %1815 = vmatprep.mubr.f32.mxu0 0.0
        %1816 = vmatmul.mubr.f32.gmra.mxu0 %v1716
        %v1817 = vpop.f32.mrf.mxu0
        %v1818 = vadd.f32 0.0, %v1817
        %v1819 = vpop.f32.mrf.mxu0
        %1820 = vmatprep.mubr.f32.mxu0 0.0
        %1821 = vmatmul.mubr.f32.gmra.mxu0 %v1719
        %v1822 = vpop.f32.mrf.mxu0
        %v1823 = vadd.f32 0.0, %v1822
        %v1824 = vpop.f32.mrf.mxu0
        %1825 = vmatprep.mubr.f32.mxu0 0.0
        %1826 = vmatmul.mubr.f32.gmra.mxu0 %v1722
        %v1827 = vpop.f32.mrf.mxu0
        %v1828 = vadd.f32 0.0, %v1827
        %v1829 = vpop.f32.mrf.mxu0
        %1830 = vmatprep.mubr.f32.mxu0 0.0
        %1831 = vmatmul.mubr.f32.gmra.mxu0 %v1725
        %v1832 = vpop.f32.mrf.mxu0
        %v1833 = vadd.f32 0.0, %v1832
        %v1834 = vpop.f32.mrf.mxu0
        %1835 = vmatprep.mubr.f32.mxu0 0.0
        %1836 = vmatmul.mubr.f32.gmra.mxu0 %v1728
        %v1837 = vpop.f32.mrf.mxu0
        %v1838 = vadd.f32 0.0, %v1837
        %v1839 = vpop.f32.mrf.mxu0
        %1840 = vmatprep.mubr.f32.mxu0 0.0
        %1841 = vmatmul.mubr.f32.gmra.mxu0 %v1731
        %v1842 = vpop.f32.mrf.mxu0
        %v1843 = vadd.f32 0.0, %v1842
        %v1844 = vpop.f32.mrf.mxu0
        %1845 = vdwg.mxu0
        %v1846 = vmul.f32 %v1818, 0.25
        %v1847 = vmul.f32 %v1823, 0.25
        %v1848 = vmul.f32 %v1828, 0.25
        %v1849 = vmul.f32 %v1833, 0.25
        %v1850 = vmul.f32 %v1838, 0.25
        %v1851 = vmul.f32 %v1843, 0.25
        %v1852 = vadd.f32 %v1846, %v1360
        %v1853 = vadd.f32 %v1847, %v1361
        %v1854 = vadd.f32 %v1848, %v1362
        %v1855 = vadd.f32 %v1849, %v1363
        %v1856 = vadd.f32 %v1850, %v1364
        %v1857 = vadd.f32 %v1851, %v1365
        %vm1858 = vcmask 392192
        %v1859 = vsel %vm1858, %v1852, -inf
        %1860 = vmax.xlane.f32.xlu0 %v1859
        %v1861 = vpop.xlane.xlu0 %1860
        %v1862 = vsel %vm1858, %v1853, -inf
        %1863 = vmax.xlane.f32.xlu0 %v1862
        %v1864 = vpop.xlane.xlu0 %1863
        %v1865 = vsel %vm1858, %v1854, -inf
        %1866 = vmax.xlane.f32.xlu0 %v1865
        %v1867 = vpop.xlane.xlu0 %1866
        %v1868 = vsel %vm1858, %v1855, -inf
        %1869 = vmax.xlane.f32.xlu0 %v1868
        %v1870 = vpop.xlane.xlu0 %1869
        %v1871 = vsel %vm1858, %v1856, -inf
        %1872 = vmax.xlane.f32.xlu0 %v1871
        %v1873 = vpop.xlane.xlu0 %1872
        %v1874 = vsel %vm1858, %v1857, -inf
        %1875 = vmax.xlane.f32.xlu0 %v1874
        %v1876 = vpop.xlane.xlu0 %1875
        %v1877 = vsub.f32 %v1852, %v1861
        %v1878 = vsub.f32 %v1853, %v1864
        %v1879 = vsub.f32 %v1854, %v1867
        %v1880 = vsub.f32 %v1855, %v1870
        %v1881 = vsub.f32 %v1856, %v1873
        %v1882 = vsub.f32 %v1857, %v1876
        %v1883 = vmul.f32 %v1877, 1.442695
        %v1884 = vpow.pop %v1883
        %v1885 = vmul.f32 %v1878, 1.442695
        %v1886 = vpow.pop %v1885
        %v1887 = vmul.f32 %v1879, 1.442695
        %v1888 = vpow.pop %v1887
        %v1889 = vmul.f32 %v1880, 1.442695
        %v1890 = vpow.pop %v1889
        %v1891 = vmul.f32 %v1881, 1.442695
        %v1892 = vpow.pop %v1891
        %v1893 = vmul.f32 %v1882, 1.442695
        %v1894 = vpow.pop %v1893
        %v1895 = vsel %vm1858, %v1884, 0.0
        %1896 = vadd.xlane.f32.xlu0 %v1895
        %v1897 = vpop.xlane.xlu0 %1896
        %v1898 = vsel %vm1858, %v1886, 0.0
        %1899 = vadd.xlane.f32.xlu0 %v1898
        %v1900 = vpop.xlane.xlu0 %1899
        %v1901 = vsel %vm1858, %v1888, 0.0
        %1902 = vadd.xlane.f32.xlu0 %v1901
        %v1903 = vpop.xlane.xlu0 %1902
        %v1904 = vsel %vm1858, %v1890, 0.0
        %1905 = vadd.xlane.f32.xlu0 %v1904
        %v1906 = vpop.xlane.xlu0 %1905
        %v1907 = vsel %vm1858, %v1892, 0.0
        %1908 = vadd.xlane.f32.xlu0 %v1907
        %v1909 = vpop.xlane.xlu0 %1908
        %v1910 = vsel %vm1858, %v1894, 0.0
        %1911 = vadd.xlane.f32.xlu0 %v1910
        %v1912 = vpop.xlane.xlu0 %1911
        %v1913 = vrcp.pop %v1897
        %v1914 = vmul.f32 %v1884, %v1913
        %v1915 = vrcp.pop %v1900
        %v1916 = vmul.f32 %v1886, %v1915
        %v1917 = vrcp.pop %v1903
        %v1918 = vmul.f32 %v1888, %v1917
        %v1919 = vrcp.pop %v1906
        %v1920 = vmul.f32 %v1890, %v1919
        %v1921 = vrcp.pop %v1909
        %v1922 = vmul.f32 %v1892, %v1921
        %v1923 = vrcp.pop %v1912
        %v1924 = vmul.f32 %v1894, %v1923
        %v1926 = vsel %vm1858, %v1914, 0
        %v1929 = vsel %vm1858, %v1916, 0
        %v1932 = vsel %vm1858, %v1918, 0
        %v1935 = vsel %vm1858, %v1920, 0
        %v1938 = vsel %vm1858, %v1922, 0
        %v1941 = vsel %vm1858, %v1924, 0
        %1943 = vmatprep.subr.mxu0 0.0
        %1944 = vmatpush1.msra.mxu0 0.0
        %1945 = vmatprep.subr.mxu0 0.0
        %1946 = vmatpush1.msra.mxu0 0.0
        %1947 = vmatprep.subr.mxu0 0.0
        %1948 = vmatpush1.msra.mxu0 0.0
        %1949 = vmatprep.subr.mxu0 0.0
        %1950 = vmatpush1.msra.mxu0 0.0
        %1951 = vmatprep.subr.mxu0 0.0
        %1952 = vmatpush1.msra.mxu0 0.0
        %1953 = vmatprep.subr.mxu0 0.0
        %1954 = vmatpush1.msra.mxu0 0.0
        %1955 = vmatprep.subr.mxu0 0.0
        %1956 = vmatpush1.msra.mxu0 0.0
        %1957 = vmatprep.subr.mxu0 0.0
        %1958 = vmatpush1.msra.mxu0 0.0
        %1959 = vmatprep.subr.mxu0 0.0
        %1960 = vmatpush1.msra.mxu0 0.0
        %1961 = vmatprep.subr.mxu0 0.0
        %1962 = vmatpush1.msra.mxu0 0.0
        %1963 = vmatprep.subr.mxu0 0.0
        %1964 = vmatpush1.msra.mxu0 %v1711
        %1965 = vmatprep.subr.mxu0 0.0
        %1966 = vmatpush1.msra.mxu0 %v1706
        %1967 = vmatprep.subr.mxu0 0.0
        %1968 = vmatpush1.msra.mxu0 %v1701
        %1969 = vmatprep.subr.mxu0 0.0
        %1970 = vmatpush1.msra.mxu0 %v1696
        %1971 = vmatprep.subr.mxu0 0.0
        %1972 = vmatpush1.msra.mxu0 %v1691
        %1973 = vmatprep.subr.mxu0 0.0
        %1974 = vmatpush1.msra.mxu0 %v1686
        %1975 = vmatprep.subr.mxu0 0.0
        %1976 = vmatpush2.msra.mxu0 0.0
        %1977 = vmatprep.subr.mxu0 0.0
        %1978 = vmatpush2.msra.mxu0 0.0
        %1979 = vmatprep.subr.mxu0 0.0
        %1980 = vmatpush2.msra.mxu0 0.0
        %1981 = vmatprep.subr.mxu0 0.0
        %1982 = vmatpush2.msra.mxu0 0.0
        %1983 = vmatprep.subr.mxu0 0.0
        %1984 = vmatpush2.msra.mxu0 0.0
        %1985 = vmatprep.subr.mxu0 0.0
        %1986 = vmatpush2.msra.mxu0 0.0
        %1987 = vmatprep.subr.mxu0 0.0
        %1988 = vmatpush2.msra.mxu0 0.0
        %1989 = vmatprep.subr.mxu0 0.0
        %1990 = vmatpush2.msra.mxu0 0.0
        %1991 = vmatprep.subr.mxu0 0.0
        %1992 = vmatpush2.msra.mxu0 0.0
        %1993 = vmatprep.subr.mxu0 0.0
        %1994 = vmatpush2.msra.mxu0 0.0
        %1995 = vmatprep.subr.mxu0 0.0
        %1996 = vmatpush2.msra.mxu0 0.0
        %1997 = vmatprep.subr.mxu0 0.0
        %1998 = vmatpush2.msra.mxu0 0.0
        %1999 = vmatprep.subr.mxu0 0.0
        %2000 = vmatpush2.msra.mxu0 0.0
        %2001 = vmatprep.subr.mxu0 0.0
        %2002 = vmatpush2.msra.mxu0 0.0
        %2003 = vmatprep.subr.mxu0 0.0
        %2004 = vmatpush2.msra.mxu0 0.0
        %2005 = vmatprep.subr.mxu0 0.0
        %2006 = vmatpush2.msra.mxu0 0.0
        %2007 = vmatprep.mubr.f32.mxu0 0.0
        %2008 = vmatmul.mubr.f32.gmra.mxu0 %v1926
        %v2009 = vpop.f32.mrf.mxu0
        %v2010 = vadd.f32 0.0, %v2009
        %v2011 = vpop.f32.mrf.mxu0
        %2012 = vmatprep.mubr.f32.mxu0 0.0
        %2013 = vmatmul.mubr.f32.gmra.mxu0 %v1929
        %v2014 = vpop.f32.mrf.mxu0
        %v2015 = vadd.f32 0.0, %v2014
        %v2016 = vpop.f32.mrf.mxu0
        %2017 = vmatprep.mubr.f32.mxu0 0.0
        %2018 = vmatmul.mubr.f32.gmra.mxu0 %v1932
        %v2019 = vpop.f32.mrf.mxu0
        %v2020 = vadd.f32 0.0, %v2019
        %v2021 = vpop.f32.mrf.mxu0
        %2022 = vmatprep.mubr.f32.mxu0 0.0
        %2023 = vmatmul.mubr.f32.gmra.mxu0 %v1935
        %v2024 = vpop.f32.mrf.mxu0
        %v2025 = vadd.f32 0.0, %v2024
        %v2026 = vpop.f32.mrf.mxu0
        %2027 = vmatprep.mubr.f32.mxu0 0.0
        %2028 = vmatmul.mubr.f32.gmra.mxu0 %v1938
        %v2029 = vpop.f32.mrf.mxu0
        %v2030 = vadd.f32 0.0, %v2029
        %v2031 = vpop.f32.mrf.mxu0
        %2032 = vmatprep.mubr.f32.mxu0 0.0
        %2033 = vmatmul.mubr.f32.gmra.mxu0 %v1941
        %v2034 = vpop.f32.mrf.mxu0
        %v2035 = vadd.f32 0.0, %v2034
        %v2036 = vpop.f32.mrf.mxu0
        %2037 = vdwg.mxu0
        %v2038 = vld [vmem:[%s949] sm:$0xff]
        %v2039 = vld [vmem:[%s949 + $0x8] sm:$0xff]
        %s2040 = scalar_lea.vmem %s922, 64
        %v2041 = vld [vmem:[%s2040] sm:$0xff]
        %v2042 = vld [vmem:[%s2040 + $0x8] sm:$0xff]
        %v2043 = vld [vmem:[%s2040 + $0x10] sm:$0xff]
        %v2044 = vld [vmem:[%s2040 + $0x18] sm:$0xff]
        %v2045 = vld [vmem:[%s2040 + $0x20] sm:$0xff]
        %v2046 = vld [vmem:[%s2040 + $0x28] sm:$0xff]
        %v2047 = vld [vmem:[%s2040 + $0x30] sm:$0xff]
        %v2048 = vld [vmem:[%s2040 + $0x38] sm:$0xff]
        %s2049 = scalar_lea.vmem %s936, 1
        %v2050 = vld [vmem:[%s2049] sm:$0x1]
        %v2052 = vlaneseq
        %v2053 = vshrl.u32 %v2052, 7
        %v2054 = vsub.s32 0, %v2053
        %v2055 = vrot.slane %v2050, %v2054
        %2057 = vmatprep.subr.mxu0 0.0
        %2058 = vmatpush1.msra.mxu0 0.0
        %2059 = vmatprep.subr.mxu0 0.0
        %2060 = vmatpush1.msra.mxu0 0.0
        %2061 = vmatprep.subr.mxu0 0.0
        %2062 = vmatpush1.msra.mxu0 0.0
        %2063 = vmatprep.subr.mxu0 0.0
        %2064 = vmatpush1.msra.mxu0 0.0
        %2065 = vmatprep.subr.mxu0 0.0
        %2066 = vmatpush1.msra.mxu0 0.0
        %2067 = vmatprep.subr.mxu0 0.0
        %2068 = vmatpush1.msra.mxu0 0.0
        %2069 = vmatprep.subr.mxu0 0.0
        %2070 = vmatpush1.msra.mxu0 0.0
        %2071 = vmatprep.subr.mxu0 0.0
        %2072 = vmatpush1.msra.mxu0 0.0
        %2073 = vmatprep.subr.mxu0 0.0
        %2074 = vmatpush1.msra.mxu0 %v2048
        %2075 = vmatprep.subr.mxu0 0.0
        %2076 = vmatpush1.msra.mxu0 %v2047
        %2077 = vmatprep.subr.mxu0 0.0
        %2078 = vmatpush1.msra.mxu0 %v2046
        %2079 = vmatprep.subr.mxu0 0.0
        %2080 = vmatpush1.msra.mxu0 %v2045
        %2081 = vmatprep.subr.mxu0 0.0
        %2082 = vmatpush1.msra.mxu0 %v2044
        %2083 = vmatprep.subr.mxu0 0.0
        %2084 = vmatpush1.msra.mxu0 %v2043
        %2085 = vmatprep.subr.mxu0 0.0
        %2086 = vmatpush1.msra.mxu0 %v2042
        %2087 = vmatprep.subr.mxu0 0.0
        %2088 = vmatpush1.msra.mxu0 %v2041
        %2089 = vmatprep.subr.mxu0 0.0
        %2090 = vmatpush2.msra.mxu0 0.0
        %2091 = vmatprep.subr.mxu0 0.0
        %2092 = vmatpush2.msra.mxu0 0.0
        %2093 = vmatprep.subr.mxu0 0.0
        %2094 = vmatpush2.msra.mxu0 0.0
        %2095 = vmatprep.subr.mxu0 0.0
        %2096 = vmatpush2.msra.mxu0 0.0
        %2097 = vmatprep.subr.mxu0 0.0
        %2098 = vmatpush2.msra.mxu0 0.0
        %2099 = vmatprep.subr.mxu0 0.0
        %2100 = vmatpush2.msra.mxu0 0.0
        %2101 = vmatprep.subr.mxu0 0.0
        %2102 = vmatpush2.msra.mxu0 0.0
        %2103 = vmatprep.subr.mxu0 0.0
        %2104 = vmatpush2.msra.mxu0 0.0
        %2105 = vmatprep.subr.mxu0 0.0
        %2106 = vmatpush2.msra.mxu0 0.0
        %2107 = vmatprep.subr.mxu0 0.0
        %2108 = vmatpush2.msra.mxu0 0.0
        %2109 = vmatprep.subr.mxu0 0.0
        %2110 = vmatpush2.msra.mxu0 0.0
        %2111 = vmatprep.subr.mxu0 0.0
        %2112 = vmatpush2.msra.mxu0 0.0
        %2113 = vmatprep.subr.mxu0 0.0
        %2114 = vmatpush2.msra.mxu0 0.0
        %2115 = vmatprep.subr.mxu0 0.0
        %2116 = vmatpush2.msra.mxu0 0.0
        %2117 = vmatprep.subr.mxu0 0.0
        %2118 = vmatpush2.msra.mxu0 0.0
        %2119 = vmatprep.subr.mxu0 0.0
        %2120 = vmatpush2.msra.mxu0 0.0
        %2121 = vmatprep.mubr.f32.mxu0 0.0
        %2122 = vmatmul.mubr.f32.gmra.mxu0 %v1382
        %v2123 = vpop.f32.mrf.mxu0
        %v2124 = vadd.f32 %v2055, %v2123
        %v2125 = vpop.f32.mrf.mxu0
        %2126 = vmatprep.mubr.f32.mxu0 0.0
        %2127 = vmatmul.mubr.f32.gmra.mxu0 %v1385
        %v2128 = vpop.f32.mrf.mxu0
        %v2129 = vadd.f32 %v2055, %v2128
        %v2130 = vpop.f32.mrf.mxu0
        %2131 = vmatprep.mubr.f32.mxu0 0.0
        %2132 = vmatmul.mubr.f32.gmra.mxu0 %v1388
        %v2133 = vpop.f32.mrf.mxu0
        %v2134 = vadd.f32 %v2055, %v2133
        %v2135 = vpop.f32.mrf.mxu0
        %2136 = vmatprep.mubr.f32.mxu0 0.0
        %2137 = vmatmul.mubr.f32.gmra.mxu0 %v1391
        %v2138 = vpop.f32.mrf.mxu0
        %v2139 = vadd.f32 %v2055, %v2138
        %v2140 = vpop.f32.mrf.mxu0
        %2141 = vmatprep.mubr.f32.mxu0 0.0
        %2142 = vmatmul.mubr.f32.gmra.mxu0 %v1394
        %v2143 = vpop.f32.mrf.mxu0
        %v2144 = vadd.f32 %v2055, %v2143
        %v2145 = vpop.f32.mrf.mxu0
        %2146 = vmatprep.mubr.f32.mxu0 0.0
        %2147 = vmatmul.mubr.f32.gmra.mxu0 %v1397
        %v2148 = vpop.f32.mrf.mxu0
        %v2149 = vadd.f32 %v2055, %v2148
        %v2150 = vpop.f32.mrf.mxu0
        %2151 = vdwg.mxu0
        %s2152 = scalar_lea.vmem %s927, 64
        %v2153 = vld [vmem:[%s2152] sm:$0xff]
        %v2154 = vld [vmem:[%s2152 + $0x8] sm:$0xff]
        %v2155 = vld [vmem:[%s2152 + $0x10] sm:$0xff]
        %v2156 = vld [vmem:[%s2152 + $0x18] sm:$0xff]
        %v2157 = vld [vmem:[%s2152 + $0x20] sm:$0xff]
        %v2158 = vld [vmem:[%s2152 + $0x28] sm:$0xff]
        %v2159 = vld [vmem:[%s2152 + $0x30] sm:$0xff]
        %v2160 = vld [vmem:[%s2152 + $0x38] sm:$0xff]
        %s2161 = scalar_lea.vmem %s940, 1
        %v2162 = vld [vmem:[%s2161] sm:$0x1]
        %v2164 = vlaneseq
        %v2165 = vshrl.u32 %v2164, 7
        %v2166 = vsub.s32 0, %v2165
        %v2167 = vrot.slane %v2162, %v2166
        %2169 = vmatprep.subr.mxu0 0.0
        %2170 = vmatpush1.msra.mxu0 0.0
        %2171 = vmatprep.subr.mxu0 0.0
        %2172 = vmatpush1.msra.mxu0 0.0
        %2173 = vmatprep.subr.mxu0 0.0
        %2174 = vmatpush1.msra.mxu0 0.0
        %2175 = vmatprep.subr.mxu0 0.0
        %2176 = vmatpush1.msra.mxu0 0.0
        %2177 = vmatprep.subr.mxu0 0.0
        %2178 = vmatpush1.msra.mxu0 0.0
        %2179 = vmatprep.subr.mxu0 0.0
        %2180 = vmatpush1.msra.mxu0 0.0
        %2181 = vmatprep.subr.mxu0 0.0
        %2182 = vmatpush1.msra.mxu0 0.0
        %2183 = vmatprep.subr.mxu0 0.0
        %2184 = vmatpush1.msra.mxu0 0.0
        %2185 = vmatprep.subr.mxu0 0.0
        %2186 = vmatpush1.msra.mxu0 %v2160
        %2187 = vmatprep.subr.mxu0 0.0
        %2188 = vmatpush1.msra.mxu0 %v2159
        %2189 = vmatprep.subr.mxu0 0.0
        %2190 = vmatpush1.msra.mxu0 %v2158
        %2191 = vmatprep.subr.mxu0 0.0
        %2192 = vmatpush1.msra.mxu0 %v2157
        %2193 = vmatprep.subr.mxu0 0.0
        %2194 = vmatpush1.msra.mxu0 %v2156
        %2195 = vmatprep.subr.mxu0 0.0
        %2196 = vmatpush1.msra.mxu0 %v2155
        %2197 = vmatprep.subr.mxu0 0.0
        %2198 = vmatpush1.msra.mxu0 %v2154
        %2199 = vmatprep.subr.mxu0 0.0
        %2200 = vmatpush1.msra.mxu0 %v2153
        %2201 = vmatprep.subr.mxu0 0.0
        %2202 = vmatpush2.msra.mxu0 0.0
        %2203 = vmatprep.subr.mxu0 0.0
        %2204 = vmatpush2.msra.mxu0 0.0
        %2205 = vmatprep.subr.mxu0 0.0
        %2206 = vmatpush2.msra.mxu0 0.0
        %2207 = vmatprep.subr.mxu0 0.0
        %2208 = vmatpush2.msra.mxu0 0.0
        %2209 = vmatprep.subr.mxu0 0.0
        %2210 = vmatpush2.msra.mxu0 0.0
        %2211 = vmatprep.subr.mxu0 0.0
        %2212 = vmatpush2.msra.mxu0 0.0
        %2213 = vmatprep.subr.mxu0 0.0
        %2214 = vmatpush2.msra.mxu0 0.0
        %2215 = vmatprep.subr.mxu0 0.0
        %2216 = vmatpush2.msra.mxu0 0.0
        %2217 = vmatprep.subr.mxu0 0.0
        %2218 = vmatpush2.msra.mxu0 0.0
        %2219 = vmatprep.subr.mxu0 0.0
        %2220 = vmatpush2.msra.mxu0 0.0
        %2221 = vmatprep.subr.mxu0 0.0
        %2222 = vmatpush2.msra.mxu0 0.0
        %2223 = vmatprep.subr.mxu0 0.0
        %2224 = vmatpush2.msra.mxu0 0.0
        %2225 = vmatprep.subr.mxu0 0.0
        %2226 = vmatpush2.msra.mxu0 0.0
        %2227 = vmatprep.subr.mxu0 0.0
        %2228 = vmatpush2.msra.mxu0 0.0
        %2229 = vmatprep.subr.mxu0 0.0
        %2230 = vmatpush2.msra.mxu0 0.0
        %2231 = vmatprep.subr.mxu0 0.0
        %2232 = vmatpush2.msra.mxu0 0.0
        %2233 = vmatprep.mubr.f32.mxu0 0.0
        %2234 = vmatmul.mubr.f32.gmra.mxu0 %v1382
        %v2235 = vpop.f32.mrf.mxu0
        %v2236 = vadd.f32 %v2167, %v2235
        %v2237 = vpop.f32.mrf.mxu0
        %2238 = vmatprep.mubr.f32.mxu0 0.0
        %2239 = vmatmul.mubr.f32.gmra.mxu0 %v1385
        %v2240 = vpop.f32.mrf.mxu0
        %v2241 = vadd.f32 %v2167, %v2240
        %v2242 = vpop.f32.mrf.mxu0
        %2243 = vmatprep.mubr.f32.mxu0 0.0
        %2244 = vmatmul.mubr.f32.gmra.mxu0 %v1388
        %v2245 = vpop.f32.mrf.mxu0
        %v2246 = vadd.f32 %v2167, %v2245
        %v2247 = vpop.f32.mrf.mxu0
        %2248 = vmatprep.mubr.f32.mxu0 0.0
        %2249 = vmatmul.mubr.f32.gmra.mxu0 %v1391
        %v2250 = vpop.f32.mrf.mxu0
        %v2251 = vadd.f32 %v2167, %v2250
        %v2252 = vpop.f32.mrf.mxu0
        %2253 = vmatprep.mubr.f32.mxu0 0.0
        %2254 = vmatmul.mubr.f32.gmra.mxu0 %v1394
        %v2255 = vpop.f32.mrf.mxu0
        %v2256 = vadd.f32 %v2167, %v2255
        %v2257 = vpop.f32.mrf.mxu0
        %2258 = vmatprep.mubr.f32.mxu0 0.0
        %2259 = vmatmul.mubr.f32.gmra.mxu0 %v1397
        %v2260 = vpop.f32.mrf.mxu0
        %v2261 = vadd.f32 %v2167, %v2260
        %v2262 = vpop.f32.mrf.mxu0
        %2263 = vdwg.mxu0
        %s2264 = scalar_lea.vmem %s932, 64
        %v2265 = vld [vmem:[%s2264] sm:$0xff]
        %v2266 = vld [vmem:[%s2264 + $0x8] sm:$0xff]
        %v2267 = vld [vmem:[%s2264 + $0x10] sm:$0xff]
        %v2268 = vld [vmem:[%s2264 + $0x18] sm:$0xff]
        %v2269 = vld [vmem:[%s2264 + $0x20] sm:$0xff]
        %v2270 = vld [vmem:[%s2264 + $0x28] sm:$0xff]
        %v2271 = vld [vmem:[%s2264 + $0x30] sm:$0xff]
        %v2272 = vld [vmem:[%s2264 + $0x38] sm:$0xff]
        %s2273 = scalar_lea.vmem %s944, 1
        %v2274 = vld [vmem:[%s2273] sm:$0x1]
        %v2276 = vlaneseq
        %v2277 = vshrl.u32 %v2276, 7
        %v2278 = vsub.s32 0, %v2277
        %v2279 = vrot.slane %v2274, %v2278
        %2281 = vmatprep.subr.mxu0 0.0
        %2282 = vmatpush1.msra.mxu0 0.0
        %2283 = vmatprep.subr.mxu0 0.0
        %2284 = vmatpush1.msra.mxu0 0.0
        %2285 = vmatprep.subr.mxu0 0.0
        %2286 = vmatpush1.msra.mxu0 0.0
        %2287 = vmatprep.subr.mxu0 0.0
        %2288 = vmatpush1.msra.mxu0 0.0
        %2289 = vmatprep.subr.mxu0 0.0
        %2290 = vmatpush1.msra.mxu0 0.0
        %2291 = vmatprep.subr.mxu0 0.0
        %2292 = vmatpush1.msra.mxu0 0.0
        %2293 = vmatprep.subr.mxu0 0.0
        %2294 = vmatpush1.msra.mxu0 0.0
        %2295 = vmatprep.subr.mxu0 0.0
        %2296 = vmatpush1.msra.mxu0 0.0
        %2297 = vmatprep.subr.mxu0 0.0
        %2298 = vmatpush1.msra.mxu0 %v2272
        %2299 = vmatprep.subr.mxu0 0.0
        %2300 = vmatpush1.msra.mxu0 %v2271
        %2301 = vmatprep.subr.mxu0 0.0
        %2302 = vmatpush1.msra.mxu0 %v2270
        %2303 = vmatprep.subr.mxu0 0.0
        %2304 = vmatpush1.msra.mxu0 %v2269
        %2305 = vmatprep.subr.mxu0 0.0
        %2306 = vmatpush1.msra.mxu0 %v2268
        %2307 = vmatprep.subr.mxu0 0.0
        %2308 = vmatpush1.msra.mxu0 %v2267
        %2309 = vmatprep.subr.mxu0 0.0
        %2310 = vmatpush1.msra.mxu0 %v2266
        %2311 = vmatprep.subr.mxu0 0.0
        %2312 = vmatpush1.msra.mxu0 %v2265
        %2313 = vmatprep.subr.mxu0 0.0
        %2314 = vmatpush2.msra.mxu0 0.0
        %2315 = vmatprep.subr.mxu0 0.0
        %2316 = vmatpush2.msra.mxu0 0.0
        %2317 = vmatprep.subr.mxu0 0.0
        %2318 = vmatpush2.msra.mxu0 0.0
        %2319 = vmatprep.subr.mxu0 0.0
        %2320 = vmatpush2.msra.mxu0 0.0
        %2321 = vmatprep.subr.mxu0 0.0
        %2322 = vmatpush2.msra.mxu0 0.0
        %2323 = vmatprep.subr.mxu0 0.0
        %2324 = vmatpush2.msra.mxu0 0.0
        %2325 = vmatprep.subr.mxu0 0.0
        %2326 = vmatpush2.msra.mxu0 0.0
        %2327 = vmatprep.subr.mxu0 0.0
        %2328 = vmatpush2.msra.mxu0 0.0
        %2329 = vmatprep.subr.mxu0 0.0
        %2330 = vmatpush2.msra.mxu0 0.0
        %2331 = vmatprep.subr.mxu0 0.0
        %2332 = vmatpush2.msra.mxu0 0.0
        %2333 = vmatprep.subr.mxu0 0.0
        %2334 = vmatpush2.msra.mxu0 0.0
        %2335 = vmatprep.subr.mxu0 0.0
        %2336 = vmatpush2.msra.mxu0 0.0
        %2337 = vmatprep.subr.mxu0 0.0
        %2338 = vmatpush2.msra.mxu0 0.0
        %2339 = vmatprep.subr.mxu0 0.0
        %2340 = vmatpush2.msra.mxu0 0.0
        %2341 = vmatprep.subr.mxu0 0.0
        %2342 = vmatpush2.msra.mxu0 0.0
        %2343 = vmatprep.subr.mxu0 0.0
        %2344 = vmatpush2.msra.mxu0 0.0
        %2345 = vmatprep.mubr.f32.mxu0 0.0
        %2346 = vmatmul.mubr.f32.gmra.mxu0 %v1382
        %v2347 = vpop.f32.mrf.mxu0
        %v2348 = vadd.f32 %v2279, %v2347
        %v2349 = vpop.f32.mrf.mxu0
        %2350 = vmatprep.mubr.f32.mxu0 0.0
        %2351 = vmatmul.mubr.f32.gmra.mxu0 %v1385
        %v2352 = vpop.f32.mrf.mxu0
        %v2353 = vadd.f32 %v2279, %v2352
        %v2354 = vpop.f32.mrf.mxu0
        %2355 = vmatprep.mubr.f32.mxu0 0.0
        %2356 = vmatmul.mubr.f32.gmra.mxu0 %v1388
        %v2357 = vpop.f32.mrf.mxu0
        %v2358 = vadd.f32 %v2279, %v2357
        %v2359 = vpop.f32.mrf.mxu0
        %2360 = vmatprep.mubr.f32.mxu0 0.0
        %2361 = vmatmul.mubr.f32.gmra.mxu0 %v1391
        %v2362 = vpop.f32.mrf.mxu0
        %v2363 = vadd.f32 %v2279, %v2362
        %v2364 = vpop.f32.mrf.mxu0
        %2365 = vmatprep.mubr.f32.mxu0 0.0
        %2366 = vmatmul.mubr.f32.gmra.mxu0 %v1394
        %v2367 = vpop.f32.mrf.mxu0
        %v2368 = vadd.f32 %v2279, %v2367
        %v2369 = vpop.f32.mrf.mxu0
        %2370 = vmatprep.mubr.f32.mxu0 0.0
        %2371 = vmatmul.mubr.f32.gmra.mxu0 %v1397
        %v2372 = vpop.f32.mrf.mxu0
        %v2373 = vadd.f32 %v2279, %v2372
        %v2374 = vpop.f32.mrf.mxu0
        %2375 = vdwg.mxu0
        %v2377 = vsel %vm1714, %v2124, 0
        %v2380 = vsel %vm1714, %v2129, 0
        %v2383 = vsel %vm1714, %v2134, 0
        %v2386 = vsel %vm1714, %v2139, 0
        %v2389 = vsel %vm1714, %v2144, 0
        %v2392 = vsel %vm1714, %v2149, 0
        %v2395 = vsel %vm1714, %v2236, 0
        %v2398 = vsel %vm1714, %v2241, 0
        %v2401 = vsel %vm1714, %v2246, 0
        %v2404 = vsel %vm1714, %v2251, 0
        %v2407 = vsel %vm1714, %v2256, 0
        %v2410 = vsel %vm1714, %v2261, 0
        %2412 = vmatprep.subr.mxu0 0.0
        %2413 = vmatpush1.xpose.msra.mxu0 0.0
        %2414 = vmatprep.subr.mxu0 0.0
        %2415 = vmatpush1.xpose.msra.mxu0 0.0
        %2416 = vmatprep.subr.mxu0 0.0
        %2417 = vmatpush1.xpose.msra.mxu0 0.0
        %2418 = vmatprep.subr.mxu0 0.0
        %2419 = vmatpush1.xpose.msra.mxu0 0.0
        %2420 = vmatprep.subr.mxu0 0.0
        %2421 = vmatpush1.xpose.msra.mxu0 0.0
        %2422 = vmatprep.subr.mxu0 0.0
        %2423 = vmatpush1.xpose.msra.mxu0 0.0
        %2424 = vmatprep.subr.mxu0 0.0
        %2425 = vmatpush1.xpose.msra.mxu0 0.0
        %2426 = vmatprep.subr.mxu0 0.0
        %2427 = vmatpush1.xpose.msra.mxu0 0.0
        %2428 = vmatprep.subr.mxu0 0.0
        %2429 = vmatpush1.xpose.msra.mxu0 0.0
        %2430 = vmatprep.subr.mxu0 0.0
        %2431 = vmatpush1.xpose.msra.mxu0 0.0
        %2432 = vmatprep.subr.mxu0 0.0
        %2433 = vmatpush1.xpose.msra.mxu0 %v2410
        %2434 = vmatprep.subr.mxu0 0.0
        %2435 = vmatpush1.xpose.msra.mxu0 %v2407
        %2436 = vmatprep.subr.mxu0 0.0
        %2437 = vmatpush1.xpose.msra.mxu0 %v2404
        %2438 = vmatprep.subr.mxu0 0.0
        %2439 = vmatpush1.xpose.msra.mxu0 %v2401
        %2440 = vmatprep.subr.mxu0 0.0
        %2441 = vmatpush1.xpose.msra.mxu0 %v2398
        %2442 = vmatprep.subr.mxu0 0.0
        %2443 = vmatpush1.xpose.msra.mxu0 %v2395
        %2444 = vmatprep.subr.mxu0 0.0
        %2445 = vmatpush2.xpose.msra.mxu0 0.0
        %2446 = vmatprep.subr.mxu0 0.0
        %2447 = vmatpush2.xpose.msra.mxu0 0.0
        %2448 = vmatprep.subr.mxu0 0.0
        %2449 = vmatpush2.xpose.msra.mxu0 0.0
        %2450 = vmatprep.subr.mxu0 0.0
        %2451 = vmatpush2.xpose.msra.mxu0 0.0
        %2452 = vmatprep.subr.mxu0 0.0
        %2453 = vmatpush2.xpose.msra.mxu0 0.0
        %2454 = vmatprep.subr.mxu0 0.0
        %2455 = vmatpush2.xpose.msra.mxu0 0.0
        %2456 = vmatprep.subr.mxu0 0.0
        %2457 = vmatpush2.xpose.msra.mxu0 0.0
        %2458 = vmatprep.subr.mxu0 0.0
        %2459 = vmatpush2.xpose.msra.mxu0 0.0
        %2460 = vmatprep.subr.mxu0 0.0
        %2461 = vmatpush2.xpose.msra.mxu0 0.0
        %2462 = vmatprep.subr.mxu0 0.0
        %2463 = vmatpush2.xpose.msra.mxu0 0.0
        %2464 = vmatprep.subr.mxu0 0.0
        %2465 = vmatpush2.xpose.msra.mxu0 0.0
        %2466 = vmatprep.subr.mxu0 0.0
        %2467 = vmatpush2.xpose.msra.mxu0 0.0
        %2468 = vmatprep.subr.mxu0 0.0
        %2469 = vmatpush2.xpose.msra.mxu0 0.0
        %2470 = vmatprep.subr.mxu0 0.0
        %2471 = vmatpush2.xpose.msra.mxu0 0.0
        %2472 = vmatprep.subr.mxu0 0.0
        %2473 = vmatpush2.xpose.msra.mxu0 0.0
        %2474 = vmatprep.subr.mxu0 0.0
        %2475 = vmatpush2.xpose.msra.mxu0 0.0
        %2476 = vmatprep.mubr.f32.mxu0 0.0
        %2477 = vmatmul.mubr.f32.gmra.mxu0 %v2377
        %v2478 = vpop.f32.mrf.mxu0
        %v2479 = vadd.f32 0.0, %v2478
        %v2480 = vpop.f32.mrf.mxu0
        %2481 = vmatprep.mubr.f32.mxu0 0.0
        %2482 = vmatmul.mubr.f32.gmra.mxu0 %v2380
        %v2483 = vpop.f32.mrf.mxu0
        %v2484 = vadd.f32 0.0, %v2483
        %v2485 = vpop.f32.mrf.mxu0
        %2486 = vmatprep.mubr.f32.mxu0 0.0
        %2487 = vmatmul.mubr.f32.gmra.mxu0 %v2383
        %v2488 = vpop.f32.mrf.mxu0
        %v2489 = vadd.f32 0.0, %v2488
        %v2490 = vpop.f32.mrf.mxu0
        %2491 = vmatprep.mubr.f32.mxu0 0.0
        %2492 = vmatmul.mubr.f32.gmra.mxu0 %v2386
        %v2493 = vpop.f32.mrf.mxu0
        %v2494 = vadd.f32 0.0, %v2493
        %v2495 = vpop.f32.mrf.mxu0
        %2496 = vmatprep.mubr.f32.mxu0 0.0
        %2497 = vmatmul.mubr.f32.gmra.mxu0 %v2389
        %v2498 = vpop.f32.mrf.mxu0
        %v2499 = vadd.f32 0.0, %v2498
        %v2500 = vpop.f32.mrf.mxu0
        %2501 = vmatprep.mubr.f32.mxu0 0.0
        %2502 = vmatmul.mubr.f32.gmra.mxu0 %v2392
        %v2503 = vpop.f32.mrf.mxu0
        %v2504 = vadd.f32 0.0, %v2503
        %v2505 = vpop.f32.mrf.mxu0
        %2506 = vdwg.mxu0
        %v2507 = vmul.f32 %v2479, 0.25
        %v2508 = vmul.f32 %v2484, 0.25
        %v2509 = vmul.f32 %v2489, 0.25
        %v2510 = vmul.f32 %v2494, 0.25
        %v2511 = vmul.f32 %v2499, 0.25
        %v2512 = vmul.f32 %v2504, 0.25
        %v2513 = vadd.f32 %v2507, %v1360
        %v2514 = vadd.f32 %v2508, %v1361
        %v2515 = vadd.f32 %v2509, %v1362
        %v2516 = vadd.f32 %v2510, %v1363
        %v2517 = vadd.f32 %v2511, %v1364
        %v2518 = vadd.f32 %v2512, %v1365
        %v2519 = vsel %vm1858, %v2513, -inf
        %2520 = vmax.xlane.f32.xlu0 %v2519
        %v2521 = vpop.xlane.xlu0 %2520
        %v2522 = vsel %vm1858, %v2514, -inf
        %2523 = vmax.xlane.f32.xlu0 %v2522
        %v2524 = vpop.xlane.xlu0 %2523
        %v2525 = vsel %vm1858, %v2515, -inf
        %2526 = vmax.xlane.f32.xlu0 %v2525
        %v2527 = vpop.xlane.xlu0 %2526
        %v2528 = vsel %vm1858, %v2516, -inf
        %2529 = vmax.xlane.f32.xlu0 %v2528
        %v2530 = vpop.xlane.xlu0 %2529
        %v2531 = vsel %vm1858, %v2517, -inf
        %2532 = vmax.xlane.f32.xlu0 %v2531
        %v2533 = vpop.xlane.xlu0 %2532
        %v2534 = vsel %vm1858, %v2518, -inf
        %2535 = vmax.xlane.f32.xlu0 %v2534
        %v2536 = vpop.xlane.xlu0 %2535
        %v2537 = vsub.f32 %v2513, %v2521
        %v2538 = vsub.f32 %v2514, %v2524
        %v2539 = vsub.f32 %v2515, %v2527
        %v2540 = vsub.f32 %v2516, %v2530
        %v2541 = vsub.f32 %v2517, %v2533
        %v2542 = vsub.f32 %v2518, %v2536
        %v2543 = vmul.f32 %v2537, 1.442695
        %v2544 = vpow.pop %v2543
        %v2545 = vmul.f32 %v2538, 1.442695
        %v2546 = vpow.pop %v2545
        %v2547 = vmul.f32 %v2539, 1.442695
        %v2548 = vpow.pop %v2547
        %v2549 = vmul.f32 %v2540, 1.442695
        %v2550 = vpow.pop %v2549
        %v2551 = vmul.f32 %v2541, 1.442695
        %v2552 = vpow.pop %v2551
        %v2553 = vmul.f32 %v2542, 1.442695
        %v2554 = vpow.pop %v2553
        %v2555 = vsel %vm1858, %v2544, 0.0
        %2556 = vadd.xlane.f32.xlu0 %v2555
        %v2557 = vpop.xlane.xlu0 %2556
        %v2558 = vsel %vm1858, %v2546, 0.0
        %2559 = vadd.xlane.f32.xlu0 %v2558
        %v2560 = vpop.xlane.xlu0 %2559
        %v2561 = vsel %vm1858, %v2548, 0.0
        %2562 = vadd.xlane.f32.xlu0 %v2561
        %v2563 = vpop.xlane.xlu0 %2562
        %v2564 = vsel %vm1858, %v2550, 0.0
        %2565 = vadd.xlane.f32.xlu0 %v2564
        %v2566 = vpop.xlane.xlu0 %2565
        %v2567 = vsel %vm1858, %v2552, 0.0
        %2568 = vadd.xlane.f32.xlu0 %v2567
        %v2569 = vpop.xlane.xlu0 %2568
        %v2570 = vsel %vm1858, %v2554, 0.0
        %2571 = vadd.xlane.f32.xlu0 %v2570
        %v2572 = vpop.xlane.xlu0 %2571
        %v2573 = vrcp.pop %v2557
        %v2574 = vmul.f32 %v2544, %v2573
        %v2575 = vrcp.pop %v2560
        %v2576 = vmul.f32 %v2546, %v2575
        %v2577 = vrcp.pop %v2563
        %v2578 = vmul.f32 %v2548, %v2577
        %v2579 = vrcp.pop %v2566
        %v2580 = vmul.f32 %v2550, %v2579
        %v2581 = vrcp.pop %v2569
        %v2582 = vmul.f32 %v2552, %v2581
        %v2583 = vrcp.pop %v2572
        %v2584 = vmul.f32 %v2554, %v2583
        %v2586 = vsel %vm1858, %v2574, 0
        %v2589 = vsel %vm1858, %v2576, 0
        %v2592 = vsel %vm1858, %v2578, 0
        %v2595 = vsel %vm1858, %v2580, 0
        %v2598 = vsel %vm1858, %v2582, 0
        %v2601 = vsel %vm1858, %v2584, 0
        %2603 = vmatprep.subr.mxu0 0.0
        %2604 = vmatpush1.msra.mxu0 0.0
        %2605 = vmatprep.subr.mxu0 0.0
        %2606 = vmatpush1.msra.mxu0 0.0
        %2607 = vmatprep.subr.mxu0 0.0
        %2608 = vmatpush1.msra.mxu0 0.0
        %2609 = vmatprep.subr.mxu0 0.0
        %2610 = vmatpush1.msra.mxu0 0.0
        %2611 = vmatprep.subr.mxu0 0.0
        %2612 = vmatpush1.msra.mxu0 0.0
        %2613 = vmatprep.subr.mxu0 0.0
        %2614 = vmatpush1.msra.mxu0 0.0
        %2615 = vmatprep.subr.mxu0 0.0
        %2616 = vmatpush1.msra.mxu0 0.0
        %2617 = vmatprep.subr.mxu0 0.0
        %2618 = vmatpush1.msra.mxu0 0.0
        %2619 = vmatprep.subr.mxu0 0.0
        %2620 = vmatpush1.msra.mxu0 0.0
        %2621 = vmatprep.subr.mxu0 0.0
        %2622 = vmatpush1.msra.mxu0 0.0
        %2623 = vmatprep.subr.mxu0 0.0
        %2624 = vmatpush1.msra.mxu0 %v2373
        %2625 = vmatprep.subr.mxu0 0.0
        %2626 = vmatpush1.msra.mxu0 %v2368
        %2627 = vmatprep.subr.mxu0 0.0
        %2628 = vmatpush1.msra.mxu0 %v2363
        %2629 = vmatprep.subr.mxu0 0.0
        %2630 = vmatpush1.msra.mxu0 %v2358
        %2631 = vmatprep.subr.mxu0 0.0
        %2632 = vmatpush1.msra.mxu0 %v2353
        %2633 = vmatprep.subr.mxu0 0.0
        %2634 = vmatpush1.msra.mxu0 %v2348
        %2635 = vmatprep.subr.mxu0 0.0
        %2636 = vmatpush2.msra.mxu0 0.0
        %2637 = vmatprep.subr.mxu0 0.0
        %2638 = vmatpush2.msra.mxu0 0.0
        %2639 = vmatprep.subr.mxu0 0.0
        %2640 = vmatpush2.msra.mxu0 0.0
        %2641 = vmatprep.subr.mxu0 0.0
        %2642 = vmatpush2.msra.mxu0 0.0
        %2643 = vmatprep.subr.mxu0 0.0
        %2644 = vmatpush2.msra.mxu0 0.0
        %2645 = vmatprep.subr.mxu0 0.0
        %2646 = vmatpush2.msra.mxu0 0.0
        %2647 = vmatprep.subr.mxu0 0.0
        %2648 = vmatpush2.msra.mxu0 0.0
        %2649 = vmatprep.subr.mxu0 0.0
        %2650 = vmatpush2.msra.mxu0 0.0
        %2651 = vmatprep.subr.mxu0 0.0
        %2652 = vmatpush2.msra.mxu0 0.0
        %2653 = vmatprep.subr.mxu0 0.0
        %2654 = vmatpush2.msra.mxu0 0.0
        %2655 = vmatprep.subr.mxu0 0.0
        %2656 = vmatpush2.msra.mxu0 0.0
        %2657 = vmatprep.subr.mxu0 0.0
        %2658 = vmatpush2.msra.mxu0 0.0
        %2659 = vmatprep.subr.mxu0 0.0
        %2660 = vmatpush2.msra.mxu0 0.0
        %2661 = vmatprep.subr.mxu0 0.0
        %2662 = vmatpush2.msra.mxu0 0.0
        %2663 = vmatprep.subr.mxu0 0.0
        %2664 = vmatpush2.msra.mxu0 0.0
        %2665 = vmatprep.subr.mxu0 0.0
        %2666 = vmatpush2.msra.mxu0 0.0
        %2667 = vmatprep.mubr.f32.mxu0 0.0
        %2668 = vmatmul.mubr.f32.gmra.mxu0 %v2586
        %v2669 = vpop.f32.mrf.mxu0
        %v2670 = vadd.f32 0.0, %v2669
        %v2671 = vpop.f32.mrf.mxu0
        %2672 = vmatprep.mubr.f32.mxu0 0.0
        %2673 = vmatmul.mubr.f32.gmra.mxu0 %v2589
        %v2674 = vpop.f32.mrf.mxu0
        %v2675 = vadd.f32 0.0, %v2674
        %v2676 = vpop.f32.mrf.mxu0
        %2677 = vmatprep.mubr.f32.mxu0 0.0
        %2678 = vmatmul.mubr.f32.gmra.mxu0 %v2592
        %v2679 = vpop.f32.mrf.mxu0
        %v2680 = vadd.f32 0.0, %v2679
        %v2681 = vpop.f32.mrf.mxu0
        %2682 = vmatprep.mubr.f32.mxu0 0.0
        %2683 = vmatmul.mubr.f32.gmra.mxu0 %v2595
        %v2684 = vpop.f32.mrf.mxu0
        %v2685 = vadd.f32 0.0, %v2684
        %v2686 = vpop.f32.mrf.mxu0
        %2687 = vmatprep.mubr.f32.mxu0 0.0
        %2688 = vmatmul.mubr.f32.gmra.mxu0 %v2598
        %v2689 = vpop.f32.mrf.mxu0
        %v2690 = vadd.f32 0.0, %v2689
        %v2691 = vpop.f32.mrf.mxu0
        %2692 = vmatprep.mubr.f32.mxu0 0.0
        %2693 = vmatmul.mubr.f32.gmra.mxu0 %v2601
        %v2694 = vpop.f32.mrf.mxu0
        %v2695 = vadd.f32 0.0, %v2694
        %v2696 = vpop.f32.mrf.mxu0
        %2697 = vdwg.mxu0
        %s2698 = scalar_lea.vmem %s949, 16
        %v2699 = vld [vmem:[%s2698] sm:$0xff]
        %v2700 = vld [vmem:[%s2698 + $0x8] sm:$0xff]
        %v2702 = vsel %vm1714, %v2670, 0
        %v2705 = vsel %vm1714, %v2675, 0
        %v2708 = vsel %vm1714, %v2680, 0
        %v2711 = vsel %vm1714, %v2685, 0
        %v2714 = vsel %vm1714, %v2690, 0
        %v2717 = vsel %vm1714, %v2695, 0
        %2719 = vmatprep.subr.mxu0 0.0
        %2720 = vmatpush1.msra.mxu0 0.0
        %2721 = vmatprep.subr.mxu0 0.0
        %2722 = vmatpush1.msra.mxu0 0.0
        %2723 = vmatprep.subr.mxu0 0.0
        %2724 = vmatpush1.msra.mxu0 0.0
        %2725 = vmatprep.subr.mxu0 0.0
        %2726 = vmatpush1.msra.mxu0 0.0
        %2727 = vmatprep.subr.mxu0 0.0
        %2728 = vmatpush1.msra.mxu0 0.0
        %2729 = vmatprep.subr.mxu0 0.0
        %2730 = vmatpush1.msra.mxu0 0.0
        %2731 = vmatprep.subr.mxu0 0.0
        %2732 = vmatpush1.msra.mxu0 0.0
        %2733 = vmatprep.subr.mxu0 0.0
        %2734 = vmatpush1.msra.mxu0 0.0
        %2735 = vmatprep.subr.mxu0 0.0
        %2736 = vmatpush1.msra.mxu0 0.0
        %2737 = vmatprep.subr.mxu0 0.0
        %2738 = vmatpush1.msra.mxu0 0.0
        %2739 = vmatprep.subr.mxu0 0.0
        %2740 = vmatpush1.msra.mxu0 0.0
        %2741 = vmatprep.subr.mxu0 0.0
        %2742 = vmatpush1.msra.mxu0 0.0
        %2743 = vmatprep.subr.mxu0 0.0
        %2744 = vmatpush1.msra.mxu0 0.0
        %2745 = vmatprep.subr.mxu0 0.0
        %2746 = vmatpush1.msra.mxu0 0.0
        %2747 = vmatprep.subr.mxu0 0.0
        %2748 = vmatpush1.msra.mxu0 %v2700
        %2749 = vmatprep.subr.mxu0 0.0
        %2750 = vmatpush1.msra.mxu0 %v2699
        %2751 = vmatprep.subr.mxu0 0.0
        %2752 = vmatpush2.msra.mxu0 0.0
        %2753 = vmatprep.subr.mxu0 0.0
        %2754 = vmatpush2.msra.mxu0 0.0
        %2755 = vmatprep.subr.mxu0 0.0
        %2756 = vmatpush2.msra.mxu0 0.0
        %2757 = vmatprep.subr.mxu0 0.0
        %2758 = vmatpush2.msra.mxu0 0.0
        %2759 = vmatprep.subr.mxu0 0.0
        %2760 = vmatpush2.msra.mxu0 0.0
        %2761 = vmatprep.subr.mxu0 0.0
        %2762 = vmatpush2.msra.mxu0 0.0
        %2763 = vmatprep.subr.mxu0 0.0
        %2764 = vmatpush2.msra.mxu0 0.0
        %2765 = vmatprep.subr.mxu0 0.0
        %2766 = vmatpush2.msra.mxu0 0.0
        %2767 = vmatprep.subr.mxu0 0.0
        %2768 = vmatpush2.msra.mxu0 0.0
        %2769 = vmatprep.subr.mxu0 0.0
        %2770 = vmatpush2.msra.mxu0 0.0
        %2771 = vmatprep.subr.mxu0 0.0
        %2772 = vmatpush2.msra.mxu0 0.0
        %2773 = vmatprep.subr.mxu0 0.0
        %2774 = vmatpush2.msra.mxu0 0.0
        %2775 = vmatprep.subr.mxu0 0.0
        %2776 = vmatpush2.msra.mxu0 0.0
        %2777 = vmatprep.subr.mxu0 0.0
        %2778 = vmatpush2.msra.mxu0 0.0
        %2779 = vmatprep.subr.mxu0 0.0
        %2780 = vmatpush2.msra.mxu0 0.0
        %2781 = vmatprep.subr.mxu0 0.0
        %2782 = vmatpush2.msra.mxu0 0.0
        %2783 = vmatprep.mubr.f32.mxu0 0.0
        %2784 = vmatmul.mubr.f32.gmra.mxu0 %v2702
        %v2785 = vpop.f32.mrf.mxu0
        %v2786 = vadd.f32 0.0, %v2785
        %v2787 = vpop.f32.mrf.mxu0
        %2788 = vmatprep.mubr.f32.mxu0 0.0
        %2789 = vmatmul.mubr.f32.gmra.mxu0 %v2705
        %v2790 = vpop.f32.mrf.mxu0
        %v2791 = vadd.f32 0.0, %v2790
        %v2792 = vpop.f32.mrf.mxu0
        %2793 = vmatprep.mubr.f32.mxu0 0.0
        %2794 = vmatmul.mubr.f32.gmra.mxu0 %v2708
        %v2795 = vpop.f32.mrf.mxu0
        %v2796 = vadd.f32 0.0, %v2795
        %v2797 = vpop.f32.mrf.mxu0
        %2798 = vmatprep.mubr.f32.mxu0 0.0
        %2799 = vmatmul.mubr.f32.gmra.mxu0 %v2711
        %v2800 = vpop.f32.mrf.mxu0
        %v2801 = vadd.f32 0.0, %v2800
        %v2802 = vpop.f32.mrf.mxu0
        %2803 = vmatprep.mubr.f32.mxu0 0.0
        %2804 = vmatmul.mubr.f32.gmra.mxu0 %v2714
        %v2805 = vpop.f32.mrf.mxu0
        %v2806 = vadd.f32 0.0, %v2805
        %v2807 = vpop.f32.mrf.mxu0
        %2808 = vmatprep.mubr.f32.mxu0 0.0
        %2809 = vmatmul.mubr.f32.gmra.mxu0 %v2717
        %v2810 = vpop.f32.mrf.mxu0
        %v2811 = vadd.f32 0.0, %v2810
        %v2812 = vpop.f32.mrf.mxu0
        %2813 = vdwg.mxu0
        %v2815 = vsel %vm1714, %v2010, 0
        %v2818 = vsel %vm1714, %v2015, 0
        %v2821 = vsel %vm1714, %v2020, 0
        %v2824 = vsel %vm1714, %v2025, 0
        %v2827 = vsel %vm1714, %v2030, 0
        %v2830 = vsel %vm1714, %v2035, 0
        %2832 = vmatprep.subr.mxu0 0.0
        %2833 = vmatpush1.msra.mxu0 0.0
        %2834 = vmatprep.subr.mxu0 0.0
        %2835 = vmatpush1.msra.mxu0 0.0
        %2836 = vmatprep.subr.mxu0 0.0
        %2837 = vmatpush1.msra.mxu0 0.0
        %2838 = vmatprep.subr.mxu0 0.0
        %2839 = vmatpush1.msra.mxu0 0.0
        %2840 = vmatprep.subr.mxu0 0.0
        %2841 = vmatpush1.msra.mxu0 0.0
        %2842 = vmatprep.subr.mxu0 0.0
        %2843 = vmatpush1.msra.mxu0 0.0
        %2844 = vmatprep.subr.mxu0 0.0
        %2845 = vmatpush1.msra.mxu0 0.0
        %2846 = vmatprep.subr.mxu0 0.0
        %2847 = vmatpush1.msra.mxu0 0.0
        %2848 = vmatprep.subr.mxu0 0.0
        %2849 = vmatpush1.msra.mxu0 0.0
        %2850 = vmatprep.subr.mxu0 0.0
        %2851 = vmatpush1.msra.mxu0 0.0
        %2852 = vmatprep.subr.mxu0 0.0
        %2853 = vmatpush1.msra.mxu0 0.0
        %2854 = vmatprep.subr.mxu0 0.0
        %2855 = vmatpush1.msra.mxu0 0.0
        %2856 = vmatprep.subr.mxu0 0.0
        %2857 = vmatpush1.msra.mxu0 0.0
        %2858 = vmatprep.subr.mxu0 0.0
        %2859 = vmatpush1.msra.mxu0 0.0
        %2860 = vmatprep.subr.mxu0 0.0
        %2861 = vmatpush1.msra.mxu0 %v2039
        %2862 = vmatprep.subr.mxu0 0.0
        %2863 = vmatpush1.msra.mxu0 %v2038
        %2864 = vmatprep.subr.mxu0 0.0
        %2865 = vmatpush2.msra.mxu0 0.0
        %2866 = vmatprep.subr.mxu0 0.0
        %2867 = vmatpush2.msra.mxu0 0.0
        %2868 = vmatprep.subr.mxu0 0.0
        %2869 = vmatpush2.msra.mxu0 0.0
        %2870 = vmatprep.subr.mxu0 0.0
        %2871 = vmatpush2.msra.mxu0 0.0
        %2872 = vmatprep.subr.mxu0 0.0
        %2873 = vmatpush2.msra.mxu0 0.0
        %2874 = vmatprep.subr.mxu0 0.0
        %2875 = vmatpush2.msra.mxu0 0.0
        %2876 = vmatprep.subr.mxu0 0.0
        %2877 = vmatpush2.msra.mxu0 0.0
        %2878 = vmatprep.subr.mxu0 0.0
        %2879 = vmatpush2.msra.mxu0 0.0
        %2880 = vmatprep.subr.mxu0 0.0
        %2881 = vmatpush2.msra.mxu0 0.0
        %2882 = vmatprep.subr.mxu0 0.0
        %2883 = vmatpush2.msra.mxu0 0.0
        %2884 = vmatprep.subr.mxu0 0.0
        %2885 = vmatpush2.msra.mxu0 0.0
        %2886 = vmatprep.subr.mxu0 0.0
        %2887 = vmatpush2.msra.mxu0 0.0
        %2888 = vmatprep.subr.mxu0 0.0
        %2889 = vmatpush2.msra.mxu0 0.0
        %2890 = vmatprep.subr.mxu0 0.0
        %2891 = vmatpush2.msra.mxu0 0.0
        %2892 = vmatprep.subr.mxu0 0.0
        %2893 = vmatpush2.msra.mxu0 0.0
        %2894 = vmatprep.subr.mxu0 0.0
        %2895 = vmatpush2.msra.mxu0 0.0
        %2896 = vmatprep.mubr.f32.mxu0 0.0
        %2897 = vmatmul.mubr.f32.gmra.mxu0 %v2815
        %v2898 = vpop.f32.mrf.mxu0
        %v2899 = vadd.f32 %v2786, %v2898
        %v2900 = vpop.f32.mrf.mxu0
        %2901 = vmatprep.mubr.f32.mxu0 0.0
        %2902 = vmatmul.mubr.f32.gmra.mxu0 %v2818
        %v2903 = vpop.f32.mrf.mxu0
        %v2904 = vadd.f32 %v2791, %v2903
        %v2905 = vpop.f32.mrf.mxu0
        %2906 = vmatprep.mubr.f32.mxu0 0.0
        %2907 = vmatmul.mubr.f32.gmra.mxu0 %v2821
        %v2908 = vpop.f32.mrf.mxu0
        %v2909 = vadd.f32 %v2796, %v2908
        %v2910 = vpop.f32.mrf.mxu0
        %2911 = vmatprep.mubr.f32.mxu0 0.0
        %2912 = vmatmul.mubr.f32.gmra.mxu0 %v2824
        %v2913 = vpop.f32.mrf.mxu0
        %v2914 = vadd.f32 %v2801, %v2913
        %v2915 = vpop.f32.mrf.mxu0
        %2916 = vmatprep.mubr.f32.mxu0 0.0
        %2917 = vmatmul.mubr.f32.gmra.mxu0 %v2827
        %v2918 = vpop.f32.mrf.mxu0
        %v2919 = vadd.f32 %v2806, %v2918
        %v2920 = vpop.f32.mrf.mxu0
        %2921 = vmatprep.mubr.f32.mxu0 0.0
        %2922 = vmatmul.mubr.f32.gmra.mxu0 %v2830
        %v2923 = vpop.f32.mrf.mxu0
        %v2924 = vadd.f32 %v2811, %v2923
        %v2925 = vpop.f32.mrf.mxu0
        %2926 = vdwg.mxu0
        %s2927 = scalar_lea.vmem %s922, 128
        %v2928 = vld [vmem:[%s2927] sm:$0xff]
        %v2929 = vld [vmem:[%s2927 + $0x8] sm:$0xff]
        %v2930 = vld [vmem:[%s2927 + $0x10] sm:$0xff]
        %v2931 = vld [vmem:[%s2927 + $0x18] sm:$0xff]
        %v2932 = vld [vmem:[%s2927 + $0x20] sm:$0xff]
        %v2933 = vld [vmem:[%s2927 + $0x28] sm:$0xff]
        %v2934 = vld [vmem:[%s2927 + $0x30] sm:$0xff]
        %v2935 = vld [vmem:[%s2927 + $0x38] sm:$0xff]
        %s2936 = scalar_lea.vmem %s936, 2
        %v2937 = vld [vmem:[%s2936] sm:$0x1]
        %v2939 = vlaneseq
        %v2940 = vshrl.u32 %v2939, 7
        %v2941 = vsub.s32 0, %v2940
        %v2942 = vrot.slane %v2937, %v2941
        %2944 = vmatprep.subr.mxu0 0.0
        %2945 = vmatpush1.msra.mxu0 0.0
        %2946 = vmatprep.subr.mxu0 0.0
        %2947 = vmatpush1.msra.mxu0 0.0
        %2948 = vmatprep.subr.mxu0 0.0
        %2949 = vmatpush1.msra.mxu0 0.0
        %2950 = vmatprep.subr.mxu0 0.0
        %2951 = vmatpush1.msra.mxu0 0.0
        %2952 = vmatprep.subr.mxu0 0.0
        %2953 = vmatpush1.msra.mxu0 0.0
        %2954 = vmatprep.subr.mxu0 0.0
        %2955 = vmatpush1.msra.mxu0 0.0
        %2956 = vmatprep.subr.mxu0 0.0
        %2957 = vmatpush1.msra.mxu0 0.0
        %2958 = vmatprep.subr.mxu0 0.0
        %2959 = vmatpush1.msra.mxu0 0.0
        %2960 = vmatprep.subr.mxu0 0.0
        %2961 = vmatpush1.msra.mxu0 %v2935
        %2962 = vmatprep.subr.mxu0 0.0
        %2963 = vmatpush1.msra.mxu0 %v2934
        %2964 = vmatprep.subr.mxu0 0.0
        %2965 = vmatpush1.msra.mxu0 %v2933
        %2966 = vmatprep.subr.mxu0 0.0
        %2967 = vmatpush1.msra.mxu0 %v2932
        %2968 = vmatprep.subr.mxu0 0.0
        %2969 = vmatpush1.msra.mxu0 %v2931
        %2970 = vmatprep.subr.mxu0 0.0
        %2971 = vmatpush1.msra.mxu0 %v2930
        %2972 = vmatprep.subr.mxu0 0.0
        %2973 = vmatpush1.msra.mxu0 %v2929
        %2974 = vmatprep.subr.mxu0 0.0
        %2975 = vmatpush1.msra.mxu0 %v2928
        %2976 = vmatprep.subr.mxu0 0.0
        %2977 = vmatpush2.msra.mxu0 0.0
        %2978 = vmatprep.subr.mxu0 0.0
        %2979 = vmatpush2.msra.mxu0 0.0
        %2980 = vmatprep.subr.mxu0 0.0
        %2981 = vmatpush2.msra.mxu0 0.0
        %2982 = vmatprep.subr.mxu0 0.0
        %2983 = vmatpush2.msra.mxu0 0.0
        %2984 = vmatprep.subr.mxu0 0.0
        %2985 = vmatpush2.msra.mxu0 0.0
        %2986 = vmatprep.subr.mxu0 0.0
        %2987 = vmatpush2.msra.mxu0 0.0
        %2988 = vmatprep.subr.mxu0 0.0
        %2989 = vmatpush2.msra.mxu0 0.0
        %2990 = vmatprep.subr.mxu0 0.0
        %2991 = vmatpush2.msra.mxu0 0.0
        %2992 = vmatprep.subr.mxu0 0.0
        %2993 = vmatpush2.msra.mxu0 0.0
        %2994 = vmatprep.subr.mxu0 0.0
        %2995 = vmatpush2.msra.mxu0 0.0
        %2996 = vmatprep.subr.mxu0 0.0
        %2997 = vmatpush2.msra.mxu0 0.0
        %2998 = vmatprep.subr.mxu0 0.0
        %2999 = vmatpush2.msra.mxu0 0.0
        %3000 = vmatprep.subr.mxu0 0.0
        %3001 = vmatpush2.msra.mxu0 0.0
        %3002 = vmatprep.subr.mxu0 0.0
        %3003 = vmatpush2.msra.mxu0 0.0
        %3004 = vmatprep.subr.mxu0 0.0
        %3005 = vmatpush2.msra.mxu0 0.0
        %3006 = vmatprep.subr.mxu0 0.0
        %3007 = vmatpush2.msra.mxu0 0.0
        %3008 = vmatprep.mubr.f32.mxu0 0.0
        %3009 = vmatmul.mubr.f32.gmra.mxu0 %v1382
        %v3010 = vpop.f32.mrf.mxu0
        %v3011 = vadd.f32 %v2942, %v3010
        %v3012 = vpop.f32.mrf.mxu0
        %3013 = vmatprep.mubr.f32.mxu0 0.0
        %3014 = vmatmul.mubr.f32.gmra.mxu0 %v1385
        %v3015 = vpop.f32.mrf.mxu0
        %v3016 = vadd.f32 %v2942, %v3015
        %v3017 = vpop.f32.mrf.mxu0
        %3018 = vmatprep.mubr.f32.mxu0 0.0
        %3019 = vmatmul.mubr.f32.gmra.mxu0 %v1388
        %v3020 = vpop.f32.mrf.mxu0
        %v3021 = vadd.f32 %v2942, %v3020
        %v3022 = vpop.f32.mrf.mxu0
        %3023 = vmatprep.mubr.f32.mxu0 0.0
        %3024 = vmatmul.mubr.f32.gmra.mxu0 %v1391
        %v3025 = vpop.f32.mrf.mxu0
        %v3026 = vadd.f32 %v2942, %v3025
        %v3027 = vpop.f32.mrf.mxu0
        %3028 = vmatprep.mubr.f32.mxu0 0.0
        %3029 = vmatmul.mubr.f32.gmra.mxu0 %v1394
        %v3030 = vpop.f32.mrf.mxu0
        %v3031 = vadd.f32 %v2942, %v3030
        %v3032 = vpop.f32.mrf.mxu0
        %3033 = vmatprep.mubr.f32.mxu0 0.0
        %3034 = vmatmul.mubr.f32.gmra.mxu0 %v1397
        %v3035 = vpop.f32.mrf.mxu0
        %v3036 = vadd.f32 %v2942, %v3035
        %v3037 = vpop.f32.mrf.mxu0
        %3038 = vdwg.mxu0
        %s3039 = scalar_lea.vmem %s927, 128
        %v3040 = vld [vmem:[%s3039] sm:$0xff]
        %v3041 = vld [vmem:[%s3039 + $0x8] sm:$0xff]
        %v3042 = vld [vmem:[%s3039 + $0x10] sm:$0xff]
        %v3043 = vld [vmem:[%s3039 + $0x18] sm:$0xff]
        %v3044 = vld [vmem:[%s3039 + $0x20] sm:$0xff]
        %v3045 = vld [vmem:[%s3039 + $0x28] sm:$0xff]
        %v3046 = vld [vmem:[%s3039 + $0x30] sm:$0xff]
        %v3047 = vld [vmem:[%s3039 + $0x38] sm:$0xff]
        %s3048 = scalar_lea.vmem %s940, 2
        %v3049 = vld [vmem:[%s3048] sm:$0x1]
        %v3051 = vlaneseq
        %v3052 = vshrl.u32 %v3051, 7
        %v3053 = vsub.s32 0, %v3052
        %v3054 = vrot.slane %v3049, %v3053
        %3056 = vmatprep.subr.mxu0 0.0
        %3057 = vmatpush1.msra.mxu0 0.0
        %3058 = vmatprep.subr.mxu0 0.0
        %3059 = vmatpush1.msra.mxu0 0.0
        %3060 = vmatprep.subr.mxu0 0.0
        %3061 = vmatpush1.msra.mxu0 0.0
        %3062 = vmatprep.subr.mxu0 0.0
        %3063 = vmatpush1.msra.mxu0 0.0
        %3064 = vmatprep.subr.mxu0 0.0
        %3065 = vmatpush1.msra.mxu0 0.0
        %3066 = vmatprep.subr.mxu0 0.0
        %3067 = vmatpush1.msra.mxu0 0.0
        %3068 = vmatprep.subr.mxu0 0.0
        %3069 = vmatpush1.msra.mxu0 0.0
        %3070 = vmatprep.subr.mxu0 0.0
        %3071 = vmatpush1.msra.mxu0 0.0
        %3072 = vmatprep.subr.mxu0 0.0
        %3073 = vmatpush1.msra.mxu0 %v3047
        %3074 = vmatprep.subr.mxu0 0.0
        %3075 = vmatpush1.msra.mxu0 %v3046
        %3076 = vmatprep.subr.mxu0 0.0
        %3077 = vmatpush1.msra.mxu0 %v3045
        %3078 = vmatprep.subr.mxu0 0.0
        %3079 = vmatpush1.msra.mxu0 %v3044
        %3080 = vmatprep.subr.mxu0 0.0
        %3081 = vmatpush1.msra.mxu0 %v3043
        %3082 = vmatprep.subr.mxu0 0.0
        %3083 = vmatpush1.msra.mxu0 %v3042
        %3084 = vmatprep.subr.mxu0 0.0
        %3085 = vmatpush1.msra.mxu0 %v3041
        %3086 = vmatprep.subr.mxu0 0.0
        %3087 = vmatpush1.msra.mxu0 %v3040
        %3088 = vmatprep.subr.mxu0 0.0
        %3089 = vmatpush2.msra.mxu0 0.0
        %3090 = vmatprep.subr.mxu0 0.0
        %3091 = vmatpush2.msra.mxu0 0.0
        %3092 = vmatprep.subr.mxu0 0.0
        %3093 = vmatpush2.msra.mxu0 0.0
        %3094 = vmatprep.subr.mxu0 0.0
        %3095 = vmatpush2.msra.mxu0 0.0
        %3096 = vmatprep.subr.mxu0 0.0
        %3097 = vmatpush2.msra.mxu0 0.0
        %3098 = vmatprep.subr.mxu0 0.0
        %3099 = vmatpush2.msra.mxu0 0.0
        %3100 = vmatprep.subr.mxu0 0.0
        %3101 = vmatpush2.msra.mxu0 0.0
        %3102 = vmatprep.subr.mxu0 0.0
        %3103 = vmatpush2.msra.mxu0 0.0
        %3104 = vmatprep.subr.mxu0 0.0
        %3105 = vmatpush2.msra.mxu0 0.0
        %3106 = vmatprep.subr.mxu0 0.0
        %3107 = vmatpush2.msra.mxu0 0.0
        %3108 = vmatprep.subr.mxu0 0.0
        %3109 = vmatpush2.msra.mxu0 0.0
        %3110 = vmatprep.subr.mxu0 0.0
        %3111 = vmatpush2.msra.mxu0 0.0
        %3112 = vmatprep.subr.mxu0 0.0
        %3113 = vmatpush2.msra.mxu0 0.0
        %3114 = vmatprep.subr.mxu0 0.0
        %3115 = vmatpush2.msra.mxu0 0.0
        %3116 = vmatprep.subr.mxu0 0.0
        %3117 = vmatpush2.msra.mxu0 0.0
        %3118 = vmatprep.subr.mxu0 0.0
        %3119 = vmatpush2.msra.mxu0 0.0
        %3120 = vmatprep.mubr.f32.mxu0 0.0
        %3121 = vmatmul.mubr.f32.gmra.mxu0 %v1382
        %v3122 = vpop.f32.mrf.mxu0
        %v3123 = vadd.f32 %v3054, %v3122
        %v3124 = vpop.f32.mrf.mxu0
        %3125 = vmatprep.mubr.f32.mxu0 0.0
        %3126 = vmatmul.mubr.f32.gmra.mxu0 %v1385
        %v3127 = vpop.f32.mrf.mxu0
        %v3128 = vadd.f32 %v3054, %v3127
        %v3129 = vpop.f32.mrf.mxu0
        %3130 = vmatprep.mubr.f32.mxu0 0.0
        %3131 = vmatmul.mubr.f32.gmra.mxu0 %v1388
        %v3132 = vpop.f32.mrf.mxu0
        %v3133 = vadd.f32 %v3054, %v3132
        %v3134 = vpop.f32.mrf.mxu0
        %3135 = vmatprep.mubr.f32.mxu0 0.0
        %3136 = vmatmul.mubr.f32.gmra.mxu0 %v1391
        %v3137 = vpop.f32.mrf.mxu0
        %v3138 = vadd.f32 %v3054, %v3137
        %v3139 = vpop.f32.mrf.mxu0
        %3140 = vmatprep.mubr.f32.mxu0 0.0
        %3141 = vmatmul.mubr.f32.gmra.mxu0 %v1394
        %v3142 = vpop.f32.mrf.mxu0
        %v3143 = vadd.f32 %v3054, %v3142
        %v3144 = vpop.f32.mrf.mxu0
        %3145 = vmatprep.mubr.f32.mxu0 0.0
        %3146 = vmatmul.mubr.f32.gmra.mxu0 %v1397
        %v3147 = vpop.f32.mrf.mxu0
        %v3148 = vadd.f32 %v3054, %v3147
        %v3149 = vpop.f32.mrf.mxu0
        %3150 = vdwg.mxu0
        %s3151 = scalar_lea.vmem %s932, 128
        %v3152 = vld [vmem:[%s3151] sm:$0xff]
        %v3153 = vld [vmem:[%s3151 + $0x8] sm:$0xff]
        %v3154 = vld [vmem:[%s3151 + $0x10] sm:$0xff]
        %v3155 = vld [vmem:[%s3151 + $0x18] sm:$0xff]
        %v3156 = vld [vmem:[%s3151 + $0x20] sm:$0xff]
        %v3157 = vld [vmem:[%s3151 + $0x28] sm:$0xff]
        %v3158 = vld [vmem:[%s3151 + $0x30] sm:$0xff]
        %v3159 = vld [vmem:[%s3151 + $0x38] sm:$0xff]
        %s3160 = scalar_lea.vmem %s944, 2
        %v3161 = vld [vmem:[%s3160] sm:$0x1]
        %v3163 = vlaneseq
        %v3164 = vshrl.u32 %v3163, 7
        %v3165 = vsub.s32 0, %v3164
        %v3166 = vrot.slane %v3161, %v3165
        %3168 = vmatprep.subr.mxu0 0.0
        %3169 = vmatpush1.msra.mxu0 0.0
        %3170 = vmatprep.subr.mxu0 0.0
        %3171 = vmatpush1.msra.mxu0 0.0
        %3172 = vmatprep.subr.mxu0 0.0
        %3173 = vmatpush1.msra.mxu0 0.0
        %3174 = vmatprep.subr.mxu0 0.0
        %3175 = vmatpush1.msra.mxu0 0.0
        %3176 = vmatprep.subr.mxu0 0.0
        %3177 = vmatpush1.msra.mxu0 0.0
        %3178 = vmatprep.subr.mxu0 0.0
        %3179 = vmatpush1.msra.mxu0 0.0
        %3180 = vmatprep.subr.mxu0 0.0
        %3181 = vmatpush1.msra.mxu0 0.0
        %3182 = vmatprep.subr.mxu0 0.0
        %3183 = vmatpush1.msra.mxu0 0.0
        %3184 = vmatprep.subr.mxu0 0.0
        %3185 = vmatpush1.msra.mxu0 %v3159
        %3186 = vmatprep.subr.mxu0 0.0
        %3187 = vmatpush1.msra.mxu0 %v3158
        %3188 = vmatprep.subr.mxu0 0.0
        %3189 = vmatpush1.msra.mxu0 %v3157
        %3190 = vmatprep.subr.mxu0 0.0
        %3191 = vmatpush1.msra.mxu0 %v3156
        %3192 = vmatprep.subr.mxu0 0.0
        %3193 = vmatpush1.msra.mxu0 %v3155
        %3194 = vmatprep.subr.mxu0 0.0
        %3195 = vmatpush1.msra.mxu0 %v3154
        %3196 = vmatprep.subr.mxu0 0.0
        %3197 = vmatpush1.msra.mxu0 %v3153
        %3198 = vmatprep.subr.mxu0 0.0
        %3199 = vmatpush1.msra.mxu0 %v3152
        %3200 = vmatprep.subr.mxu0 0.0
        %3201 = vmatpush2.msra.mxu0 0.0
        %3202 = vmatprep.subr.mxu0 0.0
        %3203 = vmatpush2.msra.mxu0 0.0
        %3204 = vmatprep.subr.mxu0 0.0
        %3205 = vmatpush2.msra.mxu0 0.0
        %3206 = vmatprep.subr.mxu0 0.0
        %3207 = vmatpush2.msra.mxu0 0.0
        %3208 = vmatprep.subr.mxu0 0.0
        %3209 = vmatpush2.msra.mxu0 0.0
        %3210 = vmatprep.subr.mxu0 0.0
        %3211 = vmatpush2.msra.mxu0 0.0
        %3212 = vmatprep.subr.mxu0 0.0
        %3213 = vmatpush2.msra.mxu0 0.0
        %3214 = vmatprep.subr.mxu0 0.0
        %3215 = vmatpush2.msra.mxu0 0.0
        %3216 = vmatprep.subr.mxu0 0.0
        %3217 = vmatpush2.msra.mxu0 0.0
        %3218 = vmatprep.subr.mxu0 0.0
        %3219 = vmatpush2.msra.mxu0 0.0
        %3220 = vmatprep.subr.mxu0 0.0
        %3221 = vmatpush2.msra.mxu0 0.0
        %3222 = vmatprep.subr.mxu0 0.0
        %3223 = vmatpush2.msra.mxu0 0.0
        %3224 = vmatprep.subr.mxu0 0.0
        %3225 = vmatpush2.msra.mxu0 0.0
        %3226 = vmatprep.subr.mxu0 0.0
        %3227 = vmatpush2.msra.mxu0 0.0
        %3228 = vmatprep.subr.mxu0 0.0
        %3229 = vmatpush2.msra.mxu0 0.0
        %3230 = vmatprep.subr.mxu0 0.0
        %3231 = vmatpush2.msra.mxu0 0.0
        %3232 = vmatprep.mubr.f32.mxu0 0.0
        %3233 = vmatmul.mubr.f32.gmra.mxu0 %v1382
        %v3234 = vpop.f32.mrf.mxu0
        %v3235 = vadd.f32 %v3166, %v3234
        %v3236 = vpop.f32.mrf.mxu0
        %3237 = vmatprep.mubr.f32.mxu0 0.0
        %3238 = vmatmul.mubr.f32.gmra.mxu0 %v1385
        %v3239 = vpop.f32.mrf.mxu0
        %v3240 = vadd.f32 %v3166, %v3239
        %v3241 = vpop.f32.mrf.mxu0
        %3242 = vmatprep.mubr.f32.mxu0 0.0
        %3243 = vmatmul.mubr.f32.gmra.mxu0 %v1388
        %v3244 = vpop.f32.mrf.mxu0
        %v3245 = vadd.f32 %v3166, %v3244
        %v3246 = vpop.f32.mrf.mxu0
        %3247 = vmatprep.mubr.f32.mxu0 0.0
        %3248 = vmatmul.mubr.f32.gmra.mxu0 %v1391
        %v3249 = vpop.f32.mrf.mxu0
        %v3250 = vadd.f32 %v3166, %v3249
        %v3251 = vpop.f32.mrf.mxu0
        %3252 = vmatprep.mubr.f32.mxu0 0.0
        %3253 = vmatmul.mubr.f32.gmra.mxu0 %v1394
        %v3254 = vpop.f32.mrf.mxu0
        %v3255 = vadd.f32 %v3166, %v3254
        %v3256 = vpop.f32.mrf.mxu0
        %3257 = vmatprep.mubr.f32.mxu0 0.0
        %3258 = vmatmul.mubr.f32.gmra.mxu0 %v1397
        %v3259 = vpop.f32.mrf.mxu0
        %v3260 = vadd.f32 %v3166, %v3259
        %v3261 = vpop.f32.mrf.mxu0
        %3262 = vdwg.mxu0
        %v3264 = vsel %vm1714, %v3011, 0
        %v3267 = vsel %vm1714, %v3016, 0
        %v3270 = vsel %vm1714, %v3021, 0
        %v3273 = vsel %vm1714, %v3026, 0
        %v3276 = vsel %vm1714, %v3031, 0
        %v3279 = vsel %vm1714, %v3036, 0
        %v3282 = vsel %vm1714, %v3123, 0
        %v3285 = vsel %vm1714, %v3128, 0
        %v3288 = vsel %vm1714, %v3133, 0
        %v3291 = vsel %vm1714, %v3138, 0
        %v3294 = vsel %vm1714, %v3143, 0
        %v3297 = vsel %vm1714, %v3148, 0
        %3299 = vmatprep.subr.mxu0 0.0
        %3300 = vmatpush1.xpose.msra.mxu0 0.0
        %3301 = vmatprep.subr.mxu0 0.0
        %3302 = vmatpush1.xpose.msra.mxu0 0.0
        %3303 = vmatprep.subr.mxu0 0.0
        %3304 = vmatpush1.xpose.msra.mxu0 0.0
        %3305 = vmatprep.subr.mxu0 0.0
        %3306 = vmatpush1.xpose.msra.mxu0 0.0
        %3307 = vmatprep.subr.mxu0 0.0
        %3308 = vmatpush1.xpose.msra.mxu0 0.0
        %3309 = vmatprep.subr.mxu0 0.0
        %3310 = vmatpush1.xpose.msra.mxu0 0.0
        %3311 = vmatprep.subr.mxu0 0.0
        %3312 = vmatpush1.xpose.msra.mxu0 0.0
        %3313 = vmatprep.subr.mxu0 0.0
        %3314 = vmatpush1.xpose.msra.mxu0 0.0
        %3315 = vmatprep.subr.mxu0 0.0
        %3316 = vmatpush1.xpose.msra.mxu0 0.0
        %3317 = vmatprep.subr.mxu0 0.0
        %3318 = vmatpush1.xpose.msra.mxu0 0.0
        %3319 = vmatprep.subr.mxu0 0.0
        %3320 = vmatpush1.xpose.msra.mxu0 %v3297
        %3321 = vmatprep.subr.mxu0 0.0
        %3322 = vmatpush1.xpose.msra.mxu0 %v3294
        %3323 = vmatprep.subr.mxu0 0.0
        %3324 = vmatpush1.xpose.msra.mxu0 %v3291
        %3325 = vmatprep.subr.mxu0 0.0
        %3326 = vmatpush1.xpose.msra.mxu0 %v3288
        %3327 = vmatprep.subr.mxu0 0.0
        %3328 = vmatpush1.xpose.msra.mxu0 %v3285
        %3329 = vmatprep.subr.mxu0 0.0
        %3330 = vmatpush1.xpose.msra.mxu0 %v3282
        %3331 = vmatprep.subr.mxu0 0.0
        %3332 = vmatpush2.xpose.msra.mxu0 0.0
        %3333 = vmatprep.subr.mxu0 0.0
        %3334 = vmatpush2.xpose.msra.mxu0 0.0
        %3335 = vmatprep.subr.mxu0 0.0
        %3336 = vmatpush2.xpose.msra.mxu0 0.0
        %3337 = vmatprep.subr.mxu0 0.0
        %3338 = vmatpush2.xpose.msra.mxu0 0.0
        %3339 = vmatprep.subr.mxu0 0.0
        %3340 = vmatpush2.xpose.msra.mxu0 0.0
        %3341 = vmatprep.subr.mxu0 0.0
        %3342 = vmatpush2.xpose.msra.mxu0 0.0
        %3343 = vmatprep.subr.mxu0 0.0
        %3344 = vmatpush2.xpose.msra.mxu0 0.0
        %3345 = vmatprep.subr.mxu0 0.0
        %3346 = vmatpush2.xpose.msra.mxu0 0.0
        %3347 = vmatprep.subr.mxu0 0.0
        %3348 = vmatpush2.xpose.msra.mxu0 0.0
        %3349 = vmatprep.subr.mxu0 0.0
        %3350 = vmatpush2.xpose.msra.mxu0 0.0
        %3351 = vmatprep.subr.mxu0 0.0
        %3352 = vmatpush2.xpose.msra.mxu0 0.0
        %3353 = vmatprep.subr.mxu0 0.0
        %3354 = vmatpush2.xpose.msra.mxu0 0.0
        %3355 = vmatprep.subr.mxu0 0.0
        %3356 = vmatpush2.xpose.msra.mxu0 0.0
        %3357 = vmatprep.subr.mxu0 0.0
        %3358 = vmatpush2.xpose.msra.mxu0 0.0
        %3359 = vmatprep.subr.mxu0 0.0
        %3360 = vmatpush2.xpose.msra.mxu0 0.0
        %3361 = vmatprep.subr.mxu0 0.0
        %3362 = vmatpush2.xpose.msra.mxu0 0.0
        %3363 = vmatprep.mubr.f32.mxu0 0.0
        %3364 = vmatmul.mubr.f32.gmra.mxu0 %v3264
        %v3365 = vpop.f32.mrf.mxu0
        %v3366 = vadd.f32 0.0, %v3365
        %v3367 = vpop.f32.mrf.mxu0
        %3368 = vmatprep.mubr.f32.mxu0 0.0
        %3369 = vmatmul.mubr.f32.gmra.mxu0 %v3267
        %v3370 = vpop.f32.mrf.mxu0
        %v3371 = vadd.f32 0.0, %v3370
        %v3372 = vpop.f32.mrf.mxu0
        %3373 = vmatprep.mubr.f32.mxu0 0.0
        %3374 = vmatmul.mubr.f32.gmra.mxu0 %v3270
        %v3375 = vpop.f32.mrf.mxu0
        %v3376 = vadd.f32 0.0, %v3375
        %v3377 = vpop.f32.mrf.mxu0
        %3378 = vmatprep.mubr.f32.mxu0 0.0
        %3379 = vmatmul.mubr.f32.gmra.mxu0 %v3273
        %v3380 = vpop.f32.mrf.mxu0
        %v3381 = vadd.f32 0.0, %v3380
        %v3382 = vpop.f32.mrf.mxu0
        %3383 = vmatprep.mubr.f32.mxu0 0.0
        %3384 = vmatmul.mubr.f32.gmra.mxu0 %v3276
        %v3385 = vpop.f32.mrf.mxu0
        %v3386 = vadd.f32 0.0, %v3385
        %v3387 = vpop.f32.mrf.mxu0
        %3388 = vmatprep.mubr.f32.mxu0 0.0
        %3389 = vmatmul.mubr.f32.gmra.mxu0 %v3279
        %v3390 = vpop.f32.mrf.mxu0
        %v3391 = vadd.f32 0.0, %v3390
        %v3392 = vpop.f32.mrf.mxu0
        %3393 = vdwg.mxu0
        %v3394 = vmul.f32 %v3366, 0.25
        %v3395 = vmul.f32 %v3371, 0.25
        %v3396 = vmul.f32 %v3376, 0.25
        %v3397 = vmul.f32 %v3381, 0.25
        %v3398 = vmul.f32 %v3386, 0.25
        %v3399 = vmul.f32 %v3391, 0.25
        %v3400 = vadd.f32 %v3394, %v1360
        %v3401 = vadd.f32 %v3395, %v1361
        %v3402 = vadd.f32 %v3396, %v1362
        %v3403 = vadd.f32 %v3397, %v1363
        %v3404 = vadd.f32 %v3398, %v1364
        %v3405 = vadd.f32 %v3399, %v1365
        %v3406 = vsel %vm1858, %v3400, -inf
        %3407 = vmax.xlane.f32.xlu0 %v3406
        %v3408 = vpop.xlane.xlu0 %3407
        %v3409 = vsel %vm1858, %v3401, -inf
        %3410 = vmax.xlane.f32.xlu0 %v3409
        %v3411 = vpop.xlane.xlu0 %3410
        %v3412 = vsel %vm1858, %v3402, -inf
        %3413 = vmax.xlane.f32.xlu0 %v3412
        %v3414 = vpop.xlane.xlu0 %3413
        %v3415 = vsel %vm1858, %v3403, -inf
        %3416 = vmax.xlane.f32.xlu0 %v3415
        %v3417 = vpop.xlane.xlu0 %3416
        %v3418 = vsel %vm1858, %v3404, -inf
        %3419 = vmax.xlane.f32.xlu0 %v3418
        %v3420 = vpop.xlane.xlu0 %3419
        %v3421 = vsel %vm1858, %v3405, -inf
        %3422 = vmax.xlane.f32.xlu0 %v3421
        %v3423 = vpop.xlane.xlu0 %3422
        %v3424 = vsub.f32 %v3400, %v3408
        %v3425 = vsub.f32 %v3401, %v3411
        %v3426 = vsub.f32 %v3402, %v3414
        %v3427 = vsub.f32 %v3403, %v3417
        %v3428 = vsub.f32 %v3404, %v3420
        %v3429 = vsub.f32 %v3405, %v3423
        %v3430 = vmul.f32 %v3424, 1.442695
        %v3431 = vpow.pop %v3430
        %v3432 = vmul.f32 %v3425, 1.442695
        %v3433 = vpow.pop %v3432
        %v3434 = vmul.f32 %v3426, 1.442695
        %v3435 = vpow.pop %v3434
        %v3436 = vmul.f32 %v3427, 1.442695
        %v3437 = vpow.pop %v3436
        %v3438 = vmul.f32 %v3428, 1.442695
        %v3439 = vpow.pop %v3438
        %v3440 = vmul.f32 %v3429, 1.442695
        %v3441 = vpow.pop %v3440
        %v3442 = vsel %vm1858, %v3431, 0.0
        %3443 = vadd.xlane.f32.xlu0 %v3442
        %v3444 = vpop.xlane.xlu0 %3443
        %v3445 = vsel %vm1858, %v3433, 0.0
        %3446 = vadd.xlane.f32.xlu0 %v3445
        %v3447 = vpop.xlane.xlu0 %3446
        %v3448 = vsel %vm1858, %v3435, 0.0
        %3449 = vadd.xlane.f32.xlu0 %v3448
        %v3450 = vpop.xlane.xlu0 %3449
        %v3451 = vsel %vm1858, %v3437, 0.0
        %3452 = vadd.xlane.f32.xlu0 %v3451
        %v3453 = vpop.xlane.xlu0 %3452
        %v3454 = vsel %vm1858, %v3439, 0.0
        %3455 = vadd.xlane.f32.xlu0 %v3454
        %v3456 = vpop.xlane.xlu0 %3455
        %v3457 = vsel %vm1858, %v3441, 0.0
        %3458 = vadd.xlane.f32.xlu0 %v3457
        %v3459 = vpop.xlane.xlu0 %3458
        %v3460 = vrcp.pop %v3444
        %v3461 = vmul.f32 %v3431, %v3460
        %v3462 = vrcp.pop %v3447
        %v3463 = vmul.f32 %v3433, %v3462
        %v3464 = vrcp.pop %v3450
        %v3465 = vmul.f32 %v3435, %v3464
        %v3466 = vrcp.pop %v3453
        %v3467 = vmul.f32 %v3437, %v3466
        %v3468 = vrcp.pop %v3456
        %v3469 = vmul.f32 %v3439, %v3468
        %v3470 = vrcp.pop %v3459
        %v3471 = vmul.f32 %v3441, %v3470
        %v3473 = vsel %vm1858, %v3461, 0
        %v3476 = vsel %vm1858, %v3463, 0
        %v3479 = vsel %vm1858, %v3465, 0
        %v3482 = vsel %vm1858, %v3467, 0
        %v3485 = vsel %vm1858, %v3469, 0
        %v3488 = vsel %vm1858, %v3471, 0
        %3490 = vmatprep.subr.mxu0 0.0
        %3491 = vmatpush1.msra.mxu0 0.0
        %3492 = vmatprep.subr.mxu0 0.0
        %3493 = vmatpush1.msra.mxu0 0.0
        %3494 = vmatprep.subr.mxu0 0.0
        %3495 = vmatpush1.msra.mxu0 0.0
        %3496 = vmatprep.subr.mxu0 0.0
        %3497 = vmatpush1.msra.mxu0 0.0
        %3498 = vmatprep.subr.mxu0 0.0
        %3499 = vmatpush1.msra.mxu0 0.0
        %3500 = vmatprep.subr.mxu0 0.0
        %3501 = vmatpush1.msra.mxu0 0.0
        %3502 = vmatprep.subr.mxu0 0.0
        %3503 = vmatpush1.msra.mxu0 0.0
        %3504 = vmatprep.subr.mxu0 0.0
        %3505 = vmatpush1.msra.mxu0 0.0
        %3506 = vmatprep.subr.mxu0 0.0
        %3507 = vmatpush1.msra.mxu0 0.0
        %3508 = vmatprep.subr.mxu0 0.0
        %3509 = vmatpush1.msra.mxu0 0.0
        %3510 = vmatprep.subr.mxu0 0.0
        %3511 = vmatpush1.msra.mxu0 %v3260
        %3512 = vmatprep.subr.mxu0 0.0
        %3513 = vmatpush1.msra.mxu0 %v3255
        %3514 = vmatprep.subr.mxu0 0.0
        %3515 = vmatpush1.msra.mxu0 %v3250
        %3516 = vmatprep.subr.mxu0 0.0
        %3517 = vmatpush1.msra.mxu0 %v3245
        %3518 = vmatprep.subr.mxu0 0.0
        %3519 = vmatpush1.msra.mxu0 %v3240
        %3520 = vmatprep.subr.mxu0 0.0
        %3521 = vmatpush1.msra.mxu0 %v3235
        %3522 = vmatprep.subr.mxu0 0.0
        %3523 = vmatpush2.msra.mxu0 0.0
        %3524 = vmatprep.subr.mxu0 0.0
        %3525 = vmatpush2.msra.mxu0 0.0
        %3526 = vmatprep.subr.mxu0 0.0
        %3527 = vmatpush2.msra.mxu0 0.0
        %3528 = vmatprep.subr.mxu0 0.0
        %3529 = vmatpush2.msra.mxu0 0.0
        %3530 = vmatprep.subr.mxu0 0.0
        %3531 = vmatpush2.msra.mxu0 0.0
        %3532 = vmatprep.subr.mxu0 0.0
        %3533 = vmatpush2.msra.mxu0 0.0
        %3534 = vmatprep.subr.mxu0 0.0
        %3535 = vmatpush2.msra.mxu0 0.0
        %3536 = vmatprep.subr.mxu0 0.0
        %3537 = vmatpush2.msra.mxu0 0.0
        %3538 = vmatprep.subr.mxu0 0.0
        %3539 = vmatpush2.msra.mxu0 0.0
        %3540 = vmatprep.subr.mxu0 0.0
        %3541 = vmatpush2.msra.mxu0 0.0
        %3542 = vmatprep.subr.mxu0 0.0
        %3543 = vmatpush2.msra.mxu0 0.0
        %3544 = vmatprep.subr.mxu0 0.0
        %3545 = vmatpush2.msra.mxu0 0.0
        %3546 = vmatprep.subr.mxu0 0.0
        %3547 = vmatpush2.msra.mxu0 0.0
        %3548 = vmatprep.subr.mxu0 0.0
        %3549 = vmatpush2.msra.mxu0 0.0
        %3550 = vmatprep.subr.mxu0 0.0
        %3551 = vmatpush2.msra.mxu0 0.0
        %3552 = vmatprep.subr.mxu0 0.0
        %3553 = vmatpush2.msra.mxu0 0.0
        %3554 = vmatprep.mubr.f32.mxu0 0.0
        %3555 = vmatmul.mubr.f32.gmra.mxu0 %v3473
        %v3556 = vpop.f32.mrf.mxu0
        %v3557 = vadd.f32 0.0, %v3556
        %v3558 = vpop.f32.mrf.mxu0
        %3559 = vmatprep.mubr.f32.mxu0 0.0
        %3560 = vmatmul.mubr.f32.gmra.mxu0 %v3476
        %v3561 = vpop.f32.mrf.mxu0
        %v3562 = vadd.f32 0.0, %v3561
        %v3563 = vpop.f32.mrf.mxu0
        %3564 = vmatprep.mubr.f32.mxu0 0.0
        %3565 = vmatmul.mubr.f32.gmra.mxu0 %v3479
        %v3566 = vpop.f32.mrf.mxu0
        %v3567 = vadd.f32 0.0, %v3566
        %v3568 = vpop.f32.mrf.mxu0
        %3569 = vmatprep.mubr.f32.mxu0 0.0
        %3570 = vmatmul.mubr.f32.gmra.mxu0 %v3482
        %v3571 = vpop.f32.mrf.mxu0
        %v3572 = vadd.f32 0.0, %v3571
        %v3573 = vpop.f32.mrf.mxu0
        %3574 = vmatprep.mubr.f32.mxu0 0.0
        %3575 = vmatmul.mubr.f32.gmra.mxu0 %v3485
        %v3576 = vpop.f32.mrf.mxu0
        %v3577 = vadd.f32 0.0, %v3576
        %v3578 = vpop.f32.mrf.mxu0
        %3579 = vmatprep.mubr.f32.mxu0 0.0
        %3580 = vmatmul.mubr.f32.gmra.mxu0 %v3488
        %v3581 = vpop.f32.mrf.mxu0
        %v3582 = vadd.f32 0.0, %v3581
        %v3583 = vpop.f32.mrf.mxu0
        %3584 = vdwg.mxu0
        %s3585 = scalar_lea.vmem %s949, 32
        %v3586 = vld [vmem:[%s3585] sm:$0xff]
        %v3587 = vld [vmem:[%s3585 + $0x8] sm:$0xff]
        %v3589 = vsel %vm1714, %v3557, 0
        %v3592 = vsel %vm1714, %v3562, 0
        %v3595 = vsel %vm1714, %v3567, 0
        %v3598 = vsel %vm1714, %v3572, 0
        %v3601 = vsel %vm1714, %v3577, 0
        %v3604 = vsel %vm1714, %v3582, 0
        %3606 = vmatprep.subr.mxu0 0.0
        %3607 = vmatpush1.msra.mxu0 0.0
        %3608 = vmatprep.subr.mxu0 0.0
        %3609 = vmatpush1.msra.mxu0 0.0
        %3610 = vmatprep.subr.mxu0 0.0
        %3611 = vmatpush1.msra.mxu0 0.0
        %3612 = vmatprep.subr.mxu0 0.0
        %3613 = vmatpush1.msra.mxu0 0.0
        %3614 = vmatprep.subr.mxu0 0.0
        %3615 = vmatpush1.msra.mxu0 0.0
        %3616 = vmatprep.subr.mxu0 0.0
        %3617 = vmatpush1.msra.mxu0 0.0
        %3618 = vmatprep.subr.mxu0 0.0
        %3619 = vmatpush1.msra.mxu0 0.0
        %3620 = vmatprep.subr.mxu0 0.0
        %3621 = vmatpush1.msra.mxu0 0.0
        %3622 = vmatprep.subr.mxu0 0.0
        %3623 = vmatpush1.msra.mxu0 0.0
        %3624 = vmatprep.subr.mxu0 0.0
        %3625 = vmatpush1.msra.mxu0 0.0
        %3626 = vmatprep.subr.mxu0 0.0
        %3627 = vmatpush1.msra.mxu0 0.0
        %3628 = vmatprep.subr.mxu0 0.0
        %3629 = vmatpush1.msra.mxu0 0.0
        %3630 = vmatprep.subr.mxu0 0.0
        %3631 = vmatpush1.msra.mxu0 0.0
        %3632 = vmatprep.subr.mxu0 0.0
        %3633 = vmatpush1.msra.mxu0 0.0
        %3634 = vmatprep.subr.mxu0 0.0
        %3635 = vmatpush1.msra.mxu0 %v3587
        %3636 = vmatprep.subr.mxu0 0.0
        %3637 = vmatpush1.msra.mxu0 %v3586
        %3638 = vmatprep.subr.mxu0 0.0
        %3639 = vmatpush2.msra.mxu0 0.0
        %3640 = vmatprep.subr.mxu0 0.0
        %3641 = vmatpush2.msra.mxu0 0.0
        %3642 = vmatprep.subr.mxu0 0.0
        %3643 = vmatpush2.msra.mxu0 0.0
        %3644 = vmatprep.subr.mxu0 0.0
        %3645 = vmatpush2.msra.mxu0 0.0
        %3646 = vmatprep.subr.mxu0 0.0
        %3647 = vmatpush2.msra.mxu0 0.0
        %3648 = vmatprep.subr.mxu0 0.0
        %3649 = vmatpush2.msra.mxu0 0.0
        %3650 = vmatprep.subr.mxu0 0.0
        %3651 = vmatpush2.msra.mxu0 0.0
        %3652 = vmatprep.subr.mxu0 0.0
        %3653 = vmatpush2.msra.mxu0 0.0
        %3654 = vmatprep.subr.mxu0 0.0
        %3655 = vmatpush2.msra.mxu0 0.0
        %3656 = vmatprep.subr.mxu0 0.0
        %3657 = vmatpush2.msra.mxu0 0.0
        %3658 = vmatprep.subr.mxu0 0.0
        %3659 = vmatpush2.msra.mxu0 0.0
        %3660 = vmatprep.subr.mxu0 0.0
        %3661 = vmatpush2.msra.mxu0 0.0
        %3662 = vmatprep.subr.mxu0 0.0
        %3663 = vmatpush2.msra.mxu0 0.0
        %3664 = vmatprep.subr.mxu0 0.0
        %3665 = vmatpush2.msra.mxu0 0.0
        %3666 = vmatprep.subr.mxu0 0.0
        %3667 = vmatpush2.msra.mxu0 0.0
        %3668 = vmatprep.subr.mxu0 0.0
        %3669 = vmatpush2.msra.mxu0 0.0
        %3670 = vmatprep.mubr.f32.mxu0 0.0
        %3671 = vmatmul.mubr.f32.gmra.mxu0 %v3589
        %v3672 = vpop.f32.mrf.mxu0
        %v3673 = vadd.f32 0.0, %v3672
        %v3674 = vpop.f32.mrf.mxu0
        %3675 = vmatprep.mubr.f32.mxu0 0.0
        %3676 = vmatmul.mubr.f32.gmra.mxu0 %v3592
        %v3677 = vpop.f32.mrf.mxu0
        %v3678 = vadd.f32 0.0, %v3677
        %v3679 = vpop.f32.mrf.mxu0
        %3680 = vmatprep.mubr.f32.mxu0 0.0
        %3681 = vmatmul.mubr.f32.gmra.mxu0 %v3595
        %v3682 = vpop.f32.mrf.mxu0
        %v3683 = vadd.f32 0.0, %v3682
        %v3684 = vpop.f32.mrf.mxu0
        %3685 = vmatprep.mubr.f32.mxu0 0.0
        %3686 = vmatmul.mubr.f32.gmra.mxu0 %v3598
        %v3687 = vpop.f32.mrf.mxu0
        %v3688 = vadd.f32 0.0, %v3687
        %v3689 = vpop.f32.mrf.mxu0
        %3690 = vmatprep.mubr.f32.mxu0 0.0
        %3691 = vmatmul.mubr.f32.gmra.mxu0 %v3601
        %v3692 = vpop.f32.mrf.mxu0
        %v3693 = vadd.f32 0.0, %v3692
        %v3694 = vpop.f32.mrf.mxu0
        %3695 = vmatprep.mubr.f32.mxu0 0.0
        %3696 = vmatmul.mubr.f32.gmra.mxu0 %v3604
        %v3697 = vpop.f32.mrf.mxu0
        %v3698 = vadd.f32 0.0, %v3697
        %v3699 = vpop.f32.mrf.mxu0
        %3700 = vdwg.mxu0
        %v3701 = vadd.f32 %v2899, %v3673
        %v3702 = vadd.f32 %v2904, %v3678
        %v3703 = vadd.f32 %v2909, %v3683
        %v3704 = vadd.f32 %v2914, %v3688
        %v3705 = vadd.f32 %v2919, %v3693
        %v3706 = vadd.f32 %v2924, %v3698
        %s3707 = scalar_lea.vmem %s922, 192
        %v3708 = vld [vmem:[%s3707] sm:$0xff]
        %v3709 = vld [vmem:[%s3707 + $0x8] sm:$0xff]
        %v3710 = vld [vmem:[%s3707 + $0x10] sm:$0xff]
        %v3711 = vld [vmem:[%s3707 + $0x18] sm:$0xff]
        %v3712 = vld [vmem:[%s3707 + $0x20] sm:$0xff]
        %v3713 = vld [vmem:[%s3707 + $0x28] sm:$0xff]
        %v3714 = vld [vmem:[%s3707 + $0x30] sm:$0xff]
        %v3715 = vld [vmem:[%s3707 + $0x38] sm:$0xff]
        %s3716 = scalar_lea.vmem %s936, 3
        %v3717 = vld [vmem:[%s3716] sm:$0x1]
        %v3719 = vlaneseq
        %v3720 = vshrl.u32 %v3719, 7
        %v3721 = vsub.s32 0, %v3720
        %v3722 = vrot.slane %v3717, %v3721
        %3724 = vmatprep.subr.mxu0 0.0
        %3725 = vmatpush1.msra.mxu0 0.0
        %3726 = vmatprep.subr.mxu0 0.0
        %3727 = vmatpush1.msra.mxu0 0.0
        %3728 = vmatprep.subr.mxu0 0.0
        %3729 = vmatpush1.msra.mxu0 0.0
        %3730 = vmatprep.subr.mxu0 0.0
        %3731 = vmatpush1.msra.mxu0 0.0
        %3732 = vmatprep.subr.mxu0 0.0
        %3733 = vmatpush1.msra.mxu0 0.0
        %3734 = vmatprep.subr.mxu0 0.0
        %3735 = vmatpush1.msra.mxu0 0.0
        %3736 = vmatprep.subr.mxu0 0.0
        %3737 = vmatpush1.msra.mxu0 0.0
        %3738 = vmatprep.subr.mxu0 0.0
        %3739 = vmatpush1.msra.mxu0 0.0
        %3740 = vmatprep.subr.mxu0 0.0
        %3741 = vmatpush1.msra.mxu0 %v3715
        %3742 = vmatprep.subr.mxu0 0.0
        %3743 = vmatpush1.msra.mxu0 %v3714
        %3744 = vmatprep.subr.mxu0 0.0
        %3745 = vmatpush1.msra.mxu0 %v3713
        %3746 = vmatprep.subr.mxu0 0.0
        %3747 = vmatpush1.msra.mxu0 %v3712
        %3748 = vmatprep.subr.mxu0 0.0
        %3749 = vmatpush1.msra.mxu0 %v3711
        %3750 = vmatprep.subr.mxu0 0.0
        %3751 = vmatpush1.msra.mxu0 %v3710
        %3752 = vmatprep.subr.mxu0 0.0
        %3753 = vmatpush1.msra.mxu0 %v3709
        %3754 = vmatprep.subr.mxu0 0.0
        %3755 = vmatpush1.msra.mxu0 %v3708
        %3756 = vmatprep.subr.mxu0 0.0
        %3757 = vmatpush2.msra.mxu0 0.0
        %3758 = vmatprep.subr.mxu0 0.0
        %3759 = vmatpush2.msra.mxu0 0.0
        %3760 = vmatprep.subr.mxu0 0.0
        %3761 = vmatpush2.msra.mxu0 0.0
        %3762 = vmatprep.subr.mxu0 0.0
        %3763 = vmatpush2.msra.mxu0 0.0
        %3764 = vmatprep.subr.mxu0 0.0
        %3765 = vmatpush2.msra.mxu0 0.0
        %3766 = vmatprep.subr.mxu0 0.0
        %3767 = vmatpush2.msra.mxu0 0.0
        %3768 = vmatprep.subr.mxu0 0.0
        %3769 = vmatpush2.msra.mxu0 0.0
        %3770 = vmatprep.subr.mxu0 0.0
        %3771 = vmatpush2.msra.mxu0 0.0
        %3772 = vmatprep.subr.mxu0 0.0
        %3773 = vmatpush2.msra.mxu0 0.0
        %3774 = vmatprep.subr.mxu0 0.0
        %3775 = vmatpush2.msra.mxu0 0.0
        %3776 = vmatprep.subr.mxu0 0.0
        %3777 = vmatpush2.msra.mxu0 0.0
        %3778 = vmatprep.subr.mxu0 0.0
        %3779 = vmatpush2.msra.mxu0 0.0
        %3780 = vmatprep.subr.mxu0 0.0
        %3781 = vmatpush2.msra.mxu0 0.0
        %3782 = vmatprep.subr.mxu0 0.0
        %3783 = vmatpush2.msra.mxu0 0.0
        %3784 = vmatprep.subr.mxu0 0.0
        %3785 = vmatpush2.msra.mxu0 0.0
        %3786 = vmatprep.subr.mxu0 0.0
        %3787 = vmatpush2.msra.mxu0 0.0
        %3788 = vmatprep.mubr.f32.mxu0 0.0
        %3789 = vmatmul.mubr.f32.gmra.mxu0 %v1382
        %v3790 = vpop.f32.mrf.mxu0
        %v3791 = vadd.f32 %v3722, %v3790
        %v3792 = vpop.f32.mrf.mxu0
        %3793 = vmatprep.mubr.f32.mxu0 0.0
        %3794 = vmatmul.mubr.f32.gmra.mxu0 %v1385
        %v3795 = vpop.f32.mrf.mxu0
        %v3796 = vadd.f32 %v3722, %v3795
        %v3797 = vpop.f32.mrf.mxu0
        %3798 = vmatprep.mubr.f32.mxu0 0.0
        %3799 = vmatmul.mubr.f32.gmra.mxu0 %v1388
        %v3800 = vpop.f32.mrf.mxu0
        %v3801 = vadd.f32 %v3722, %v3800
        %v3802 = vpop.f32.mrf.mxu0
        %3803 = vmatprep.mubr.f32.mxu0 0.0
        %3804 = vmatmul.mubr.f32.gmra.mxu0 %v1391
        %v3805 = vpop.f32.mrf.mxu0
        %v3806 = vadd.f32 %v3722, %v3805
        %v3807 = vpop.f32.mrf.mxu0
        %3808 = vmatprep.mubr.f32.mxu0 0.0
        %3809 = vmatmul.mubr.f32.gmra.mxu0 %v1394
        %v3810 = vpop.f32.mrf.mxu0
        %v3811 = vadd.f32 %v3722, %v3810
        %v3812 = vpop.f32.mrf.mxu0
        %3813 = vmatprep.mubr.f32.mxu0 0.0
        %3814 = vmatmul.mubr.f32.gmra.mxu0 %v1397
        %v3815 = vpop.f32.mrf.mxu0
        %v3816 = vadd.f32 %v3722, %v3815
        %v3817 = vpop.f32.mrf.mxu0
        %3818 = vdwg.mxu0
        %s3819 = scalar_lea.vmem %s927, 192
        %v3820 = vld [vmem:[%s3819] sm:$0xff]
        %v3821 = vld [vmem:[%s3819 + $0x8] sm:$0xff]
        %v3822 = vld [vmem:[%s3819 + $0x10] sm:$0xff]
        %v3823 = vld [vmem:[%s3819 + $0x18] sm:$0xff]
        %v3824 = vld [vmem:[%s3819 + $0x20] sm:$0xff]
        %v3825 = vld [vmem:[%s3819 + $0x28] sm:$0xff]
        %v3826 = vld [vmem:[%s3819 + $0x30] sm:$0xff]
        %v3827 = vld [vmem:[%s3819 + $0x38] sm:$0xff]
        %s3828 = scalar_lea.vmem %s940, 3
        %v3829 = vld [vmem:[%s3828] sm:$0x1]
        %v3831 = vlaneseq
        %v3832 = vshrl.u32 %v3831, 7
        %v3833 = vsub.s32 0, %v3832
        %v3834 = vrot.slane %v3829, %v3833
        %3836 = vmatprep.subr.mxu0 0.0
        %3837 = vmatpush1.msra.mxu0 0.0
        %3838 = vmatprep.subr.mxu0 0.0
        %3839 = vmatpush1.msra.mxu0 0.0
        %3840 = vmatprep.subr.mxu0 0.0
        %3841 = vmatpush1.msra.mxu0 0.0
        %3842 = vmatprep.subr.mxu0 0.0
        %3843 = vmatpush1.msra.mxu0 0.0
        %3844 = vmatprep.subr.mxu0 0.0
        %3845 = vmatpush1.msra.mxu0 0.0
        %3846 = vmatprep.subr.mxu0 0.0
        %3847 = vmatpush1.msra.mxu0 0.0
        %3848 = vmatprep.subr.mxu0 0.0
        %3849 = vmatpush1.msra.mxu0 0.0
        %3850 = vmatprep.subr.mxu0 0.0
        %3851 = vmatpush1.msra.mxu0 0.0
        %3852 = vmatprep.subr.mxu0 0.0
        %3853 = vmatpush1.msra.mxu0 %v3827
        %3854 = vmatprep.subr.mxu0 0.0
        %3855 = vmatpush1.msra.mxu0 %v3826
        %3856 = vmatprep.subr.mxu0 0.0
        %3857 = vmatpush1.msra.mxu0 %v3825
        %3858 = vmatprep.subr.mxu0 0.0
        %3859 = vmatpush1.msra.mxu0 %v3824
        %3860 = vmatprep.subr.mxu0 0.0
        %3861 = vmatpush1.msra.mxu0 %v3823
        %3862 = vmatprep.subr.mxu0 0.0
        %3863 = vmatpush1.msra.mxu0 %v3822
        %3864 = vmatprep.subr.mxu0 0.0
        %3865 = vmatpush1.msra.mxu0 %v3821
        %3866 = vmatprep.subr.mxu0 0.0
        %3867 = vmatpush1.msra.mxu0 %v3820
        %3868 = vmatprep.subr.mxu0 0.0
        %3869 = vmatpush2.msra.mxu0 0.0
        %3870 = vmatprep.subr.mxu0 0.0
        %3871 = vmatpush2.msra.mxu0 0.0
        %3872 = vmatprep.subr.mxu0 0.0
        %3873 = vmatpush2.msra.mxu0 0.0
        %3874 = vmatprep.subr.mxu0 0.0
        %3875 = vmatpush2.msra.mxu0 0.0
        %3876 = vmatprep.subr.mxu0 0.0
        %3877 = vmatpush2.msra.mxu0 0.0
        %3878 = vmatprep.subr.mxu0 0.0
        %3879 = vmatpush2.msra.mxu0 0.0
        %3880 = vmatprep.subr.mxu0 0.0
        %3881 = vmatpush2.msra.mxu0 0.0
        %3882 = vmatprep.subr.mxu0 0.0
        %3883 = vmatpush2.msra.mxu0 0.0
        %3884 = vmatprep.subr.mxu0 0.0
        %3885 = vmatpush2.msra.mxu0 0.0
        %3886 = vmatprep.subr.mxu0 0.0
        %3887 = vmatpush2.msra.mxu0 0.0
        %3888 = vmatprep.subr.mxu0 0.0
        %3889 = vmatpush2.msra.mxu0 0.0
        %3890 = vmatprep.subr.mxu0 0.0
        %3891 = vmatpush2.msra.mxu0 0.0
        %3892 = vmatprep.subr.mxu0 0.0
        %3893 = vmatpush2.msra.mxu0 0.0
        %3894 = vmatprep.subr.mxu0 0.0
        %3895 = vmatpush2.msra.mxu0 0.0
        %3896 = vmatprep.subr.mxu0 0.0
        %3897 = vmatpush2.msra.mxu0 0.0
        %3898 = vmatprep.subr.mxu0 0.0
        %3899 = vmatpush2.msra.mxu0 0.0
        %3900 = vmatprep.mubr.f32.mxu0 0.0
        %3901 = vmatmul.mubr.f32.gmra.mxu0 %v1382
        %v3902 = vpop.f32.mrf.mxu0
        %v3903 = vadd.f32 %v3834, %v3902
        %v3904 = vpop.f32.mrf.mxu0
        %3905 = vmatprep.mubr.f32.mxu0 0.0
        %3906 = vmatmul.mubr.f32.gmra.mxu0 %v1385
        %v3907 = vpop.f32.mrf.mxu0
        %v3908 = vadd.f32 %v3834, %v3907
        %v3909 = vpop.f32.mrf.mxu0
        %3910 = vmatprep.mubr.f32.mxu0 0.0
        %3911 = vmatmul.mubr.f32.gmra.mxu0 %v1388
        %v3912 = vpop.f32.mrf.mxu0
        %v3913 = vadd.f32 %v3834, %v3912
        %v3914 = vpop.f32.mrf.mxu0
        %3915 = vmatprep.mubr.f32.mxu0 0.0
        %3916 = vmatmul.mubr.f32.gmra.mxu0 %v1391
        %v3917 = vpop.f32.mrf.mxu0
        %v3918 = vadd.f32 %v3834, %v3917
        %v3919 = vpop.f32.mrf.mxu0
        %3920 = vmatprep.mubr.f32.mxu0 0.0
        %3921 = vmatmul.mubr.f32.gmra.mxu0 %v1394
        %v3922 = vpop.f32.mrf.mxu0
        %v3923 = vadd.f32 %v3834, %v3922
        %v3924 = vpop.f32.mrf.mxu0
        %3925 = vmatprep.mubr.f32.mxu0 0.0
        %3926 = vmatmul.mubr.f32.gmra.mxu0 %v1397
        %v3927 = vpop.f32.mrf.mxu0
        %v3928 = vadd.f32 %v3834, %v3927
        %v3929 = vpop.f32.mrf.mxu0
        %3930 = vdwg.mxu0
        %s3931 = scalar_lea.vmem %s932, 192
        %v3932 = vld [vmem:[%s3931] sm:$0xff]
        %v3933 = vld [vmem:[%s3931 + $0x8] sm:$0xff]
        %v3934 = vld [vmem:[%s3931 + $0x10] sm:$0xff]
        %v3935 = vld [vmem:[%s3931 + $0x18] sm:$0xff]
        %v3936 = vld [vmem:[%s3931 + $0x20] sm:$0xff]
        %v3937 = vld [vmem:[%s3931 + $0x28] sm:$0xff]
        %v3938 = vld [vmem:[%s3931 + $0x30] sm:$0xff]
        %v3939 = vld [vmem:[%s3931 + $0x38] sm:$0xff]
        %s3940 = scalar_lea.vmem %s944, 3
        %v3941 = vld [vmem:[%s3940] sm:$0x1]
        %v3943 = vlaneseq
        %v3944 = vshrl.u32 %v3943, 7
        %v3945 = vsub.s32 0, %v3944
        %v3946 = vrot.slane %v3941, %v3945
        %3948 = vmatprep.subr.mxu0 0.0
        %3949 = vmatpush1.msra.mxu0 0.0
        %3950 = vmatprep.subr.mxu0 0.0
        %3951 = vmatpush1.msra.mxu0 0.0
        %3952 = vmatprep.subr.mxu0 0.0
        %3953 = vmatpush1.msra.mxu0 0.0
        %3954 = vmatprep.subr.mxu0 0.0
        %3955 = vmatpush1.msra.mxu0 0.0
        %3956 = vmatprep.subr.mxu0 0.0
        %3957 = vmatpush1.msra.mxu0 0.0
        %3958 = vmatprep.subr.mxu0 0.0
        %3959 = vmatpush1.msra.mxu0 0.0
        %3960 = vmatprep.subr.mxu0 0.0
        %3961 = vmatpush1.msra.mxu0 0.0
        %3962 = vmatprep.subr.mxu0 0.0
        %3963 = vmatpush1.msra.mxu0 0.0
        %3964 = vmatprep.subr.mxu0 0.0
        %3965 = vmatpush1.msra.mxu0 %v3939
        %3966 = vmatprep.subr.mxu0 0.0
        %3967 = vmatpush1.msra.mxu0 %v3938
        %3968 = vmatprep.subr.mxu0 0.0
        %3969 = vmatpush1.msra.mxu0 %v3937
        %3970 = vmatprep.subr.mxu0 0.0
        %3971 = vmatpush1.msra.mxu0 %v3936
        %3972 = vmatprep.subr.mxu0 0.0
        %3973 = vmatpush1.msra.mxu0 %v3935
        %3974 = vmatprep.subr.mxu0 0.0
        %3975 = vmatpush1.msra.mxu0 %v3934
        %3976 = vmatprep.subr.mxu0 0.0
        %3977 = vmatpush1.msra.mxu0 %v3933
        %3978 = vmatprep.subr.mxu0 0.0
        %3979 = vmatpush1.msra.mxu0 %v3932
        %3980 = vmatprep.subr.mxu0 0.0
        %3981 = vmatpush2.msra.mxu0 0.0
        %3982 = vmatprep.subr.mxu0 0.0
        %3983 = vmatpush2.msra.mxu0 0.0
        %3984 = vmatprep.subr.mxu0 0.0
        %3985 = vmatpush2.msra.mxu0 0.0
        %3986 = vmatprep.subr.mxu0 0.0
        %3987 = vmatpush2.msra.mxu0 0.0
        %3988 = vmatprep.subr.mxu0 0.0
        %3989 = vmatpush2.msra.mxu0 0.0
        %3990 = vmatprep.subr.mxu0 0.0
        %3991 = vmatpush2.msra.mxu0 0.0
        %3992 = vmatprep.subr.mxu0 0.0
        %3993 = vmatpush2.msra.mxu0 0.0
        %3994 = vmatprep.subr.mxu0 0.0
        %3995 = vmatpush2.msra.mxu0 0.0
        %3996 = vmatprep.subr.mxu0 0.0
        %3997 = vmatpush2.msra.mxu0 0.0
        %3998 = vmatprep.subr.mxu0 0.0
        %3999 = vmatpush2.msra.mxu0 0.0
        %4000 = vmatprep.subr.mxu0 0.0
        %4001 = vmatpush2.msra.mxu0 0.0
        %4002 = vmatprep.subr.mxu0 0.0
        %4003 = vmatpush2.msra.mxu0 0.0
        %4004 = vmatprep.subr.mxu0 0.0
        %4005 = vmatpush2.msra.mxu0 0.0
        %4006 = vmatprep.subr.mxu0 0.0
        %4007 = vmatpush2.msra.mxu0 0.0
        %4008 = vmatprep.subr.mxu0 0.0
        %4009 = vmatpush2.msra.mxu0 0.0
        %4010 = vmatprep.subr.mxu0 0.0
        %4011 = vmatpush2.msra.mxu0 0.0
        %4012 = vmatprep.mubr.f32.mxu0 0.0
        %4013 = vmatmul.mubr.f32.gmra.mxu0 %v1382
        %v4014 = vpop.f32.mrf.mxu0
        %v4015 = vadd.f32 %v3946, %v4014
        %v4016 = vpop.f32.mrf.mxu0
        %4017 = vmatprep.mubr.f32.mxu0 0.0
        %4018 = vmatmul.mubr.f32.gmra.mxu0 %v1385
        %v4019 = vpop.f32.mrf.mxu0
        %v4020 = vadd.f32 %v3946, %v4019
        %v4021 = vpop.f32.mrf.mxu0
        %4022 = vmatprep.mubr.f32.mxu0 0.0
        %4023 = vmatmul.mubr.f32.gmra.mxu0 %v1388
        %v4024 = vpop.f32.mrf.mxu0
        %v4025 = vadd.f32 %v3946, %v4024
        %v4026 = vpop.f32.mrf.mxu0
        %4027 = vmatprep.mubr.f32.mxu0 0.0
        %4028 = vmatmul.mubr.f32.gmra.mxu0 %v1391
        %v4029 = vpop.f32.mrf.mxu0
        %v4030 = vadd.f32 %v3946, %v4029
        %v4031 = vpop.f32.mrf.mxu0
        %4032 = vmatprep.mubr.f32.mxu0 0.0
        %4033 = vmatmul.mubr.f32.gmra.mxu0 %v1394
        %v4034 = vpop.f32.mrf.mxu0
        %v4035 = vadd.f32 %v3946, %v4034
        %v4036 = vpop.f32.mrf.mxu0
        %4037 = vmatprep.mubr.f32.mxu0 0.0
        %4038 = vmatmul.mubr.f32.gmra.mxu0 %v1397
        %v4039 = vpop.f32.mrf.mxu0
        %v4040 = vadd.f32 %v3946, %v4039
        %v4041 = vpop.f32.mrf.mxu0
        %4042 = vdwg.mxu0
        %v4044 = vsel %vm1714, %v3791, 0
        %v4047 = vsel %vm1714, %v3796, 0
        %v4050 = vsel %vm1714, %v3801, 0
        %v4053 = vsel %vm1714, %v3806, 0
        %v4056 = vsel %vm1714, %v3811, 0
        %v4059 = vsel %vm1714, %v3816, 0
        %v4062 = vsel %vm1714, %v3903, 0
        %v4065 = vsel %vm1714, %v3908, 0
        %v4068 = vsel %vm1714, %v3913, 0
        %v4071 = vsel %vm1714, %v3918, 0
        %v4074 = vsel %vm1714, %v3923, 0
        %v4077 = vsel %vm1714, %v3928, 0
        %4079 = vmatprep.subr.mxu0 0.0
        %4080 = vmatpush1.xpose.msra.mxu0 0.0
        %4081 = vmatprep.subr.mxu0 0.0
        %4082 = vmatpush1.xpose.msra.mxu0 0.0
        %4083 = vmatprep.subr.mxu0 0.0
        %4084 = vmatpush1.xpose.msra.mxu0 0.0
        %4085 = vmatprep.subr.mxu0 0.0
        %4086 = vmatpush1.xpose.msra.mxu0 0.0
        %4087 = vmatprep.subr.mxu0 0.0
        %4088 = vmatpush1.xpose.msra.mxu0 0.0
        %4089 = vmatprep.subr.mxu0 0.0
        %4090 = vmatpush1.xpose.msra.mxu0 0.0
        %4091 = vmatprep.subr.mxu0 0.0
        %4092 = vmatpush1.xpose.msra.mxu0 0.0
        %4093 = vmatprep.subr.mxu0 0.0
        %4094 = vmatpush1.xpose.msra.mxu0 0.0
        %4095 = vmatprep.subr.mxu0 0.0
        %4096 = vmatpush1.xpose.msra.mxu0 0.0
        %4097 = vmatprep.subr.mxu0 0.0
        %4098 = vmatpush1.xpose.msra.mxu0 0.0
        %4099 = vmatprep.subr.mxu0 0.0
        %4100 = vmatpush1.xpose.msra.mxu0 %v4077
        %4101 = vmatprep.subr.mxu0 0.0
        %4102 = vmatpush1.xpose.msra.mxu0 %v4074
        %4103 = vmatprep.subr.mxu0 0.0
        %4104 = vmatpush1.xpose.msra.mxu0 %v4071
        %4105 = vmatprep.subr.mxu0 0.0
        %4106 = vmatpush1.xpose.msra.mxu0 %v4068
        %4107 = vmatprep.subr.mxu0 0.0
        %4108 = vmatpush1.xpose.msra.mxu0 %v4065
        %4109 = vmatprep.subr.mxu0 0.0
        %4110 = vmatpush1.xpose.msra.mxu0 %v4062
        %4111 = vmatprep.subr.mxu0 0.0
        %4112 = vmatpush2.xpose.msra.mxu0 0.0
        %4113 = vmatprep.subr.mxu0 0.0
        %4114 = vmatpush2.xpose.msra.mxu0 0.0
        %4115 = vmatprep.subr.mxu0 0.0
        %4116 = vmatpush2.xpose.msra.mxu0 0.0
        %4117 = vmatprep.subr.mxu0 0.0
        %4118 = vmatpush2.xpose.msra.mxu0 0.0
        %4119 = vmatprep.subr.mxu0 0.0
        %4120 = vmatpush2.xpose.msra.mxu0 0.0
        %4121 = vmatprep.subr.mxu0 0.0
        %4122 = vmatpush2.xpose.msra.mxu0 0.0
        %4123 = vmatprep.subr.mxu0 0.0
        %4124 = vmatpush2.xpose.msra.mxu0 0.0
        %4125 = vmatprep.subr.mxu0 0.0
        %4126 = vmatpush2.xpose.msra.mxu0 0.0
        %4127 = vmatprep.subr.mxu0 0.0
        %4128 = vmatpush2.xpose.msra.mxu0 0.0
        %4129 = vmatprep.subr.mxu0 0.0
        %4130 = vmatpush2.xpose.msra.mxu0 0.0
        %4131 = vmatprep.subr.mxu0 0.0
        %4132 = vmatpush2.xpose.msra.mxu0 0.0
        %4133 = vmatprep.subr.mxu0 0.0
        %4134 = vmatpush2.xpose.msra.mxu0 0.0
        %4135 = vmatprep.subr.mxu0 0.0
        %4136 = vmatpush2.xpose.msra.mxu0 0.0
        %4137 = vmatprep.subr.mxu0 0.0
        %4138 = vmatpush2.xpose.msra.mxu0 0.0
        %4139 = vmatprep.subr.mxu0 0.0
        %4140 = vmatpush2.xpose.msra.mxu0 0.0
        %4141 = vmatprep.subr.mxu0 0.0
        %4142 = vmatpush2.xpose.msra.mxu0 0.0
        %4143 = vmatprep.mubr.f32.mxu0 0.0
        %4144 = vmatmul.mubr.f32.gmra.mxu0 %v4044
        %v4145 = vpop.f32.mrf.mxu0
        %v4146 = vadd.f32 0.0, %v4145
        %v4147 = vpop.f32.mrf.mxu0
        %4148 = vmatprep.mubr.f32.mxu0 0.0
        %4149 = vmatmul.mubr.f32.gmra.mxu0 %v4047
        %v4150 = vpop.f32.mrf.mxu0
        %v4151 = vadd.f32 0.0, %v4150
        %v4152 = vpop.f32.mrf.mxu0
        %4153 = vmatprep.mubr.f32.mxu0 0.0
        %4154 = vmatmul.mubr.f32.gmra.mxu0 %v4050
        %v4155 = vpop.f32.mrf.mxu0
        %v4156 = vadd.f32 0.0, %v4155
        %v4157 = vpop.f32.mrf.mxu0
        %4158 = vmatprep.mubr.f32.mxu0 0.0
        %4159 = vmatmul.mubr.f32.gmra.mxu0 %v4053
        %v4160 = vpop.f32.mrf.mxu0
        %v4161 = vadd.f32 0.0, %v4160
        %v4162 = vpop.f32.mrf.mxu0
        %4163 = vmatprep.mubr.f32.mxu0 0.0
        %4164 = vmatmul.mubr.f32.gmra.mxu0 %v4056
        %v4165 = vpop.f32.mrf.mxu0
        %v4166 = vadd.f32 0.0, %v4165
        %v4167 = vpop.f32.mrf.mxu0
        %4168 = vmatprep.mubr.f32.mxu0 0.0
        %4169 = vmatmul.mubr.f32.gmra.mxu0 %v4059
        %v4170 = vpop.f32.mrf.mxu0
        %v4171 = vadd.f32 0.0, %v4170
        %v4172 = vpop.f32.mrf.mxu0
        %4173 = vdwg.mxu0
        %v4174 = vmul.f32 %v4146, 0.25
        %v4175 = vmul.f32 %v4151, 0.25
        %v4176 = vmul.f32 %v4156, 0.25
        %v4177 = vmul.f32 %v4161, 0.25
        %v4178 = vmul.f32 %v4166, 0.25
        %v4179 = vmul.f32 %v4171, 0.25
        %v4180 = vadd.f32 %v4174, %v1360
        %v4181 = vadd.f32 %v4175, %v1361
        %v4182 = vadd.f32 %v4176, %v1362
        %v4183 = vadd.f32 %v4177, %v1363
        %v4184 = vadd.f32 %v4178, %v1364
        %v4185 = vadd.f32 %v4179, %v1365
        %v4186 = vsel %vm1858, %v4180, -inf
        %4187 = vmax.xlane.f32.xlu0 %v4186
        %v4188 = vpop.xlane.xlu0 %4187
        %v4189 = vsel %vm1858, %v4181, -inf
        %4190 = vmax.xlane.f32.xlu0 %v4189
        %v4191 = vpop.xlane.xlu0 %4190
        %v4192 = vsel %vm1858, %v4182, -inf
        %4193 = vmax.xlane.f32.xlu0 %v4192
        %v4194 = vpop.xlane.xlu0 %4193
        %v4195 = vsel %vm1858, %v4183, -inf
        %4196 = vmax.xlane.f32.xlu0 %v4195
        %v4197 = vpop.xlane.xlu0 %4196
        %v4198 = vsel %vm1858, %v4184, -inf
        %4199 = vmax.xlane.f32.xlu0 %v4198
        %v4200 = vpop.xlane.xlu0 %4199
        %v4201 = vsel %vm1858, %v4185, -inf
        %4202 = vmax.xlane.f32.xlu0 %v4201
        %v4203 = vpop.xlane.xlu0 %4202
        %v4204 = vsub.f32 %v4180, %v4188
        %v4205 = vsub.f32 %v4181, %v4191
        %v4206 = vsub.f32 %v4182, %v4194
        %v4207 = vsub.f32 %v4183, %v4197
        %v4208 = vsub.f32 %v4184, %v4200
        %v4209 = vsub.f32 %v4185, %v4203
        %v4210 = vmul.f32 %v4204, 1.442695
        %v4211 = vpow.pop %v4210
        %v4212 = vmul.f32 %v4205, 1.442695
        %v4213 = vpow.pop %v4212
        %v4214 = vmul.f32 %v4206, 1.442695
        %v4215 = vpow.pop %v4214
        %v4216 = vmul.f32 %v4207, 1.442695
        %v4217 = vpow.pop %v4216
        %v4218 = vmul.f32 %v4208, 1.442695
        %v4219 = vpow.pop %v4218
        %v4220 = vmul.f32 %v4209, 1.442695
        %v4221 = vpow.pop %v4220
        %v4222 = vsel %vm1858, %v4211, 0.0
        %4223 = vadd.xlane.f32.xlu0 %v4222
        %v4224 = vpop.xlane.xlu0 %4223
        %v4225 = vsel %vm1858, %v4213, 0.0
        %4226 = vadd.xlane.f32.xlu0 %v4225
        %v4227 = vpop.xlane.xlu0 %4226
        %v4228 = vsel %vm1858, %v4215, 0.0
        %4229 = vadd.xlane.f32.xlu0 %v4228
        %v4230 = vpop.xlane.xlu0 %4229
        %v4231 = vsel %vm1858, %v4217, 0.0
        %4232 = vadd.xlane.f32.xlu0 %v4231
        %v4233 = vpop.xlane.xlu0 %4232
        %v4234 = vsel %vm1858, %v4219, 0.0
        %4235 = vadd.xlane.f32.xlu0 %v4234
        %v4236 = vpop.xlane.xlu0 %4235
        %v4237 = vsel %vm1858, %v4221, 0.0
        %4238 = vadd.xlane.f32.xlu0 %v4237
        %v4239 = vpop.xlane.xlu0 %4238
        %v4240 = vrcp.pop %v4224
        %v4241 = vmul.f32 %v4211, %v4240
        %v4242 = vrcp.pop %v4227
        %v4243 = vmul.f32 %v4213, %v4242
        %v4244 = vrcp.pop %v4230
        %v4245 = vmul.f32 %v4215, %v4244
        %v4246 = vrcp.pop %v4233
        %v4247 = vmul.f32 %v4217, %v4246
        %v4248 = vrcp.pop %v4236
        %v4249 = vmul.f32 %v4219, %v4248
        %v4250 = vrcp.pop %v4239
        %v4251 = vmul.f32 %v4221, %v4250
        %v4253 = vsel %vm1858, %v4241, 0
        %v4256 = vsel %vm1858, %v4243, 0
        %v4259 = vsel %vm1858, %v4245, 0
        %v4262 = vsel %vm1858, %v4247, 0
        %v4265 = vsel %vm1858, %v4249, 0
        %v4268 = vsel %vm1858, %v4251, 0
        %4270 = vmatprep.subr.mxu0 0.0
        %4271 = vmatpush1.msra.mxu0 0.0
        %4272 = vmatprep.subr.mxu0 0.0
        %4273 = vmatpush1.msra.mxu0 0.0
        %4274 = vmatprep.subr.mxu0 0.0
        %4275 = vmatpush1.msra.mxu0 0.0
        %4276 = vmatprep.subr.mxu0 0.0
        %4277 = vmatpush1.msra.mxu0 0.0
        %4278 = vmatprep.subr.mxu0 0.0
        %4279 = vmatpush1.msra.mxu0 0.0
        %4280 = vmatprep.subr.mxu0 0.0
        %4281 = vmatpush1.msra.mxu0 0.0
        %4282 = vmatprep.subr.mxu0 0.0
        %4283 = vmatpush1.msra.mxu0 0.0
        %4284 = vmatprep.subr.mxu0 0.0
        %4285 = vmatpush1.msra.mxu0 0.0
        %4286 = vmatprep.subr.mxu0 0.0
        %4287 = vmatpush1.msra.mxu0 0.0
        %4288 = vmatprep.subr.mxu0 0.0
        %4289 = vmatpush1.msra.mxu0 0.0
        %4290 = vmatprep.subr.mxu0 0.0
        %4291 = vmatpush1.msra.mxu0 %v4040
        %4292 = vmatprep.subr.mxu0 0.0
        %4293 = vmatpush1.msra.mxu0 %v4035
        %4294 = vmatprep.subr.mxu0 0.0
        %4295 = vmatpush1.msra.mxu0 %v4030
        %4296 = vmatprep.subr.mxu0 0.0
        %4297 = vmatpush1.msra.mxu0 %v4025
        %4298 = vmatprep.subr.mxu0 0.0
        %4299 = vmatpush1.msra.mxu0 %v4020
        %4300 = vmatprep.subr.mxu0 0.0
        %4301 = vmatpush1.msra.mxu0 %v4015
        %4302 = vmatprep.subr.mxu0 0.0
        %4303 = vmatpush2.msra.mxu0 0.0
        %4304 = vmatprep.subr.mxu0 0.0
        %4305 = vmatpush2.msra.mxu0 0.0
        %4306 = vmatprep.subr.mxu0 0.0
        %4307 = vmatpush2.msra.mxu0 0.0
        %4308 = vmatprep.subr.mxu0 0.0
        %4309 = vmatpush2.msra.mxu0 0.0
        %4310 = vmatprep.subr.mxu0 0.0
        %4311 = vmatpush2.msra.mxu0 0.0
        %4312 = vmatprep.subr.mxu0 0.0
        %4313 = vmatpush2.msra.mxu0 0.0
        %4314 = vmatprep.subr.mxu0 0.0
        %4315 = vmatpush2.msra.mxu0 0.0
        %4316 = vmatprep.subr.mxu0 0.0
        %4317 = vmatpush2.msra.mxu0 0.0
        %4318 = vmatprep.subr.mxu0 0.0
        %4319 = vmatpush2.msra.mxu0 0.0
        %4320 = vmatprep.subr.mxu0 0.0
        %4321 = vmatpush2.msra.mxu0 0.0
        %4322 = vmatprep.subr.mxu0 0.0
        %4323 = vmatpush2.msra.mxu0 0.0
        %4324 = vmatprep.subr.mxu0 0.0
        %4325 = vmatpush2.msra.mxu0 0.0
        %4326 = vmatprep.subr.mxu0 0.0
        %4327 = vmatpush2.msra.mxu0 0.0
        %4328 = vmatprep.subr.mxu0 0.0
        %4329 = vmatpush2.msra.mxu0 0.0
        %4330 = vmatprep.subr.mxu0 0.0
        %4331 = vmatpush2.msra.mxu0 0.0
        %4332 = vmatprep.subr.mxu0 0.0
        %4333 = vmatpush2.msra.mxu0 0.0
        %4334 = vmatprep.mubr.f32.mxu0 0.0
        %4335 = vmatmul.mubr.f32.gmra.mxu0 %v4253
        %v4336 = vpop.f32.mrf.mxu0
        %v4337 = vadd.f32 0.0, %v4336
        %v4338 = vpop.f32.mrf.mxu0
        %4339 = vmatprep.mubr.f32.mxu0 0.0
        %4340 = vmatmul.mubr.f32.gmra.mxu0 %v4256
        %v4341 = vpop.f32.mrf.mxu0
        %v4342 = vadd.f32 0.0, %v4341
        %v4343 = vpop.f32.mrf.mxu0
        %4344 = vmatprep.mubr.f32.mxu0 0.0
        %4345 = vmatmul.mubr.f32.gmra.mxu0 %v4259
        %v4346 = vpop.f32.mrf.mxu0
        %v4347 = vadd.f32 0.0, %v4346
        %v4348 = vpop.f32.mrf.mxu0
        %4349 = vmatprep.mubr.f32.mxu0 0.0
        %4350 = vmatmul.mubr.f32.gmra.mxu0 %v4262
        %v4351 = vpop.f32.mrf.mxu0
        %v4352 = vadd.f32 0.0, %v4351
        %v4353 = vpop.f32.mrf.mxu0
        %4354 = vmatprep.mubr.f32.mxu0 0.0
        %4355 = vmatmul.mubr.f32.gmra.mxu0 %v4265
        %v4356 = vpop.f32.mrf.mxu0
        %v4357 = vadd.f32 0.0, %v4356
        %v4358 = vpop.f32.mrf.mxu0
        %4359 = vmatprep.mubr.f32.mxu0 0.0
        %4360 = vmatmul.mubr.f32.gmra.mxu0 %v4268
        %v4361 = vpop.f32.mrf.mxu0
        %v4362 = vadd.f32 0.0, %v4361
        %v4363 = vpop.f32.mrf.mxu0
        %4364 = vdwg.mxu0
        %s4365 = scalar_lea.vmem %s949, 48
        %v4366 = vld [vmem:[%s4365] sm:$0xff]
        %v4367 = vld [vmem:[%s4365 + $0x8] sm:$0xff]
        %v4369 = vsel %vm1714, %v4337, 0
        %v4372 = vsel %vm1714, %v4342, 0
        %v4375 = vsel %vm1714, %v4347, 0
        %v4378 = vsel %vm1714, %v4352, 0
        %v4381 = vsel %vm1714, %v4357, 0
        %v4384 = vsel %vm1714, %v4362, 0
        %4386 = vmatprep.subr.mxu0 0.0
        %4387 = vmatpush1.msra.mxu0 0.0
        %4388 = vmatprep.subr.mxu0 0.0
        %4389 = vmatpush1.msra.mxu0 0.0
        %4390 = vmatprep.subr.mxu0 0.0
        %4391 = vmatpush1.msra.mxu0 0.0
        %4392 = vmatprep.subr.mxu0 0.0
        %4393 = vmatpush1.msra.mxu0 0.0
        %4394 = vmatprep.subr.mxu0 0.0
        %4395 = vmatpush1.msra.mxu0 0.0
        %4396 = vmatprep.subr.mxu0 0.0
        %4397 = vmatpush1.msra.mxu0 0.0
        %4398 = vmatprep.subr.mxu0 0.0
        %4399 = vmatpush1.msra.mxu0 0.0
        %4400 = vmatprep.subr.mxu0 0.0
        %4401 = vmatpush1.msra.mxu0 0.0
        %4402 = vmatprep.subr.mxu0 0.0
        %4403 = vmatpush1.msra.mxu0 0.0
        %4404 = vmatprep.subr.mxu0 0.0
        %4405 = vmatpush1.msra.mxu0 0.0
        %4406 = vmatprep.subr.mxu0 0.0
        %4407 = vmatpush1.msra.mxu0 0.0
        %4408 = vmatprep.subr.mxu0 0.0
        %4409 = vmatpush1.msra.mxu0 0.0
        %4410 = vmatprep.subr.mxu0 0.0
        %4411 = vmatpush1.msra.mxu0 0.0
        %4412 = vmatprep.subr.mxu0 0.0
        %4413 = vmatpush1.msra.mxu0 0.0
        %4414 = vmatprep.subr.mxu0 0.0
        %4415 = vmatpush1.msra.mxu0 %v4367
        %4416 = vmatprep.subr.mxu0 0.0
        %4417 = vmatpush1.msra.mxu0 %v4366
        %4418 = vmatprep.subr.mxu0 0.0
        %4419 = vmatpush2.msra.mxu0 0.0
        %4420 = vmatprep.subr.mxu0 0.0
        %4421 = vmatpush2.msra.mxu0 0.0
        %4422 = vmatprep.subr.mxu0 0.0
        %4423 = vmatpush2.msra.mxu0 0.0
        %4424 = vmatprep.subr.mxu0 0.0
        %4425 = vmatpush2.msra.mxu0 0.0
        %4426 = vmatprep.subr.mxu0 0.0
        %4427 = vmatpush2.msra.mxu0 0.0
        %4428 = vmatprep.subr.mxu0 0.0
        %4429 = vmatpush2.msra.mxu0 0.0
        %4430 = vmatprep.subr.mxu0 0.0
        %4431 = vmatpush2.msra.mxu0 0.0
        %4432 = vmatprep.subr.mxu0 0.0
        %4433 = vmatpush2.msra.mxu0 0.0
        %4434 = vmatprep.subr.mxu0 0.0
        %4435 = vmatpush2.msra.mxu0 0.0
        %4436 = vmatprep.subr.mxu0 0.0
        %4437 = vmatpush2.msra.mxu0 0.0
        %4438 = vmatprep.subr.mxu0 0.0
        %4439 = vmatpush2.msra.mxu0 0.0
        %4440 = vmatprep.subr.mxu0 0.0
        %4441 = vmatpush2.msra.mxu0 0.0
        %4442 = vmatprep.subr.mxu0 0.0
        %4443 = vmatpush2.msra.mxu0 0.0
        %4444 = vmatprep.subr.mxu0 0.0
        %4445 = vmatpush2.msra.mxu0 0.0
        %4446 = vmatprep.subr.mxu0 0.0
        %4447 = vmatpush2.msra.mxu0 0.0
        %4448 = vmatprep.subr.mxu0 0.0
        %4449 = vmatpush2.msra.mxu0 0.0
        %4450 = vmatprep.mubr.f32.mxu0 0.0
        %4451 = vmatmul.mubr.f32.gmra.mxu0 %v4369
        %v4452 = vpop.f32.mrf.mxu0
        %v4453 = vadd.f32 0.0, %v4452
        %v4454 = vpop.f32.mrf.mxu0
        %4455 = vmatprep.mubr.f32.mxu0 0.0
        %4456 = vmatmul.mubr.f32.gmra.mxu0 %v4372
        %v4457 = vpop.f32.mrf.mxu0
        %v4458 = vadd.f32 0.0, %v4457
        %v4459 = vpop.f32.mrf.mxu0
        %4460 = vmatprep.mubr.f32.mxu0 0.0
        %4461 = vmatmul.mubr.f32.gmra.mxu0 %v4375
        %v4462 = vpop.f32.mrf.mxu0
        %v4463 = vadd.f32 0.0, %v4462
        %v4464 = vpop.f32.mrf.mxu0
        %4465 = vmatprep.mubr.f32.mxu0 0.0
        %4466 = vmatmul.mubr.f32.gmra.mxu0 %v4378
        %v4467 = vpop.f32.mrf.mxu0
        %v4468 = vadd.f32 0.0, %v4467
        %v4469 = vpop.f32.mrf.mxu0
        %4470 = vmatprep.mubr.f32.mxu0 0.0
        %4471 = vmatmul.mubr.f32.gmra.mxu0 %v4381
        %v4472 = vpop.f32.mrf.mxu0
        %v4473 = vadd.f32 0.0, %v4472
        %v4474 = vpop.f32.mrf.mxu0
        %4475 = vmatprep.mubr.f32.mxu0 0.0
        %4476 = vmatmul.mubr.f32.gmra.mxu0 %v4384
        %v4477 = vpop.f32.mrf.mxu0
        %v4478 = vadd.f32 0.0, %v4477
        %v4479 = vpop.f32.mrf.mxu0
        %4480 = vdwg.mxu0
        %v4481 = vadd.f32 %v3701, %v4453
        %v4482 = vadd.f32 %v3702, %v4458
        %v4483 = vadd.f32 %v3703, %v4463
        %v4484 = vadd.f32 %v3704, %v4468
        %v4485 = vadd.f32 %v3705, %v4473
        %v4486 = vadd.f32 %v3706, %v4478
        %v4487 = vadd.f32 %v1248, %v4481
        %v4488 = vadd.f32 %v1249, %v4482
        %v4489 = vadd.f32 %v1250, %v4483
        %v4490 = vadd.f32 %v1251, %v4484
        %v4491 = vadd.f32 %v1252, %v4485
        %v4492 = vadd.f32 %v1253, %v4486
        %v4493 = vld [vmem:[%s952] sm:$0x1]
        %v4495 = vlaneseq
        %v4496 = vshrl.u32 %v4495, 7
        %v4497 = vsub.s32 0, %v4496
        %v4498 = vrot.slane %v4493, %v4497
        %v4500 = vadd.f32 %v4487, %v4498
        %v4501 = vadd.f32 %v4488, %v4498
        %v4502 = vadd.f32 %v4489, %v4498
        %v4503 = vadd.f32 %v4490, %v4498
        %v4504 = vadd.f32 %v4491, %v4498
        %v4505 = vadd.f32 %v4492, %v4498
        %v4506 = vld [vmem:[%s955] sm:$0x1]
        %v4507 = vld [vmem:[%s958] sm:$0x1]
        %v4508 = vsel %vm1256, %v4500, 0.0
        %4509 = vadd.xlane.f32.xlu0 %v4508
        %v4510 = vpop.xlane.xlu0 %4509
        %v4511 = vsel %vm1256, %v4501, 0.0
        %4512 = vadd.xlane.f32.xlu0 %v4511
        %v4513 = vpop.xlane.xlu0 %4512
        %v4514 = vsel %vm1256, %v4502, 0.0
        %4515 = vadd.xlane.f32.xlu0 %v4514
        %v4516 = vpop.xlane.xlu0 %4515
        %v4517 = vsel %vm1256, %v4503, 0.0
        %4518 = vadd.xlane.f32.xlu0 %v4517
        %v4519 = vpop.xlane.xlu0 %4518
        %v4520 = vsel %vm1256, %v4504, 0.0
        %4521 = vadd.xlane.f32.xlu0 %v4520
        %v4522 = vpop.xlane.xlu0 %4521
        %v4523 = vsel %vm1256, %v4505, 0.0
        %4524 = vadd.xlane.f32.xlu0 %v4523
        %v4525 = vpop.xlane.xlu0 %4524
        %v4526 = vmul.f32 %v4510, %v1275
        %v4527 = vmul.f32 %v4513, %v1275
        %v4528 = vmul.f32 %v4516, %v1275
        %v4529 = vmul.f32 %v4519, %v1275
        %v4530 = vmul.f32 %v4522, %v1275
        %v4531 = vmul.f32 %v4525, %v1275
        %v4532 = vsub.f32 %v4500, %v4526
        %v4533 = vsub.f32 %v4501, %v4527
        %v4534 = vsub.f32 %v4502, %v4528
        %v4535 = vsub.f32 %v4503, %v4529
        %v4536 = vsub.f32 %v4504, %v4530
        %v4537 = vsub.f32 %v4505, %v4531
        %v4538 = vmul.f32 %v4532, %v4532
        %v4539 = vmul.f32 %v4533, %v4533
        %v4540 = vmul.f32 %v4534, %v4534
        %v4541 = vmul.f32 %v4535, %v4535
        %v4542 = vmul.f32 %v4536, %v4536
        %v4543 = vmul.f32 %v4537, %v4537
        %v4544 = vsel %vm1256, %v4538, 0.0
        %4545 = vadd.xlane.f32.xlu0 %v4544
        %v4546 = vpop.xlane.xlu0 %4545
        %v4547 = vsel %vm1256, %v4539, 0.0
        %4548 = vadd.xlane.f32.xlu0 %v4547
        %v4549 = vpop.xlane.xlu0 %4548
        %v4550 = vsel %vm1256, %v4540, 0.0
        %4551 = vadd.xlane.f32.xlu0 %v4550
        %v4552 = vpop.xlane.xlu0 %4551
        %v4553 = vsel %vm1256, %v4541, 0.0
        %4554 = vadd.xlane.f32.xlu0 %v4553
        %v4555 = vpop.xlane.xlu0 %4554
        %v4556 = vsel %vm1256, %v4542, 0.0
        %4557 = vadd.xlane.f32.xlu0 %v4556
        %v4558 = vpop.xlane.xlu0 %4557
        %v4559 = vsel %vm1256, %v4543, 0.0
        %4560 = vadd.xlane.f32.xlu0 %v4559
        %v4561 = vpop.xlane.xlu0 %4560
        %v4562 = vmul.f32 %v4546, %v1275
        %v4563 = vmul.f32 %v4549, %v1275
        %v4564 = vmul.f32 %v4552, %v1275
        %v4565 = vmul.f32 %v4555, %v1275
        %v4566 = vmul.f32 %v4558, %v1275
        %v4567 = vmul.f32 %v4561, %v1275
        %v4568 = vadd.f32 %v4562, 1e-06
        %v4569 = vadd.f32 %v4563, 1e-06
        %v4570 = vadd.f32 %v4564, 1e-06
        %v4571 = vadd.f32 %v4565, 1e-06
        %v4572 = vadd.f32 %v4566, 1e-06
        %v4573 = vadd.f32 %v4567, 1e-06
        %v4574 = vrsqrt.pop %v4568
        %v4575 = vrsqrt.pop %v4569
        %v4576 = vrsqrt.pop %v4570
        %v4577 = vrsqrt.pop %v4571
        %v4578 = vrsqrt.pop %v4572
        %v4579 = vrsqrt.pop %v4573
        %v4580 = vmul.f32 %v4532, %v4574
        %v4581 = vmul.f32 %v4533, %v4575
        %v4582 = vmul.f32 %v4534, %v4576
        %v4583 = vmul.f32 %v4535, %v4577
        %v4584 = vmul.f32 %v4536, %v4578
        %v4585 = vmul.f32 %v4537, %v4579
        %v4587 = vlaneseq
        %v4588 = vshrl.u32 %v4587, 7
        %v4589 = vsub.s32 0, %v4588
        %v4590 = vrot.slane %v4506, %v4589
        %v4592 = vmul.f32 %v4580, %v4590
        %v4593 = vmul.f32 %v4581, %v4590
        %v4594 = vmul.f32 %v4582, %v4590
        %v4595 = vmul.f32 %v4583, %v4590
        %v4596 = vmul.f32 %v4584, %v4590
        %v4597 = vmul.f32 %v4585, %v4590
        %v4599 = vlaneseq
        %v4600 = vshrl.u32 %v4599, 7
        %v4601 = vsub.s32 0, %v4600
        %v4602 = vrot.slane %v4507, %v4601
        %v4604 = vadd.f32 %v4592, %v4602
        %v4605 = vadd.f32 %v4593, %v4602
        %v4606 = vadd.f32 %v4594, %v4602
        %v4607 = vadd.f32 %v4595, %v4602
        %v4608 = vadd.f32 %v4596, %v4602
        %v4609 = vadd.f32 %v4597, %v4602
        %v4610 = vld [vmem:[%s963] sm:$0xff]
        %v4611 = vld [vmem:[%s963 + $0x8] sm:$0xff]
        %v4612 = vld [vmem:[%s963 + $0x10] sm:$0xff]
        %v4613 = vld [vmem:[%s963 + $0x18] sm:$0xff]
        %v4614 = vld [vmem:[%s963 + $0x20] sm:$0xff]
        %v4615 = vld [vmem:[%s963 + $0x28] sm:$0xff]
        %v4616 = vld [vmem:[%s963 + $0x30] sm:$0xff]
        %v4617 = vld [vmem:[%s963 + $0x38] sm:$0xff]
        %v4618 = vld [vmem:[%s963 + $0x40] sm:$0xff]
        %v4619 = vld [vmem:[%s963 + $0x48] sm:$0xff]
        %v4620 = vld [vmem:[%s963 + $0x50] sm:$0xff]
        %v4621 = vld [vmem:[%s963 + $0x58] sm:$0xff]
        %v4622 = vld [vmem:[%s963 + $0x60] sm:$0xff]
        %v4623 = vld [vmem:[%s963 + $0x68] sm:$0xff]
        %v4624 = vld [vmem:[%s963 + $0x70] sm:$0xff]
        %v4625 = vld [vmem:[%s963 + $0x78] sm:$0xff]
        %v4626 = vld [vmem:[%s967] sm:$0x3]
        %v4628 = vlaneseq
        %v4629 = vshrl.u32 %v4628, 7
        %v4630 = vsub.s32 0, %v4629
        %v4631 = vrot.slane %v4626, %v4630
        %v4632 = vlaneseq
        %v4633 = vshrl.u32 %v4632, 7
        %v4634 = vsub.s32 1, %v4633
        %v4635 = vrot.slane %v4626, %v4634
        %v4639 = vsel %vm1256, %v4604, 0
        %v4642 = vsel %vm1256, %v4605, 0
        %v4645 = vsel %vm1256, %v4606, 0
        %v4648 = vsel %vm1256, %v4607, 0
        %v4651 = vsel %vm1256, %v4608, 0
        %v4654 = vsel %vm1256, %v4609, 0
        %4656 = vmatprep.subr.mxu0 0.0
        %4657 = vmatpush1.msra.mxu0 0.0
        %4658 = vmatprep.subr.mxu0 0.0
        %4659 = vmatpush1.msra.mxu0 0.0
        %4660 = vmatprep.subr.mxu0 0.0
        %4661 = vmatpush1.msra.mxu0 0.0
        %4662 = vmatprep.subr.mxu0 0.0
        %4663 = vmatpush1.msra.mxu0 0.0
        %4664 = vmatprep.subr.mxu0 0.0
        %4665 = vmatpush1.msra.mxu0 0.0
        %4666 = vmatprep.subr.mxu0 0.0
        %4667 = vmatpush1.msra.mxu0 0.0
        %4668 = vmatprep.subr.mxu0 0.0
        %4669 = vmatpush1.msra.mxu0 0.0
        %4670 = vmatprep.subr.mxu0 0.0
        %4671 = vmatpush1.msra.mxu0 0.0
        %4672 = vmatprep.subr.mxu0 %v4625
        %4673 = vmatpush1.msra.mxu0 %v4624
        %4674 = vmatprep.subr.mxu0 %v4623
        %4675 = vmatpush1.msra.mxu0 %v4622
        %4676 = vmatprep.subr.mxu0 %v4621
        %4677 = vmatpush1.msra.mxu0 %v4620
        %4678 = vmatprep.subr.mxu0 %v4619
        %4679 = vmatpush1.msra.mxu0 %v4618
        %4680 = vmatprep.subr.mxu0 %v4617
        %4681 = vmatpush1.msra.mxu0 %v4616
        %4682 = vmatprep.subr.mxu0 %v4615
        %4683 = vmatpush1.msra.mxu0 %v4614
        %4684 = vmatprep.subr.mxu0 %v4613
        %4685 = vmatpush1.msra.mxu0 %v4612
        %4686 = vmatprep.subr.mxu0 %v4611
        %4687 = vmatpush1.msra.mxu0 %v4610
        %4688 = vmatprep.subr.mxu0 0.0
        %4689 = vmatpush2.msra.mxu0 0.0
        %4690 = vmatprep.subr.mxu0 0.0
        %4691 = vmatpush2.msra.mxu0 0.0
        %4692 = vmatprep.subr.mxu0 0.0
        %4693 = vmatpush2.msra.mxu0 0.0
        %4694 = vmatprep.subr.mxu0 0.0
        %4695 = vmatpush2.msra.mxu0 0.0
        %4696 = vmatprep.subr.mxu0 0.0
        %4697 = vmatpush2.msra.mxu0 0.0
        %4698 = vmatprep.subr.mxu0 0.0
        %4699 = vmatpush2.msra.mxu0 0.0
        %4700 = vmatprep.subr.mxu0 0.0
        %4701 = vmatpush2.msra.mxu0 0.0
        %4702 = vmatprep.subr.mxu0 0.0
        %4703 = vmatpush2.msra.mxu0 0.0
        %4704 = vmatprep.subr.mxu0 0.0
        %4705 = vmatpush2.msra.mxu0 0.0
        %4706 = vmatprep.subr.mxu0 0.0
        %4707 = vmatpush2.msra.mxu0 0.0
        %4708 = vmatprep.subr.mxu0 0.0
        %4709 = vmatpush2.msra.mxu0 0.0
        %4710 = vmatprep.subr.mxu0 0.0
        %4711 = vmatpush2.msra.mxu0 0.0
        %4712 = vmatprep.subr.mxu0 0.0
        %4713 = vmatpush2.msra.mxu0 0.0
        %4714 = vmatprep.subr.mxu0 0.0
        %4715 = vmatpush2.msra.mxu0 0.0
        %4716 = vmatprep.subr.mxu0 0.0
        %4717 = vmatpush2.msra.mxu0 0.0
        %4718 = vmatprep.subr.mxu0 0.0
        %4719 = vmatpush2.msra.mxu0 0.0
        %4720 = vmatprep.mubr.f32.mxu0 0.0
        %4721 = vmatmul.mubr.f32.gmra.mxu0 %v4639
        %v4722 = vpop.f32.mrf.mxu0
        %v4723 = vadd.f32 %v4631, %v4722
        %v4724 = vpop.f32.mrf.mxu0
        %v4725 = vadd.f32 %v4635, %v4724
        %4726 = vmatprep.mubr.f32.mxu0 0.0
        %4727 = vmatmul.mubr.f32.gmra.mxu0 %v4642
        %v4728 = vpop.f32.mrf.mxu0
        %v4729 = vadd.f32 %v4631, %v4728
        %v4730 = vpop.f32.mrf.mxu0
        %v4731 = vadd.f32 %v4635, %v4730
        %4732 = vmatprep.mubr.f32.mxu0 0.0
        %4733 = vmatmul.mubr.f32.gmra.mxu0 %v4645
        %v4734 = vpop.f32.mrf.mxu0
        %v4735 = vadd.f32 %v4631, %v4734
        %v4736 = vpop.f32.mrf.mxu0
        %v4737 = vadd.f32 %v4635, %v4736
        %4738 = vmatprep.mubr.f32.mxu0 0.0
        %4739 = vmatmul.mubr.f32.gmra.mxu0 %v4648
        %v4740 = vpop.f32.mrf.mxu0
        %v4741 = vadd.f32 %v4631, %v4740
        %v4742 = vpop.f32.mrf.mxu0
        %v4743 = vadd.f32 %v4635, %v4742
        %4744 = vmatprep.mubr.f32.mxu0 0.0
        %4745 = vmatmul.mubr.f32.gmra.mxu0 %v4651
        %v4746 = vpop.f32.mrf.mxu0
        %v4747 = vadd.f32 %v4631, %v4746
        %v4748 = vpop.f32.mrf.mxu0
        %v4749 = vadd.f32 %v4635, %v4748
        %4750 = vmatprep.mubr.f32.mxu0 0.0
        %4751 = vmatmul.mubr.f32.gmra.mxu0 %v4654
        %v4752 = vpop.f32.mrf.mxu0
        %v4753 = vadd.f32 %v4631, %v4752
        %v4754 = vpop.f32.mrf.mxu0
        %v4755 = vadd.f32 %v4635, %v4754
        %4756 = vdwg.mxu0
        %v4757 = vmul.f32 %v4723, %v4723
        %v4758 = vmul.f32 %v4725, %v4725
        %v4759 = vmul.f32 %v4729, %v4729
        %v4760 = vmul.f32 %v4731, %v4731
        %v4761 = vmul.f32 %v4735, %v4735
        %v4762 = vmul.f32 %v4737, %v4737
        %v4763 = vmul.f32 %v4741, %v4741
        %v4764 = vmul.f32 %v4743, %v4743
        %v4765 = vmul.f32 %v4747, %v4747
        %v4766 = vmul.f32 %v4749, %v4749
        %v4767 = vmul.f32 %v4753, %v4753
        %v4768 = vmul.f32 %v4755, %v4755
        %v4769 = vmul.f32 %v4723, %v4757
        %v4770 = vmul.f32 %v4725, %v4758
        %v4771 = vmul.f32 %v4729, %v4759
        %v4772 = vmul.f32 %v4731, %v4760
        %v4773 = vmul.f32 %v4735, %v4761
        %v4774 = vmul.f32 %v4737, %v4762
        %v4775 = vmul.f32 %v4741, %v4763
        %v4776 = vmul.f32 %v4743, %v4764
        %v4777 = vmul.f32 %v4747, %v4765
        %v4778 = vmul.f32 %v4749, %v4766
        %v4779 = vmul.f32 %v4753, %v4767
        %v4780 = vmul.f32 %v4755, %v4768
        %v4781 = vmul.f32 %v4769, 0.044715
        %v4782 = vmul.f32 %v4770, 0.044715
        %v4783 = vmul.f32 %v4771, 0.044715
        %v4784 = vmul.f32 %v4772, 0.044715
        %v4785 = vmul.f32 %v4773, 0.044715
        %v4786 = vmul.f32 %v4774, 0.044715
        %v4787 = vmul.f32 %v4775, 0.044715
        %v4788 = vmul.f32 %v4776, 0.044715
        %v4789 = vmul.f32 %v4777, 0.044715
        %v4790 = vmul.f32 %v4778, 0.044715
        %v4791 = vmul.f32 %v4779, 0.044715
        %v4792 = vmul.f32 %v4780, 0.044715
        %v4793 = vadd.f32 %v4723, %v4781
        %v4794 = vadd.f32 %v4725, %v4782
        %v4795 = vadd.f32 %v4729, %v4783
        %v4796 = vadd.f32 %v4731, %v4784
        %v4797 = vadd.f32 %v4735, %v4785
        %v4798 = vadd.f32 %v4737, %v4786
        %v4799 = vadd.f32 %v4741, %v4787
        %v4800 = vadd.f32 %v4743, %v4788
        %v4801 = vadd.f32 %v4747, %v4789
        %v4802 = vadd.f32 %v4749, %v4790
        %v4803 = vadd.f32 %v4753, %v4791
        %v4804 = vadd.f32 %v4755, %v4792
        %v4805 = vmul.f32 %v4793, 0.7978846
        %v4806 = vmul.f32 %v4794, 0.7978846
        %v4807 = vmul.f32 %v4795, 0.7978846
        %v4808 = vmul.f32 %v4796, 0.7978846
        %v4809 = vmul.f32 %v4797, 0.7978846
        %v4810 = vmul.f32 %v4798, 0.7978846
        %v4811 = vmul.f32 %v4799, 0.7978846
        %v4812 = vmul.f32 %v4800, 0.7978846
        %v4813 = vmul.f32 %v4801, 0.7978846
        %v4814 = vmul.f32 %v4802, 0.7978846
        %v4815 = vmul.f32 %v4803, 0.7978846
        %v4816 = vmul.f32 %v4804, 0.7978846
        %v4817 = vtanh.pop %v4805
        %v4818 = vtanh.pop %v4806
        %v4819 = vtanh.pop %v4807
        %v4820 = vtanh.pop %v4808
        %v4821 = vtanh.pop %v4809
        %v4822 = vtanh.pop %v4810
        %v4823 = vtanh.pop %v4811
        %v4824 = vtanh.pop %v4812
        %v4825 = vtanh.pop %v4813
        %v4826 = vtanh.pop %v4814
        %v4827 = vtanh.pop %v4815
        %v4828 = vtanh.pop %v4816
        %v4829 = vadd.f32 %v4817, 1.0
        %v4830 = vadd.f32 %v4818, 1.0
        %v4831 = vadd.f32 %v4819, 1.0
        %v4832 = vadd.f32 %v4820, 1.0
        %v4833 = vadd.f32 %v4821, 1.0
        %v4834 = vadd.f32 %v4822, 1.0
        %v4835 = vadd.f32 %v4823, 1.0
        %v4836 = vadd.f32 %v4824, 1.0
        %v4837 = vadd.f32 %v4825, 1.0
        %v4838 = vadd.f32 %v4826, 1.0
        %v4839 = vadd.f32 %v4827, 1.0
        %v4840 = vadd.f32 %v4828, 1.0
        %v4841 = vmul.f32 %v4829, 0.5
        %v4842 = vmul.f32 %v4830, 0.5
        %v4843 = vmul.f32 %v4831, 0.5
        %v4844 = vmul.f32 %v4832, 0.5
        %v4845 = vmul.f32 %v4833, 0.5
        %v4846 = vmul.f32 %v4834, 0.5
        %v4847 = vmul.f32 %v4835, 0.5
        %v4848 = vmul.f32 %v4836, 0.5
        %v4849 = vmul.f32 %v4837, 0.5
        %v4850 = vmul.f32 %v4838, 0.5
        %v4851 = vmul.f32 %v4839, 0.5
        %v4852 = vmul.f32 %v4840, 0.5
        %v4853 = vmul.f32 %v4723, %v4841
        %v4854 = vmul.f32 %v4725, %v4842
        %v4855 = vmul.f32 %v4729, %v4843
        %v4856 = vmul.f32 %v4731, %v4844
        %v4857 = vmul.f32 %v4735, %v4845
        %v4858 = vmul.f32 %v4737, %v4846
        %v4859 = vmul.f32 %v4741, %v4847
        %v4860 = vmul.f32 %v4743, %v4848
        %v4861 = vmul.f32 %v4747, %v4849
        %v4862 = vmul.f32 %v4749, %v4850
        %v4863 = vmul.f32 %v4753, %v4851
        %v4864 = vmul.f32 %v4755, %v4852
        %v4865 = vld [vmem:[%s972] sm:$0xff]
        %v4866 = vld [vmem:[%s972 + $0x8] sm:$0xff]
        %v4867 = vld [vmem:[%s972 + $0x10] sm:$0xff]
        %v4868 = vld [vmem:[%s972 + $0x18] sm:$0xff]
        %v4869 = vld [vmem:[%s972 + $0x20] sm:$0xff]
        %v4870 = vld [vmem:[%s972 + $0x28] sm:$0xff]
        %v4871 = vld [vmem:[%s972 + $0x30] sm:$0xff]
        %v4872 = vld [vmem:[%s972 + $0x38] sm:$0xff]
        %v4873 = vld [vmem:[%s972 + $0x40] sm:$0xff]
        %v4874 = vld [vmem:[%s972 + $0x48] sm:$0xff]
        %v4875 = vld [vmem:[%s972 + $0x50] sm:$0xff]
        %v4876 = vld [vmem:[%s972 + $0x58] sm:$0xff]
        %v4877 = vld [vmem:[%s972 + $0x60] sm:$0xff]
        %v4878 = vld [vmem:[%s972 + $0x68] sm:$0xff]
        %v4879 = vld [vmem:[%s972 + $0x70] sm:$0xff]
        %v4880 = vld [vmem:[%s972 + $0x78] sm:$0xff]
        %v4881 = vld [vmem:[%s972 + $0x80] sm:$0xff]
        %v4882 = vld [vmem:[%s972 + $0x88] sm:$0xff]
        %v4883 = vld [vmem:[%s972 + $0x90] sm:$0xff]
        %v4884 = vld [vmem:[%s972 + $0x98] sm:$0xff]
        %v4885 = vld [vmem:[%s972 + $0xa0] sm:$0xff]
        %v4886 = vld [vmem:[%s972 + $0xa8] sm:$0xff]
        %v4887 = vld [vmem:[%s972 + $0xb0] sm:$0xff]
        %v4888 = vld [vmem:[%s972 + $0xb8] sm:$0xff]
        %v4889 = vld [vmem:[%s972 + $0xc0] sm:$0xff]
        %v4890 = vld [vmem:[%s972 + $0xc8] sm:$0xff]
        %v4891 = vld [vmem:[%s972 + $0xd0] sm:$0xff]
        %v4892 = vld [vmem:[%s972 + $0xd8] sm:$0xff]
        %v4893 = vld [vmem:[%s972 + $0xe0] sm:$0xff]
        %v4894 = vld [vmem:[%s972 + $0xe8] sm:$0xff]
        %v4895 = vld [vmem:[%s972 + $0xf0] sm:$0xff]
        %v4896 = vld [vmem:[%s972 + $0xf8] sm:$0xff]
        %4897 = vmatprep.subr.mxu0 0.0
        %4898 = vmatpush1.msra.mxu0 %v4880
        %4899 = vmatprep.subr.mxu0 0.0
        %4900 = vmatpush1.msra.mxu0 %v4879
        %4901 = vmatprep.subr.mxu0 0.0
        %4902 = vmatpush1.msra.mxu0 %v4878
        %4903 = vmatprep.subr.mxu0 0.0
        %4904 = vmatpush1.msra.mxu0 %v4877
        %4905 = vmatprep.subr.mxu0 0.0
        %4906 = vmatpush1.msra.mxu0 %v4876
        %4907 = vmatprep.subr.mxu0 0.0
        %4908 = vmatpush1.msra.mxu0 %v4875
        %4909 = vmatprep.subr.mxu0 0.0
        %4910 = vmatpush1.msra.mxu0 %v4874
        %4911 = vmatprep.subr.mxu0 0.0
        %4912 = vmatpush1.msra.mxu0 %v4873
        %4913 = vmatprep.subr.mxu0 0.0
        %4914 = vmatpush1.msra.mxu0 %v4872
        %4915 = vmatprep.subr.mxu0 0.0
        %4916 = vmatpush1.msra.mxu0 %v4871
        %4917 = vmatprep.subr.mxu0 0.0
        %4918 = vmatpush1.msra.mxu0 %v4870
        %4919 = vmatprep.subr.mxu0 0.0
        %4920 = vmatpush1.msra.mxu0 %v4869
        %4921 = vmatprep.subr.mxu0 0.0
        %4922 = vmatpush1.msra.mxu0 %v4868
        %4923 = vmatprep.subr.mxu0 0.0
        %4924 = vmatpush1.msra.mxu0 %v4867
        %4925 = vmatprep.subr.mxu0 0.0
        %4926 = vmatpush1.msra.mxu0 %v4866
        %4927 = vmatprep.subr.mxu0 0.0
        %4928 = vmatpush1.msra.mxu0 %v4865
        %4929 = vmatprep.subr.mxu0 0.0
        %4930 = vmatpush2.msra.mxu0 %v4896
        %4931 = vmatprep.subr.mxu0 0.0
        %4932 = vmatpush2.msra.mxu0 %v4895
        %4933 = vmatprep.subr.mxu0 0.0
        %4934 = vmatpush2.msra.mxu0 %v4894
        %4935 = vmatprep.subr.mxu0 0.0
        %4936 = vmatpush2.msra.mxu0 %v4893
        %4937 = vmatprep.subr.mxu0 0.0
        %4938 = vmatpush2.msra.mxu0 %v4892
        %4939 = vmatprep.subr.mxu0 0.0
        %4940 = vmatpush2.msra.mxu0 %v4891
        %4941 = vmatprep.subr.mxu0 0.0
        %4942 = vmatpush2.msra.mxu0 %v4890
        %4943 = vmatprep.subr.mxu0 0.0
        %4944 = vmatpush2.msra.mxu0 %v4889
        %4945 = vmatprep.subr.mxu0 0.0
        %4946 = vmatpush2.msra.mxu0 %v4888
        %4947 = vmatprep.subr.mxu0 0.0
        %4948 = vmatpush2.msra.mxu0 %v4887
        %4949 = vmatprep.subr.mxu0 0.0
        %4950 = vmatpush2.msra.mxu0 %v4886
        %4951 = vmatprep.subr.mxu0 0.0
        %4952 = vmatpush2.msra.mxu0 %v4885
        %4953 = vmatprep.subr.mxu0 0.0
        %4954 = vmatpush2.msra.mxu0 %v4884
        %4955 = vmatprep.subr.mxu0 0.0
        %4956 = vmatpush2.msra.mxu0 %v4883
        %4957 = vmatprep.subr.mxu0 0.0
        %4958 = vmatpush2.msra.mxu0 %v4882
        %4959 = vmatprep.subr.mxu0 0.0
        %4960 = vmatpush2.msra.mxu0 %v4881
        %4961 = vmatprep.mubr.f32.mxu0 %v4854
        %4962 = vmatmul.mubr.f32.gmra.mxu0 %v4853
        %v4963 = vpop.f32.mrf.mxu0
        %v4964 = vadd.f32 0.0, %v4963
        %v4965 = vpop.f32.mrf.mxu0
        %4966 = vmatprep.mubr.f32.mxu0 %v4856
        %4967 = vmatmul.mubr.f32.gmra.mxu0 %v4855
        %v4968 = vpop.f32.mrf.mxu0
        %v4969 = vadd.f32 0.0, %v4968
        %v4970 = vpop.f32.mrf.mxu0
        %4971 = vmatprep.mubr.f32.mxu0 %v4858
        %4972 = vmatmul.mubr.f32.gmra.mxu0 %v4857
        %v4973 = vpop.f32.mrf.mxu0
        %v4974 = vadd.f32 0.0, %v4973
        %v4975 = vpop.f32.mrf.mxu0
        %4976 = vmatprep.mubr.f32.mxu0 %v4860
        %4977 = vmatmul.mubr.f32.gmra.mxu0 %v4859
        %v4978 = vpop.f32.mrf.mxu0
        %v4979 = vadd.f32 0.0, %v4978
        %v4980 = vpop.f32.mrf.mxu0
        %4981 = vmatprep.mubr.f32.mxu0 %v4862
        %4982 = vmatmul.mubr.f32.gmra.mxu0 %v4861
        %v4983 = vpop.f32.mrf.mxu0
        %v4984 = vadd.f32 0.0, %v4983
        %v4985 = vpop.f32.mrf.mxu0
        %4986 = vmatprep.mubr.f32.mxu0 %v4864
        %4987 = vmatmul.mubr.f32.gmra.mxu0 %v4863
        %v4988 = vpop.f32.mrf.mxu0
        %v4989 = vadd.f32 0.0, %v4988
        %v4990 = vpop.f32.mrf.mxu0
        %4991 = vdwg.mxu0
        %v4992 = vadd.f32 %v4500, %v4964
        %v4993 = vadd.f32 %v4501, %v4969
        %v4994 = vadd.f32 %v4502, %v4974
        %v4995 = vadd.f32 %v4503, %v4979
        %v4996 = vadd.f32 %v4504, %v4984
        %v4997 = vadd.f32 %v4505, %v4989
        %v4998 = vld [vmem:[%s975] sm:$0x1]
        %v5000 = vlaneseq
        %v5001 = vshrl.u32 %v5000, 7
        %v5002 = vsub.s32 0, %v5001
        %v5003 = vrot.slane %v4998, %v5002
        %v5005 = vadd.f32 %v4992, %v5003
        %v5006 = vadd.f32 %v4993, %v5003
        %v5007 = vadd.f32 %v4994, %v5003
        %v5008 = vadd.f32 %v4995, %v5003
        %v5009 = vadd.f32 %v4996, %v5003
        %v5010 = vadd.f32 %v4997, %v5003
        %5011 = vst.msk [vmem:[#allocation2] sm:$0xff] %vm1256, %v5005
        %5012 = vst.msk [vmem:[#allocation2 + $0x8] sm:$0xff] %vm1256, %v5006
        %5013 = vst.msk [vmem:[#allocation2 + $0x10] sm:$0xff] %vm1256, %v5007
        %5014 = vst.msk [vmem:[#allocation2 + $0x18] sm:$0xff] %vm1256, %v5008
        %5015 = vst.msk [vmem:[#allocation2 + $0x20] sm:$0xff] %vm1256, %v5009
        %5016 = vst.msk [vmem:[#allocation2 + $0x28] sm:$0xff] %vm1256, %v5010
        %p5017 = scmp.eq.s32.totalorder %s36, 3
        // Predicated region
        $region121: #{vit_forward.1} parent=115 // pred_check
          %p5018 = pneg %p5017
        $region122: #{vit_forward.1} parent=115 // pred_check_branch
          %5020 = sbr.rel (%p5018) target = $region124
        $region123: #{vit_forward.1} parent=115 // pred_region
          %v5021 = vld [vmem:[%s5] sm:$0x3]
          %v5023 = vsel %vm1858, %v5021, 0
          %5025 = vmatprep.subr.mxu0 0.0
          %5026 = vmatpush1.msra.mxu0 0.0
          %5027 = vmatprep.subr.mxu0 0.0
          %5028 = vmatpush1.msra.mxu0 0.0
          %5029 = vmatprep.subr.mxu0 0.0
          %5030 = vmatpush1.msra.mxu0 0.0
          %5031 = vmatprep.subr.mxu0 0.0
          %5032 = vmatpush1.msra.mxu0 0.0
          %5033 = vmatprep.subr.mxu0 0.0
          %5034 = vmatpush1.msra.mxu0 0.0
          %5035 = vmatprep.subr.mxu0 0.0
          %5036 = vmatpush1.msra.mxu0 0.0
          %5037 = vmatprep.subr.mxu0 0.0
          %5038 = vmatpush1.msra.mxu0 0.0
          %5039 = vmatprep.subr.mxu0 0.0
          %5040 = vmatpush1.msra.mxu0 0.0
          %5041 = vmatprep.subr.mxu0 0.0
          %5042 = vmatpush1.msra.mxu0 0.0
          %5043 = vmatprep.subr.mxu0 0.0
          %5044 = vmatpush1.msra.mxu0 0.0
          %5045 = vmatprep.subr.mxu0 0.0
          %5046 = vmatpush1.msra.mxu0 %v5010
          %5047 = vmatprep.subr.mxu0 0.0
          %5048 = vmatpush1.msra.mxu0 %v5009
          %5049 = vmatprep.subr.mxu0 0.0
          %5050 = vmatpush1.msra.mxu0 %v5008
          %5051 = vmatprep.subr.mxu0 0.0
          %5052 = vmatpush1.msra.mxu0 %v5007
          %5053 = vmatprep.subr.mxu0 0.0
          %5054 = vmatpush1.msra.mxu0 %v5006
          %5055 = vmatprep.subr.mxu0 0.0
          %5056 = vmatpush1.msra.mxu0 %v5005
          %5057 = vmatprep.subr.mxu0 0.0
          %5058 = vmatpush2.msra.mxu0 0.0
          %5059 = vmatprep.subr.mxu0 0.0
          %5060 = vmatpush2.msra.mxu0 0.0
          %5061 = vmatprep.subr.mxu0 0.0
          %5062 = vmatpush2.msra.mxu0 0.0
          %5063 = vmatprep.subr.mxu0 0.0
          %5064 = vmatpush2.msra.mxu0 0.0
          %5065 = vmatprep.subr.mxu0 0.0
          %5066 = vmatpush2.msra.mxu0 0.0
          %5067 = vmatprep.subr.mxu0 0.0
          %5068 = vmatpush2.msra.mxu0 0.0
          %5069 = vmatprep.subr.mxu0 0.0
          %5070 = vmatpush2.msra.mxu0 0.0
          %5071 = vmatprep.subr.mxu0 0.0
          %5072 = vmatpush2.msra.mxu0 0.0
          %5073 = vmatprep.subr.mxu0 0.0
          %5074 = vmatpush2.msra.mxu0 0.0
          %5075 = vmatprep.subr.mxu0 0.0
          %5076 = vmatpush2.msra.mxu0 0.0
          %5077 = vmatprep.subr.mxu0 0.0
          %5078 = vmatpush2.msra.mxu0 0.0
          %5079 = vmatprep.subr.mxu0 0.0
          %5080 = vmatpush2.msra.mxu0 0.0
          %5081 = vmatprep.subr.mxu0 0.0
          %5082 = vmatpush2.msra.mxu0 0.0
          %5083 = vmatprep.subr.mxu0 0.0
          %5084 = vmatpush2.msra.mxu0 0.0
          %5085 = vmatprep.subr.mxu0 0.0
          %5086 = vmatpush2.msra.mxu0 0.0
          %5087 = vmatprep.subr.mxu0 0.0
          %5088 = vmatpush2.msra.mxu0 0.0
          %5089 = vmatprep.mubr.f32.mxu0 0.0
          %5090 = vmatmul.mubr.f32.gmra.mxu0 %v5023
          %v5091 = vpop.f32.mrf.mxu0
          %v5092 = vadd.f32 0.0, %v5091
          %v5093 = vpop.f32.mrf.mxu0
          %5094 = vdwg.mxu0
          %v5095 = vld [vmem:[%s6] sm:$0x1]
          %v5096 = vld [vmem:[%s7] sm:$0x1]
          %vm5097 = vcmask 517120
          %v5098 = vsel %vm5097, %v5092, 0.0
          %5099 = vadd.xlane.f32.xlu0 %v5098
          %v5100 = vpop.xlane.xlu0 %5099
          %v5101 = vmul.f32 %v5100, %v1275
          %v5102 = vsub.f32 %v5092, %v5101
          %v5103 = vmul.f32 %v5102, %v5102
          %v5104 = vsel %vm5097, %v5103, 0.0
          %5105 = vadd.xlane.f32.xlu0 %v5104
          %v5106 = vpop.xlane.xlu0 %5105
          %v5107 = vmul.f32 %v5106, %v1275
          %v5108 = vadd.f32 %v5107, 1e-06
          %v5109 = vrsqrt.pop %v5108
          %v5110 = vmul.f32 %v5102, %v5109
          %v5112 = vlaneseq
          %v5113 = vshrl.u32 %v5112, 7
          %v5114 = vsub.s32 0, %v5113
          %v5115 = vrot.slane %v5095, %v5114
          %v5117 = vmul.f32 %v5110, %v5115
          %v5119 = vlaneseq
          %v5120 = vshrl.u32 %v5119, 7
          %v5121 = vsub.s32 0, %v5120
          %v5122 = vrot.slane %v5096, %v5121
          %v5124 = vadd.f32 %v5117, %v5122
          %5125 = vst.msk [vmem:[#allocation3] sm:$0x3] %vm5097, %v5124
        $region124: #{vit_forward.1} parent=115 // pred_fallthru
          _
        // Predicated region
        $region125: #{vit_forward.1} parent=115 // pred_check
          %p5126 = pneg %p633
        $region126: #{vit_forward.1} parent=115 // pred_check_branch
          %5128 = sbr.rel (%p5126) target = $region128
        $region127: #{vit_forward.1} parent=115 // pred_region
          %s5130 = ssub.s32 32, 32
          %5131 = vsyncadd [#allocation4], %s5130
          %s5133 = sshll.u32 [#allocation3], 4
          %s5134 = int_to_ptr.vmem [resolvable:$true] %s5133
          %5136 = dma.vmem_to_hbm [thread:$0]  %s5134, 32, %s24, [#allocation4]
        $region128: #{vit_forward.1} parent=115 // pred_fallthru
          _
        // Predicated region
        $region129: #{vit_forward.1} parent=115 // pred_check
          %p5137 = pneg %p633
        $region130: #{vit_forward.1} parent=115 // pred_check_branch
          %5139 = sbr.rel (%p5137) target = $region132
        $region131: #{vit_forward.1} parent=115 // pred_region
          %5140 = dma.done [#allocation4], 32
        $region132: #{vit_forward.1} parent=115 // pred_fallthru
          _
      $region116: #{vit_forward.1} parent=5 // pred_fallthru
        _
      %p5141 = scmp.le.s32.totalorder 2, %s31
      // Predicated region
      $region133: #{vit_forward.1} parent=5 // pred_check
        %p5142 = pneg %p5141
      $region134: #{vit_forward.1} parent=5 // pred_check_branch
        %5144 = sbr.rel (%p5142) target = $region136
      $region135: #{vit_forward.1} parent=5 // pred_region
        %s5145 = ssub.s32 %s31, 2
      $region136: #{vit_forward.1} parent=5 // pred_fallthru
        _
    $region6: #{vit_forward.1} parent=1 // loop_footer
      %s35 = sadd.s32 1, %s31
    $region7: #{vit_forward.1} parent=1 // loop_footer_branch
      %30 = sbr.rel target = $region3
    $region8: #{vit_forward.1} parent=1 // loop_exit
      _
    %5146 = vsyncpa [#allocation4], 1
    %s5147 = scalar_lea.sflag [#allocation4], 1
    %5148 = vsyncpa %s5147, 1

</llo_original>
